<compile_context>
chip_gen: v6e
topology: v6e:2x2x1
jax: 0.10.0
libtpu: 0.0.40
codegen_flags: <defaults>
</compile_context>

<pallas_src>
import functools

import jax
import jax.numpy as jnp
from jax.experimental import pallas as pl
from jax.experimental.pallas import tpu as pltpu


def _cl_rnn_kernel(x_ref, params_ref, hseq_ref, *, B, S, D, H):
    """Whole-sequence RNN forward in one kernel invocation.

    x_ref     : (S*B, D)   time-major inputs (row t*B + b  <->  x[b, t, :])
    params_ref: (pad, H)   packed [W_ih.T (D rows) | W_hh.T (H rows) | b (1) | h0 (B)]
    hseq_ref  : (B, S*H)   lane-dense hidden-state sequence (wrapper reshapes to (B,S,H))
    """
    hp = jax.lax.Precision.HIGHEST

    # Static slices of the packed parameter block (free; no extra DMAs).
    wih_t = params_ref[0:D, :]                        # (D, H)  = W_ih.T
    whh_t = params_ref[D:D + H, :]                    # (H, H)  = W_hh.T
    b = params_ref[D + H:D + H + 1, :]                # (1, H)  = b_ih + b_hh
    h0 = params_ref[D + H + 1:D + H + 1 + B, :]       # (B, H)

    # Fused, non-recurrent input projection for ALL timesteps (+ fused bias):
    # a single MXU contraction instead of S tiny pushes; off the serial chain.
    xw_all = (
        jnp.dot(x_ref[...], wih_t, precision=hp,
                preferred_element_type=jnp.float32)
        + b
    )                                                  # (S*B, H)

    # Serial recurrence, fully unrolled (S is static and small); hidden state h
    # lives in vregs across steps - no per-step VMEM round-trips.
    # TODO(synk): on the serial critical path, W_hh.T could be held resident in
    # the MXU via pltpu.matmul_push_rhs / matmul_acc_lhs / matmul_pop (with
    # MRB-accumulation on v7x); kept on the portable jnp.dot path here.
    h = h0
    hs = []
    for t in range(S):
        pre = xw_all[t * B:(t + 1) * B, :] + jnp.dot(
            h, whh_t, precision=hp, preferred_element_type=jnp.float32)
        h = jnp.tanh(pre)                              # EUP slot (cheap)
        hs.append(h)

    # Single buffered, lane-dense (width S*H = 256) store instead of S masked
    # width-32 per-step stores on the serial dependence chain.
    hseq_ref[...] = jnp.concatenate(hs, axis=-1).astype(hseq_ref.dtype)


def cl_rnn_forward(x, W_ih, W_hh, b_ih, b_hh, init_hidden=None):
    """Pallas implementation of CL_RNN.forward.

    x: (batch, seq, input_size)
    returns (h_seq (batch, seq, hidden), h_last (batch, hidden))
    """
    B, S, D = x.shape
    H = W_ih.shape[0]

    if init_hidden is None:
        h0 = jnp.zeros((B, H), dtype=jnp.float32)
    else:
        h0 = init_hidden[0].astype(jnp.float32)

    # Time-major flattened input: the kernel's input projection becomes one plain
    # 2-D matmul and each timestep is a contiguous static row-slice.
    x_tm = jnp.transpose(x.astype(jnp.float32), (1, 0, 2)).reshape(S * B, D)

    # Pack the four small parameter arrays into ONE block -> one startup DMA.
    n_rows = D + H + 1 + B
    pad_rows = ((n_rows + 7) // 8) * 8
    params = jnp.zeros((pad_rows, H), dtype=jnp.float32)
    params = params.at[0:D, :].set(W_ih.T.astype(jnp.float32))
    params = params.at[D:D + H, :].set(W_hh.T.astype(jnp.float32))
    params = params.at[D + H, :].set((b_ih + b_hh).astype(jnp.float32))
    params = params.at[D + H + 1:D + H + 1 + B, :].set(h0)

    vmem = pl.BlockSpec(memory_space=pltpu.MemorySpace.VMEM)

    hseq_flat = pl.pallas_call(
        functools.partial(_cl_rnn_kernel, B=B, S=S, D=D, H=H),
        out_shape=jax.ShapeDtypeStruct((B, S * H), jnp.float32),
        # No grid: single invocation, full arrays resident in VMEM.
        in_specs=[vmem, vmem],
        out_specs=vmem,
    )(x_tm, params)

    h_seq = hseq_flat.reshape(B, S, H)
    h_last = h_seq[:, -1, :]   # byte-identical to the last h_seq slice; no extra output DMA
    return h_seq, h_last


def cl_rnn_reference(x, W_ih, W_hh, b_ih, b_hh, init_hidden=None):
    """Pure-JAX reference matching the PyTorch forward exactly (f32, HIGHEST)."""
    B, S, D = x.shape
    H = W_ih.shape[0]
    h_t = jnp.zeros((B, H), jnp.float32) if init_hidden is None else init_hidden[0]
    hp = jax.lax.Precision.HIGHEST

    def step(h, x_t):
        h_new = jnp.tanh(
            jnp.dot(x_t, W_ih.T, precision=hp) + b_ih
            + jnp.dot(h, W_hh.T, precision=hp) + b_hh
        )
        return h_new, h_new

    h_last, h_seq = jax.lax.scan(step, h_t, jnp.transpose(x, (1, 0, 2)))
    return jnp.transpose(h_seq, (1, 0, 2)), h_last


def _check(x, W_ih, W_hh, b_ih, b_hh, init_hidden, atol, rtol):
    h_seq, h_last = cl_rnn_forward(x, W_ih, W_hh, b_ih, b_hh, init_hidden)
    jax.block_until_ready((h_seq, h_last))
    h_seq_ref, h_last_ref = cl_rnn_reference(x, W_ih, W_hh, b_ih, b_hh, init_hidden)
    assert h_seq.shape == h_seq_ref.shape
    assert h_last.shape == h_last_ref.shape
    assert jnp.allclose(h_seq, h_seq_ref, atol=atol, rtol=rtol), (
        float(jnp.max(jnp.abs(h_seq - h_seq_ref))))
    assert jnp.allclose(h_last, h_last_ref, atol=atol, rtol=rtol), (
        float(jnp.max(jnp.abs(h_last - h_last_ref))))


if __name__ == "__main__":
    # Small shapes consistent with the module's forward.
    batch, seq, input_size, hidden_size = 2, 8, 4, 32

    key = jax.random.PRNGKey(0)
    k_x, k_wih, k_whh, k_h0 = jax.random.split(key, 4)

    x = jax.random.normal(k_x, (batch, seq, input_size), dtype=jnp.float32)

    # Test 1: the module's literal init (raw randn weights, zero biases, h0=None).
    W_ih_raw = jax.random.normal(k_wih, (hidden_size, input_size), dtype=jnp.float32)
    W_hh_raw = jax.random.normal(k_whh, (hidden_size, hidden_size), dtype=jnp.float32)
    b_ih = jnp.zeros((hidden_size,), dtype=jnp.float32)
    b_hh = jnp.zeros((hidden_size,), dtype=jnp.float32)
    _check(x, W_ih_raw, W_hh_raw, b_ih, b_hh, None, atol=1e-4, rtol=1e-4)

    # Test 2: scaled weights (tanh not saturated) + explicit init_hidden, so the
    # recurrent-matmul path is actually exercised numerically.
    W_ih_s = W_ih_raw / jnp.sqrt(jnp.float32(input_size))
    W_hh_s = W_hh_raw / jnp.sqrt(jnp.float32(hidden_size))
    h0 = 0.1 * jax.random.normal(k_h0, (batch, hidden_size), dtype=jnp.float32)
    _check(x, W_ih_s, W_hh_s, b_ih, b_hh, (h0,), atol=1e-4, rtol=1e-4)

    print("KERNEL_OK")
</pallas_src>

<mosaic_0001>
module attributes {stable_mosaic.version = 11 : i64} {
  func.func @_cl_rnn_kernel(%arg0: memref<16x4xf32, #tpu.memory_space<vmem>>, %arg1: memref<40x32xf32, #tpu.memory_space<vmem>>, %arg2: memref<2x256xf32, #tpu.memory_space<vmem>>) attributes {dimension_semantics = [], scalar_prefetch = 0 : i64, scratch_operands = 0 : i64, tpu.core_type = #tpu.core_type<tc>} {
    %c0 = arith.constant 0 : index
    %c0_0 = arith.constant 0 : index
    %0 = vector.load %arg1[%c0, %c0_0] : memref<40x32xf32, #tpu.memory_space<vmem>>, vector<4x32xf32>
    %c4 = arith.constant 4 : index
    %c0_1 = arith.constant 0 : index
    %1 = vector.load %arg1[%c4, %c0_1] : memref<40x32xf32, #tpu.memory_space<vmem>>, vector<32x32xf32>
    %c36 = arith.constant 36 : index
    %c0_2 = arith.constant 0 : index
    %2 = vector.load %arg1[%c36, %c0_2] : memref<40x32xf32, #tpu.memory_space<vmem>>, vector<1x32xf32>
    %c37 = arith.constant 37 : index
    %c0_3 = arith.constant 0 : index
    %3 = vector.load %arg1[%c37, %c0_3] : memref<40x32xf32, #tpu.memory_space<vmem>>, vector<2x32xf32>
    %c0_4 = arith.constant 0 : index
    %c0_5 = arith.constant 0 : index
    %4 = vector.load %arg0[%c0_4, %c0_5] : memref<16x4xf32, #tpu.memory_space<vmem>>, vector<16x4xf32>
    %cst = arith.constant dense<0.000000e+00> : vector<16x32xf32>
    %5 = tpu.matmul %4, %0, %cst {dimension_numbers = #tpu.dot_dimension_numbers<[1], [0], [0], [1], [0, 0, 1, 1], [], []>, precision = #tpu.contract_precision<fp32>} : vector<16x4xf32>, vector<4x32xf32>, vector<16x32xf32> -> vector<16x32xf32>
    %6 = vector.broadcast %2 : vector<1x32xf32> to vector<16x32xf32>
    %7 = arith.addf %5, %6 : vector<16x32xf32>
    %8 = vector.extract_strided_slice %7 {offsets = [0, 0], sizes = [2, 32], strides = [1, 1]} : vector<16x32xf32> to vector<2x32xf32>
    %cst_6 = arith.constant dense<0.000000e+00> : vector<2x32xf32>
    %9 = tpu.matmul %3, %1, %cst_6 {dimension_numbers = #tpu.dot_dimension_numbers<[1], [0], [0], [1], [0, 0, 1, 1], [], []>, precision = #tpu.contract_precision<fp32>} : vector<2x32xf32>, vector<32x32xf32>, vector<2x32xf32> -> vector<2x32xf32>
    %10 = arith.addf %8, %9 : vector<2x32xf32>
    %11 = math.tanh %10 : vector<2x32xf32>
    %12 = vector.extract_strided_slice %7 {offsets = [2, 0], sizes = [2, 32], strides = [1, 1]} : vector<16x32xf32> to vector<2x32xf32>
    %cst_7 = arith.constant dense<0.000000e+00> : vector<2x32xf32>
    %13 = tpu.matmul %11, %1, %cst_7 {dimension_numbers = #tpu.dot_dimension_numbers<[1], [0], [0], [1], [0, 0, 1, 1], [], []>, precision = #tpu.contract_precision<fp32>} : vector<2x32xf32>, vector<32x32xf32>, vector<2x32xf32> -> vector<2x32xf32>
    %14 = arith.addf %12, %13 : vector<2x32xf32>
    %15 = math.tanh %14 : vector<2x32xf32>
    %16 = vector.extract_strided_slice %7 {offsets = [4, 0], sizes = [2, 32], strides = [1, 1]} : vector<16x32xf32> to vector<2x32xf32>
    %cst_8 = arith.constant dense<0.000000e+00> : vector<2x32xf32>
    %17 = tpu.matmul %15, %1, %cst_8 {dimension_numbers = #tpu.dot_dimension_numbers<[1], [0], [0], [1], [0, 0, 1, 1], [], []>, precision = #tpu.contract_precision<fp32>} : vector<2x32xf32>, vector<32x32xf32>, vector<2x32xf32> -> vector<2x32xf32>
    %18 = arith.addf %16, %17 : vector<2x32xf32>
    %19 = math.tanh %18 : vector<2x32xf32>
    %20 = vector.extract_strided_slice %7 {offsets = [6, 0], sizes = [2, 32], strides = [1, 1]} : vector<16x32xf32> to vector<2x32xf32>
    %cst_9 = arith.constant dense<0.000000e+00> : vector<2x32xf32>
    %21 = tpu.matmul %19, %1, %cst_9 {dimension_numbers = #tpu.dot_dimension_numbers<[1], [0], [0], [1], [0, 0, 1, 1], [], []>, precision = #tpu.contract_precision<fp32>} : vector<2x32xf32>, vector<32x32xf32>, vector<2x32xf32> -> vector<2x32xf32>
    %22 = arith.addf %20, %21 : vector<2x32xf32>
    %23 = math.tanh %22 : vector<2x32xf32>
    %24 = vector.extract_strided_slice %7 {offsets = [8, 0], sizes = [2, 32], strides = [1, 1]} : vector<16x32xf32> to vector<2x32xf32>
    %cst_10 = arith.constant dense<0.000000e+00> : vector<2x32xf32>
    %25 = tpu.matmul %23, %1, %cst_10 {dimension_numbers = #tpu.dot_dimension_numbers<[1], [0], [0], [1], [0, 0, 1, 1], [], []>, precision = #tpu.contract_precision<fp32>} : vector<2x32xf32>, vector<32x32xf32>, vector<2x32xf32> -> vector<2x32xf32>
    %26 = arith.addf %24, %25 : vector<2x32xf32>
    %27 = math.tanh %26 : vector<2x32xf32>
    %28 = vector.extract_strided_slice %7 {offsets = [10, 0], sizes = [2, 32], strides = [1, 1]} : vector<16x32xf32> to vector<2x32xf32>
    %cst_11 = arith.constant dense<0.000000e+00> : vector<2x32xf32>
    %29 = tpu.matmul %27, %1, %cst_11 {dimension_numbers = #tpu.dot_dimension_numbers<[1], [0], [0], [1], [0, 0, 1, 1], [], []>, precision = #tpu.contract_precision<fp32>} : vector<2x32xf32>, vector<32x32xf32>, vector<2x32xf32> -> vector<2x32xf32>
    %30 = arith.addf %28, %29 : vector<2x32xf32>
    %31 = math.tanh %30 : vector<2x32xf32>
    %32 = vector.extract_strided_slice %7 {offsets = [12, 0], sizes = [2, 32], strides = [1, 1]} : vector<16x32xf32> to vector<2x32xf32>
    %cst_12 = arith.constant dense<0.000000e+00> : vector<2x32xf32>
    %33 = tpu.matmul %31, %1, %cst_12 {dimension_numbers = #tpu.dot_dimension_numbers<[1], [0], [0], [1], [0, 0, 1, 1], [], []>, precision = #tpu.contract_precision<fp32>} : vector<2x32xf32>, vector<32x32xf32>, vector<2x32xf32> -> vector<2x32xf32>
    %34 = arith.addf %32, %33 : vector<2x32xf32>
    %35 = math.tanh %34 : vector<2x32xf32>
    %36 = vector.extract_strided_slice %7 {offsets = [14, 0], sizes = [2, 32], strides = [1, 1]} : vector<16x32xf32> to vector<2x32xf32>
    %cst_13 = arith.constant dense<0.000000e+00> : vector<2x32xf32>
    %37 = tpu.matmul %35, %1, %cst_13 {dimension_numbers = #tpu.dot_dimension_numbers<[1], [0], [0], [1], [0, 0, 1, 1], [], []>, precision = #tpu.contract_precision<fp32>} : vector<2x32xf32>, vector<32x32xf32>, vector<2x32xf32> -> vector<2x32xf32>
    %38 = arith.addf %36, %37 : vector<2x32xf32>
    %39 = math.tanh %38 : vector<2x32xf32>
    %40 = tpu.concatenate %11, %15, %19, %23, %27, %31, %35, %39 in 1 : vector<2x32xf32>, vector<2x32xf32>, vector<2x32xf32>, vector<2x32xf32>, vector<2x32xf32>, vector<2x32xf32>, vector<2x32xf32>, vector<2x32xf32> -> vector<2x256xf32>
    %c0_14 = arith.constant 0 : index
    %c0_15 = arith.constant 0 : index
    %41 = vector.load %arg2[%c0_14, %c0_15] : memref<2x256xf32, #tpu.memory_space<vmem>>, vector<2x256xf32>
    tpu.vector_store %arg2[%c0_14, %c0_15], %40 {strides = array<i32>} : memref<2x256xf32, #tpu.memory_space<vmem>>, vector<2x256xf32>,
    return
  }
}

</mosaic_0001>

<llo_original>
// kernel: tpu_custom_call.1
$region0: #{tpu_custom_call.1}
  #allocation0 [shape = 'u32[]', space=smem, size = 0x4, offset = 0x4, fixed_abs, tag = 'smem constant byte address 0x4 - core index']
  #allocation1 [shape = 'u32[144,128]{1,0:T(1,128)}', space=vmem, size = 0x12000, scoped, tag = 'internal scratch']
  %s0 = inlined_call_operand.vmem [shape: f32[16,4], index: 0, kind: input, shape index: {}]
  %s1 = inlined_call_operand.vmem [shape: f32[40,32], index: 1, kind: input, shape index: {}]
  %s2 = inlined_call_operand.hbm [shape: f32[2,256], index: 2, kind: output, shape index: {}]
  %s3 = sld [smem:[#allocation0]]
  $region18: #{tpu_custom_call.1} parent=0
    _
  %s5 = ssub.s32 1, %s3
  %s6 = scalar_select 0, %s5, %s3
  $region1: #{tpu_custom_call.1} parent=0
    #allocation2 [shape = 'u8[2048]{0}', space=vmem, size = 0x800, scoped, tag = 'output window, operand 0, single buffered']
    #allocation3 [shape = 's32[1]{0}', space=sflag, size = 0x4, scoped, tag = 'scoped memory for tpu_custom_call.1']
    %7 = vsyncpa [#allocation3], 0
    // Predicated region
    $region2: #{tpu_custom_call.1} parent=1 // pred_check
      _
    $region3: #{tpu_custom_call.1} parent=1 // pred_check_branch
      %9 = sbr.rel (0) target = $region5
    $region4: #{tpu_custom_call.1} parent=1 // pred_region
      _
    $region5: #{tpu_custom_call.1} parent=1 // pred_fallthru
      _
    // Predicated region
    $region6: #{tpu_custom_call.1} parent=1 // pred_check
      _
    $region7: #{tpu_custom_call.1} parent=1 // pred_check_branch
      %11 = sbr.rel (0) target = $region9
    $region8: #{tpu_custom_call.1} parent=1 // pred_region
      _
    $region9: #{tpu_custom_call.1} parent=1 // pred_fallthru
      _
    %v12 = vld [vmem:[%s1] sm:$0xf]
    %v13 = vld [vmem:[%s1 + $0x4] sm:$0xff]
    %v14 = vld [vmem:[%s1 + $0xc] sm:$0xff]
    %v15 = vld [vmem:[%s1 + $0x14] sm:$0xff]
    %v16 = vld [vmem:[%s1 + $0x1c] sm:$0xff]
    %v17 = vld [vmem:[%s1 + $0x24] sm:$0x1]
    %v18 = vld [vmem:[%s1 + $0x25] sm:$0x3]
    %v19 = vld [vmem:[%s0] sm:$0xff]
    %v20 = vld [vmem:[%s0 + $0x8] sm:$0xff]
    %v21 = vlaneseq
    %v22 = vshrl.u32 %v21, 7
    %v23 = vsub.s32 0, %v22
    %v24 = vrot.slane %v17, %v23
    %vm25 = vcmask 31744
    %v27 = vsel %vm25, %v19, 0
    %v30 = vsel %vm25, %v20, 0
    %vm32 = vcmask 1043456
    %v34 = vsel %vm32, %v12, 0
    %36 = vmatprep.subr.mxu0 0.0
    %37 = vmatpush1.msra.mxu0 0.0
    %38 = vmatprep.subr.mxu0 0.0
    %39 = vmatpush1.msra.mxu0 0.0
    %40 = vmatprep.subr.mxu0 0.0
    %41 = vmatpush1.msra.mxu0 0.0
    %42 = vmatprep.subr.mxu0 0.0
    %43 = vmatpush1.msra.mxu0 0.0
    %44 = vmatprep.subr.mxu0 0.0
    %45 = vmatpush1.msra.mxu0 0.0
    %46 = vmatprep.subr.mxu0 0.0
    %47 = vmatpush1.msra.mxu0 0.0
    %48 = vmatprep.subr.mxu0 0.0
    %49 = vmatpush1.msra.mxu0 0.0
    %50 = vmatprep.subr.mxu0 0.0
    %51 = vmatpush1.msra.mxu0 0.0
    %52 = vmatprep.subr.mxu0 0.0
    %53 = vmatpush1.msra.mxu0 0.0
    %54 = vmatprep.subr.mxu0 0.0
    %55 = vmatpush1.msra.mxu0 0.0
    %56 = vmatprep.subr.mxu0 0.0
    %57 = vmatpush1.msra.mxu0 0.0
    %58 = vmatprep.subr.mxu0 0.0
    %59 = vmatpush1.msra.mxu0 0.0
    %60 = vmatprep.subr.mxu0 0.0
    %61 = vmatpush1.msra.mxu0 0.0
    %62 = vmatprep.subr.mxu0 0.0
    %63 = vmatpush1.msra.mxu0 0.0
    %64 = vmatprep.subr.mxu0 0.0
    %65 = vmatpush1.msra.mxu0 0.0
    %66 = vmatprep.subr.mxu0 0.0
    %v67 = vand.u32 %v34, 4294901760
    %68 = vmatpush1.msra.mxu0 %v67
    %69 = vmatprep.subr.mxu0 0.0
    %70 = vmatpush2.msra.mxu0 0.0
    %71 = vmatprep.subr.mxu0 0.0
    %72 = vmatpush2.msra.mxu0 0.0
    %73 = vmatprep.subr.mxu0 0.0
    %74 = vmatpush2.msra.mxu0 0.0
    %75 = vmatprep.subr.mxu0 0.0
    %76 = vmatpush2.msra.mxu0 0.0
    %77 = vmatprep.subr.mxu0 0.0
    %78 = vmatpush2.msra.mxu0 0.0
    %79 = vmatprep.subr.mxu0 0.0
    %80 = vmatpush2.msra.mxu0 0.0
    %81 = vmatprep.subr.mxu0 0.0
    %82 = vmatpush2.msra.mxu0 0.0
    %83 = vmatprep.subr.mxu0 0.0
    %84 = vmatpush2.msra.mxu0 0.0
    %85 = vmatprep.subr.mxu0 0.0
    %86 = vmatpush2.msra.mxu0 0.0
    %87 = vmatprep.subr.mxu0 0.0
    %88 = vmatpush2.msra.mxu0 0.0
    %89 = vmatprep.subr.mxu0 0.0
    %90 = vmatpush2.msra.mxu0 0.0
    %91 = vmatprep.subr.mxu0 0.0
    %92 = vmatpush2.msra.mxu0 0.0
    %93 = vmatprep.subr.mxu0 0.0
    %94 = vmatpush2.msra.mxu0 0.0
    %95 = vmatprep.subr.mxu0 0.0
    %96 = vmatpush2.msra.mxu0 0.0
    %97 = vmatprep.subr.mxu0 0.0
    %98 = vmatpush2.msra.mxu0 0.0
    %99 = vmatprep.subr.mxu0 0.0
    %100 = vmatpush2.msra.mxu0 0.0
    %101 = vmatprep.mubr.f32.mxu0 0.0
    %v102 = vand.u32 %v27, 4294901760
    %v103 = vsub.f32 %v27, %v102
    %v104 = vand.u32 %v103, 4294901760
    %v105 = vsub.f32 %v103, %v104
    %v106 = vand.u32 %v105, 4294901760
    %107 = vmatmul.mubr.f32.gmra.mxu0 %v106
    %v108 = vpop.f32.mrf.mxu0
    %v109 = vadd.f32 %v24, %v108
    %v110 = vpop.f32.mrf.mxu0
    %111 = vmatprep.mubr.f32.mxu0 0.0
    %v112 = vand.u32 %v30, 4294901760
    %v113 = vsub.f32 %v30, %v112
    %v114 = vand.u32 %v113, 4294901760
    %v115 = vsub.f32 %v113, %v114
    %v116 = vand.u32 %v115, 4294901760
    %117 = vmatmul.mubr.f32.gmra.mxu0 %v116
    %v118 = vpop.f32.mrf.mxu0
    %v119 = vadd.f32 %v24, %v118
    %v120 = vpop.f32.mrf.mxu0
    %121 = vdwg.mxu0
    %122 = vmatprep.subr.mxu0 0.0
    %123 = vmatpush1.msra.mxu0 0.0
    %124 = vmatprep.subr.mxu0 0.0
    %125 = vmatpush1.msra.mxu0 0.0
    %126 = vmatprep.subr.mxu0 0.0
    %127 = vmatpush1.msra.mxu0 0.0
    %128 = vmatprep.subr.mxu0 0.0
    %129 = vmatpush1.msra.mxu0 0.0
    %130 = vmatprep.subr.mxu0 0.0
    %131 = vmatpush1.msra.mxu0 0.0
    %132 = vmatprep.subr.mxu0 0.0
    %133 = vmatpush1.msra.mxu0 0.0
    %134 = vmatprep.subr.mxu0 0.0
    %135 = vmatpush1.msra.mxu0 0.0
    %136 = vmatprep.subr.mxu0 0.0
    %137 = vmatpush1.msra.mxu0 0.0
    %138 = vmatprep.subr.mxu0 0.0
    %139 = vmatpush1.msra.mxu0 0.0
    %140 = vmatprep.subr.mxu0 0.0
    %141 = vmatpush1.msra.mxu0 0.0
    %142 = vmatprep.subr.mxu0 0.0
    %143 = vmatpush1.msra.mxu0 0.0
    %144 = vmatprep.subr.mxu0 0.0
    %145 = vmatpush1.msra.mxu0 0.0
    %146 = vmatprep.subr.mxu0 0.0
    %147 = vmatpush1.msra.mxu0 0.0
    %148 = vmatprep.subr.mxu0 0.0
    %149 = vmatpush1.msra.mxu0 0.0
    %150 = vmatprep.subr.mxu0 0.0
    %151 = vmatpush1.msra.mxu0 0.0
    %152 = vmatprep.subr.mxu0 0.0
    %v153 = vand.u32 %v34, 4294901760
    %v154 = vsub.f32 %v34, %v153
    %v155 = vand.u32 %v154, 4294901760
    %v156 = vsub.f32 %v154, %v155
    %v157 = vand.u32 %v156, 4294901760
    %158 = vmatpush1.msra.mxu0 %v157
    %159 = vmatprep.subr.mxu0 0.0
    %160 = vmatpush2.msra.mxu0 0.0
    %161 = vmatprep.subr.mxu0 0.0
    %162 = vmatpush2.msra.mxu0 0.0
    %163 = vmatprep.subr.mxu0 0.0
    %164 = vmatpush2.msra.mxu0 0.0
    %165 = vmatprep.subr.mxu0 0.0
    %166 = vmatpush2.msra.mxu0 0.0
    %167 = vmatprep.subr.mxu0 0.0
    %168 = vmatpush2.msra.mxu0 0.0
    %169 = vmatprep.subr.mxu0 0.0
    %170 = vmatpush2.msra.mxu0 0.0
    %171 = vmatprep.subr.mxu0 0.0
    %172 = vmatpush2.msra.mxu0 0.0
    %173 = vmatprep.subr.mxu0 0.0
    %174 = vmatpush2.msra.mxu0 0.0
    %175 = vmatprep.subr.mxu0 0.0
    %176 = vmatpush2.msra.mxu0 0.0
    %177 = vmatprep.subr.mxu0 0.0
    %178 = vmatpush2.msra.mxu0 0.0
    %179 = vmatprep.subr.mxu0 0.0
    %180 = vmatpush2.msra.mxu0 0.0
    %181 = vmatprep.subr.mxu0 0.0
    %182 = vmatpush2.msra.mxu0 0.0
    %183 = vmatprep.subr.mxu0 0.0
    %184 = vmatpush2.msra.mxu0 0.0
    %185 = vmatprep.subr.mxu0 0.0
    %186 = vmatpush2.msra.mxu0 0.0
    %187 = vmatprep.subr.mxu0 0.0
    %188 = vmatpush2.msra.mxu0 0.0
    %189 = vmatprep.subr.mxu0 0.0
    %190 = vmatpush2.msra.mxu0 0.0
    %191 = vmatprep.mubr.f32.mxu0 0.0
    %v192 = vand.u32 %v27, 4294901760
    %193 = vmatmul.mubr.f32.gmra.mxu0 %v192
    %v194 = vpop.f32.mrf.mxu0
    %v195 = vadd.f32 %v109, %v194
    %v196 = vpop.f32.mrf.mxu0
    %197 = vmatprep.mubr.f32.mxu0 0.0
    %v198 = vand.u32 %v30, 4294901760
    %199 = vmatmul.mubr.f32.gmra.mxu0 %v198
    %v200 = vpop.f32.mrf.mxu0
    %v201 = vadd.f32 %v119, %v200
    %v202 = vpop.f32.mrf.mxu0
    %203 = vdwg.mxu0
    %204 = vmatprep.subr.mxu0 0.0
    %205 = vmatpush1.msra.mxu0 0.0
    %206 = vmatprep.subr.mxu0 0.0
    %207 = vmatpush1.msra.mxu0 0.0
    %208 = vmatprep.subr.mxu0 0.0
    %209 = vmatpush1.msra.mxu0 0.0
    %210 = vmatprep.subr.mxu0 0.0
    %211 = vmatpush1.msra.mxu0 0.0
    %212 = vmatprep.subr.mxu0 0.0
    %213 = vmatpush1.msra.mxu0 0.0
    %214 = vmatprep.subr.mxu0 0.0
    %215 = vmatpush1.msra.mxu0 0.0
    %216 = vmatprep.subr.mxu0 0.0
    %217 = vmatpush1.msra.mxu0 0.0
    %218 = vmatprep.subr.mxu0 0.0
    %219 = vmatpush1.msra.mxu0 0.0
    %220 = vmatprep.subr.mxu0 0.0
    %221 = vmatpush1.msra.mxu0 0.0
    %222 = vmatprep.subr.mxu0 0.0
    %223 = vmatpush1.msra.mxu0 0.0
    %224 = vmatprep.subr.mxu0 0.0
    %225 = vmatpush1.msra.mxu0 0.0
    %226 = vmatprep.subr.mxu0 0.0
    %227 = vmatpush1.msra.mxu0 0.0
    %228 = vmatprep.subr.mxu0 0.0
    %229 = vmatpush1.msra.mxu0 0.0
    %230 = vmatprep.subr.mxu0 0.0
    %231 = vmatpush1.msra.mxu0 0.0
    %232 = vmatprep.subr.mxu0 0.0
    %233 = vmatpush1.msra.mxu0 0.0
    %234 = vmatprep.subr.mxu0 0.0
    %v235 = vand.u32 %v34, 4294901760
    %v236 = vsub.f32 %v34, %v235
    %237 = vmatpush1.msra.mxu0 %v236
    %238 = vmatprep.subr.mxu0 0.0
    %239 = vmatpush2.msra.mxu0 0.0
    %240 = vmatprep.subr.mxu0 0.0
    %241 = vmatpush2.msra.mxu0 0.0
    %242 = vmatprep.subr.mxu0 0.0
    %243 = vmatpush2.msra.mxu0 0.0
    %244 = vmatprep.subr.mxu0 0.0
    %245 = vmatpush2.msra.mxu0 0.0
    %246 = vmatprep.subr.mxu0 0.0
    %247 = vmatpush2.msra.mxu0 0.0
    %248 = vmatprep.subr.mxu0 0.0
    %249 = vmatpush2.msra.mxu0 0.0
    %250 = vmatprep.subr.mxu0 0.0
    %251 = vmatpush2.msra.mxu0 0.0
    %252 = vmatprep.subr.mxu0 0.0
    %253 = vmatpush2.msra.mxu0 0.0
    %254 = vmatprep.subr.mxu0 0.0
    %255 = vmatpush2.msra.mxu0 0.0
    %256 = vmatprep.subr.mxu0 0.0
    %257 = vmatpush2.msra.mxu0 0.0
    %258 = vmatprep.subr.mxu0 0.0
    %259 = vmatpush2.msra.mxu0 0.0
    %260 = vmatprep.subr.mxu0 0.0
    %261 = vmatpush2.msra.mxu0 0.0
    %262 = vmatprep.subr.mxu0 0.0
    %263 = vmatpush2.msra.mxu0 0.0
    %264 = vmatprep.subr.mxu0 0.0
    %265 = vmatpush2.msra.mxu0 0.0
    %266 = vmatprep.subr.mxu0 0.0
    %267 = vmatpush2.msra.mxu0 0.0
    %268 = vmatprep.subr.mxu0 0.0
    %269 = vmatpush2.msra.mxu0 0.0
    %270 = vmatprep.mubr.f32.mxu0 0.0
    %v271 = vand.u32 %v27, 4294901760
    %v272 = vsub.f32 %v27, %v271
    %273 = vmatmul.mubr.f32.gmra.mxu0 %v272
    %v274 = vpop.f32.mrf.mxu0
    %v275 = vadd.f32 %v195, %v274
    %v276 = vpop.f32.mrf.mxu0
    %277 = vmatprep.mubr.f32.mxu0 0.0
    %v278 = vand.u32 %v30, 4294901760
    %v279 = vsub.f32 %v30, %v278
    %280 = vmatmul.mubr.f32.gmra.mxu0 %v279
    %v281 = vpop.f32.mrf.mxu0
    %v282 = vadd.f32 %v201, %v281
    %v283 = vpop.f32.mrf.mxu0
    %284 = vdwg.mxu0
    %285 = vmatprep.subr.mxu0 0.0
    %286 = vmatpush1.msra.mxu0 0.0
    %287 = vmatprep.subr.mxu0 0.0
    %288 = vmatpush1.msra.mxu0 0.0
    %289 = vmatprep.subr.mxu0 0.0
    %290 = vmatpush1.msra.mxu0 0.0
    %291 = vmatprep.subr.mxu0 0.0
    %292 = vmatpush1.msra.mxu0 0.0
    %293 = vmatprep.subr.mxu0 0.0
    %294 = vmatpush1.msra.mxu0 0.0
    %295 = vmatprep.subr.mxu0 0.0
    %296 = vmatpush1.msra.mxu0 0.0
    %297 = vmatprep.subr.mxu0 0.0
    %298 = vmatpush1.msra.mxu0 0.0
    %299 = vmatprep.subr.mxu0 0.0
    %300 = vmatpush1.msra.mxu0 0.0
    %301 = vmatprep.subr.mxu0 0.0
    %302 = vmatpush1.msra.mxu0 0.0
    %303 = vmatprep.subr.mxu0 0.0
    %304 = vmatpush1.msra.mxu0 0.0
    %305 = vmatprep.subr.mxu0 0.0
    %306 = vmatpush1.msra.mxu0 0.0
    %307 = vmatprep.subr.mxu0 0.0
    %308 = vmatpush1.msra.mxu0 0.0
    %309 = vmatprep.subr.mxu0 0.0
    %310 = vmatpush1.msra.mxu0 0.0
    %311 = vmatprep.subr.mxu0 0.0
    %312 = vmatpush1.msra.mxu0 0.0
    %313 = vmatprep.subr.mxu0 0.0
    %314 = vmatpush1.msra.mxu0 0.0
    %315 = vmatprep.subr.mxu0 0.0
    %v316 = vand.u32 %v34, 4294901760
    %317 = vmatpush1.msra.mxu0 %v316
    %318 = vmatprep.subr.mxu0 0.0
    %319 = vmatpush2.msra.mxu0 0.0
    %320 = vmatprep.subr.mxu0 0.0
    %321 = vmatpush2.msra.mxu0 0.0
    %322 = vmatprep.subr.mxu0 0.0
    %323 = vmatpush2.msra.mxu0 0.0
    %324 = vmatprep.subr.mxu0 0.0
    %325 = vmatpush2.msra.mxu0 0.0
    %326 = vmatprep.subr.mxu0 0.0
    %327 = vmatpush2.msra.mxu0 0.0
    %328 = vmatprep.subr.mxu0 0.0
    %329 = vmatpush2.msra.mxu0 0.0
    %330 = vmatprep.subr.mxu0 0.0
    %331 = vmatpush2.msra.mxu0 0.0
    %332 = vmatprep.subr.mxu0 0.0
    %333 = vmatpush2.msra.mxu0 0.0
    %334 = vmatprep.subr.mxu0 0.0
    %335 = vmatpush2.msra.mxu0 0.0
    %336 = vmatprep.subr.mxu0 0.0
    %337 = vmatpush2.msra.mxu0 0.0
    %338 = vmatprep.subr.mxu0 0.0
    %339 = vmatpush2.msra.mxu0 0.0
    %340 = vmatprep.subr.mxu0 0.0
    %341 = vmatpush2.msra.mxu0 0.0
    %342 = vmatprep.subr.mxu0 0.0
    %343 = vmatpush2.msra.mxu0 0.0
    %344 = vmatprep.subr.mxu0 0.0
    %345 = vmatpush2.msra.mxu0 0.0
    %346 = vmatprep.subr.mxu0 0.0
    %347 = vmatpush2.msra.mxu0 0.0
    %348 = vmatprep.subr.mxu0 0.0
    %349 = vmatpush2.msra.mxu0 0.0
    %350 = vmatprep.mubr.f32.mxu0 0.0
    %v351 = vand.u32 %v27, 4294901760
    %v352 = vsub.f32 %v27, %v351
    %v353 = vand.u32 %v352, 4294901760
    %354 = vmatmul.mubr.f32.gmra.mxu0 %v353
    %v355 = vpop.f32.mrf.mxu0
    %v356 = vadd.f32 %v275, %v355
    %v357 = vpop.f32.mrf.mxu0
    %358 = vmatprep.mubr.f32.mxu0 0.0
    %v359 = vand.u32 %v30, 4294901760
    %v360 = vsub.f32 %v30, %v359
    %v361 = vand.u32 %v360, 4294901760
    %362 = vmatmul.mubr.f32.gmra.mxu0 %v361
    %v363 = vpop.f32.mrf.mxu0
    %v364 = vadd.f32 %v282, %v363
    %v365 = vpop.f32.mrf.mxu0
    %366 = vdwg.mxu0
    %367 = vmatprep.subr.mxu0 0.0
    %368 = vmatpush1.msra.mxu0 0.0
    %369 = vmatprep.subr.mxu0 0.0
    %370 = vmatpush1.msra.mxu0 0.0
    %371 = vmatprep.subr.mxu0 0.0
    %372 = vmatpush1.msra.mxu0 0.0
    %373 = vmatprep.subr.mxu0 0.0
    %374 = vmatpush1.msra.mxu0 0.0
    %375 = vmatprep.subr.mxu0 0.0
    %376 = vmatpush1.msra.mxu0 0.0
    %377 = vmatprep.subr.mxu0 0.0
    %378 = vmatpush1.msra.mxu0 0.0
    %379 = vmatprep.subr.mxu0 0.0
    %380 = vmatpush1.msra.mxu0 0.0
    %381 = vmatprep.subr.mxu0 0.0
    %382 = vmatpush1.msra.mxu0 0.0
    %383 = vmatprep.subr.mxu0 0.0
    %384 = vmatpush1.msra.mxu0 0.0
    %385 = vmatprep.subr.mxu0 0.0
    %386 = vmatpush1.msra.mxu0 0.0
    %387 = vmatprep.subr.mxu0 0.0
    %388 = vmatpush1.msra.mxu0 0.0
    %389 = vmatprep.subr.mxu0 0.0
    %390 = vmatpush1.msra.mxu0 0.0
    %391 = vmatprep.subr.mxu0 0.0
    %392 = vmatpush1.msra.mxu0 0.0
    %393 = vmatprep.subr.mxu0 0.0
    %394 = vmatpush1.msra.mxu0 0.0
    %395 = vmatprep.subr.mxu0 0.0
    %396 = vmatpush1.msra.mxu0 0.0
    %397 = vmatprep.subr.mxu0 0.0
    %v398 = vand.u32 %v34, 4294901760
    %v399 = vsub.f32 %v34, %v398
    %v400 = vand.u32 %v399, 4294901760
    %401 = vmatpush1.msra.mxu0 %v400
    %402 = vmatprep.subr.mxu0 0.0
    %403 = vmatpush2.msra.mxu0 0.0
    %404 = vmatprep.subr.mxu0 0.0
    %405 = vmatpush2.msra.mxu0 0.0
    %406 = vmatprep.subr.mxu0 0.0
    %407 = vmatpush2.msra.mxu0 0.0
    %408 = vmatprep.subr.mxu0 0.0
    %409 = vmatpush2.msra.mxu0 0.0
    %410 = vmatprep.subr.mxu0 0.0
    %411 = vmatpush2.msra.mxu0 0.0
    %412 = vmatprep.subr.mxu0 0.0
    %413 = vmatpush2.msra.mxu0 0.0
    %414 = vmatprep.subr.mxu0 0.0
    %415 = vmatpush2.msra.mxu0 0.0
    %416 = vmatprep.subr.mxu0 0.0
    %417 = vmatpush2.msra.mxu0 0.0
    %418 = vmatprep.subr.mxu0 0.0
    %419 = vmatpush2.msra.mxu0 0.0
    %420 = vmatprep.subr.mxu0 0.0
    %421 = vmatpush2.msra.mxu0 0.0
    %422 = vmatprep.subr.mxu0 0.0
    %423 = vmatpush2.msra.mxu0 0.0
    %424 = vmatprep.subr.mxu0 0.0
    %425 = vmatpush2.msra.mxu0 0.0
    %426 = vmatprep.subr.mxu0 0.0
    %427 = vmatpush2.msra.mxu0 0.0
    %428 = vmatprep.subr.mxu0 0.0
    %429 = vmatpush2.msra.mxu0 0.0
    %430 = vmatprep.subr.mxu0 0.0
    %431 = vmatpush2.msra.mxu0 0.0
    %432 = vmatprep.subr.mxu0 0.0
    %433 = vmatpush2.msra.mxu0 0.0
    %434 = vmatprep.mubr.f32.mxu0 0.0
    %v435 = vand.u32 %v27, 4294901760
    %436 = vmatmul.mubr.f32.gmra.mxu0 %v435
    %v437 = vpop.f32.mrf.mxu0
    %v438 = vadd.f32 %v356, %v437
    %v439 = vpop.f32.mrf.mxu0
    %440 = vmatprep.mubr.f32.mxu0 0.0
    %v441 = vand.u32 %v30, 4294901760
    %442 = vmatmul.mubr.f32.gmra.mxu0 %v441
    %v443 = vpop.f32.mrf.mxu0
    %v444 = vadd.f32 %v364, %v443
    %v445 = vpop.f32.mrf.mxu0
    %446 = vdwg.mxu0
    %447 = vmatprep.subr.mxu0 0.0
    %448 = vmatpush1.msra.mxu0 0.0
    %449 = vmatprep.subr.mxu0 0.0
    %450 = vmatpush1.msra.mxu0 0.0
    %451 = vmatprep.subr.mxu0 0.0
    %452 = vmatpush1.msra.mxu0 0.0
    %453 = vmatprep.subr.mxu0 0.0
    %454 = vmatpush1.msra.mxu0 0.0
    %455 = vmatprep.subr.mxu0 0.0
    %456 = vmatpush1.msra.mxu0 0.0
    %457 = vmatprep.subr.mxu0 0.0
    %458 = vmatpush1.msra.mxu0 0.0
    %459 = vmatprep.subr.mxu0 0.0
    %460 = vmatpush1.msra.mxu0 0.0
    %461 = vmatprep.subr.mxu0 0.0
    %462 = vmatpush1.msra.mxu0 0.0
    %463 = vmatprep.subr.mxu0 0.0
    %464 = vmatpush1.msra.mxu0 0.0
    %465 = vmatprep.subr.mxu0 0.0
    %466 = vmatpush1.msra.mxu0 0.0
    %467 = vmatprep.subr.mxu0 0.0
    %468 = vmatpush1.msra.mxu0 0.0
    %469 = vmatprep.subr.mxu0 0.0
    %470 = vmatpush1.msra.mxu0 0.0
    %471 = vmatprep.subr.mxu0 0.0
    %472 = vmatpush1.msra.mxu0 0.0
    %473 = vmatprep.subr.mxu0 0.0
    %474 = vmatpush1.msra.mxu0 0.0
    %475 = vmatprep.subr.mxu0 0.0
    %476 = vmatpush1.msra.mxu0 0.0
    %477 = vmatprep.subr.mxu0 0.0
    %v478 = vand.u32 %v34, 4294901760
    %479 = vmatpush1.msra.mxu0 %v478
    %480 = vmatprep.subr.mxu0 0.0
    %481 = vmatpush2.msra.mxu0 0.0
    %482 = vmatprep.subr.mxu0 0.0
    %483 = vmatpush2.msra.mxu0 0.0
    %484 = vmatprep.subr.mxu0 0.0
    %485 = vmatpush2.msra.mxu0 0.0
    %486 = vmatprep.subr.mxu0 0.0
    %487 = vmatpush2.msra.mxu0 0.0
    %488 = vmatprep.subr.mxu0 0.0
    %489 = vmatpush2.msra.mxu0 0.0
    %490 = vmatprep.subr.mxu0 0.0
    %491 = vmatpush2.msra.mxu0 0.0
    %492 = vmatprep.subr.mxu0 0.0
    %493 = vmatpush2.msra.mxu0 0.0
    %494 = vmatprep.subr.mxu0 0.0
    %495 = vmatpush2.msra.mxu0 0.0
    %496 = vmatprep.subr.mxu0 0.0
    %497 = vmatpush2.msra.mxu0 0.0
    %498 = vmatprep.subr.mxu0 0.0
    %499 = vmatpush2.msra.mxu0 0.0
    %500 = vmatprep.subr.mxu0 0.0
    %501 = vmatpush2.msra.mxu0 0.0
    %502 = vmatprep.subr.mxu0 0.0
    %503 = vmatpush2.msra.mxu0 0.0
    %504 = vmatprep.subr.mxu0 0.0
    %505 = vmatpush2.msra.mxu0 0.0
    %506 = vmatprep.subr.mxu0 0.0
    %507 = vmatpush2.msra.mxu0 0.0
    %508 = vmatprep.subr.mxu0 0.0
    %509 = vmatpush2.msra.mxu0 0.0
    %510 = vmatprep.subr.mxu0 0.0
    %511 = vmatpush2.msra.mxu0 0.0
    %512 = vmatprep.mubr.f32.mxu0 0.0
    %v513 = vand.u32 %v27, 4294901760
    %514 = vmatmul.mubr.f32.gmra.mxu0 %v513
    %v515 = vpop.f32.mrf.mxu0
    %v516 = vadd.f32 %v438, %v515
    %v517 = vpop.f32.mrf.mxu0
    %518 = vmatprep.mubr.f32.mxu0 0.0
    %v519 = vand.u32 %v30, 4294901760
    %520 = vmatmul.mubr.f32.gmra.mxu0 %v519
    %v521 = vpop.f32.mrf.mxu0
    %v522 = vadd.f32 %v444, %v521
    %v523 = vpop.f32.mrf.mxu0
    %524 = vdwg.mxu0
    %vm525 = vcmask 261120
    %v527 = vsel %vm525, %v18, 0
    %529 = vmatprep.subr.mxu0 0.0
    %530 = vmatpush1.msra.mxu0 0.0
    %531 = vmatprep.subr.mxu0 0.0
    %532 = vmatpush1.msra.mxu0 0.0
    %533 = vmatprep.subr.mxu0 0.0
    %534 = vmatpush1.msra.mxu0 0.0
    %535 = vmatprep.subr.mxu0 0.0
    %536 = vmatpush1.msra.mxu0 0.0
    %537 = vmatprep.subr.mxu0 0.0
    %538 = vmatpush1.msra.mxu0 0.0
    %539 = vmatprep.subr.mxu0 0.0
    %540 = vmatpush1.msra.mxu0 0.0
    %541 = vmatprep.subr.mxu0 0.0
    %542 = vmatpush1.msra.mxu0 0.0
    %543 = vmatprep.subr.mxu0 0.0
    %544 = vmatpush1.msra.mxu0 0.0
    %545 = vmatprep.subr.mxu0 0.0
    %546 = vmatpush1.msra.mxu0 0.0
    %547 = vmatprep.subr.mxu0 0.0
    %548 = vmatpush1.msra.mxu0 0.0
    %549 = vmatprep.subr.mxu0 0.0
    %550 = vmatpush1.msra.mxu0 0.0
    %551 = vmatprep.subr.mxu0 0.0
    %552 = vmatpush1.msra.mxu0 0.0
    %553 = vmatprep.subr.mxu0 0.0
    %v554 = vand.u32 %v16, 4294901760
    %555 = vmatpush1.msra.mxu0 %v554
    %556 = vmatprep.subr.mxu0 0.0
    %v557 = vand.u32 %v15, 4294901760
    %558 = vmatpush1.msra.mxu0 %v557
    %559 = vmatprep.subr.mxu0 0.0
    %v560 = vand.u32 %v14, 4294901760
    %561 = vmatpush1.msra.mxu0 %v560
    %562 = vmatprep.subr.mxu0 0.0
    %v563 = vand.u32 %v13, 4294901760
    %564 = vmatpush1.msra.mxu0 %v563
    %565 = vmatprep.subr.mxu0 0.0
    %566 = vmatpush2.msra.mxu0 0.0
    %567 = vmatprep.subr.mxu0 0.0
    %568 = vmatpush2.msra.mxu0 0.0
    %569 = vmatprep.subr.mxu0 0.0
    %570 = vmatpush2.msra.mxu0 0.0
    %571 = vmatprep.subr.mxu0 0.0
    %572 = vmatpush2.msra.mxu0 0.0
    %573 = vmatprep.subr.mxu0 0.0
    %574 = vmatpush2.msra.mxu0 0.0
    %575 = vmatprep.subr.mxu0 0.0
    %576 = vmatpush2.msra.mxu0 0.0
    %577 = vmatprep.subr.mxu0 0.0
    %578 = vmatpush2.msra.mxu0 0.0
    %579 = vmatprep.subr.mxu0 0.0
    %580 = vmatpush2.msra.mxu0 0.0
    %581 = vmatprep.subr.mxu0 0.0
    %582 = vmatpush2.msra.mxu0 0.0
    %583 = vmatprep.subr.mxu0 0.0
    %584 = vmatpush2.msra.mxu0 0.0
    %585 = vmatprep.subr.mxu0 0.0
    %586 = vmatpush2.msra.mxu0 0.0
    %587 = vmatprep.subr.mxu0 0.0
    %588 = vmatpush2.msra.mxu0 0.0
    %589 = vmatprep.subr.mxu0 0.0
    %590 = vmatpush2.msra.mxu0 0.0
    %591 = vmatprep.subr.mxu0 0.0
    %592 = vmatpush2.msra.mxu0 0.0
    %593 = vmatprep.subr.mxu0 0.0
    %594 = vmatpush2.msra.mxu0 0.0
    %595 = vmatprep.subr.mxu0 0.0
    %596 = vmatpush2.msra.mxu0 0.0
    %597 = vmatprep.mubr.f32.mxu0 0.0
    %v598 = vand.u32 %v527, 4294901760
    %v599 = vsub.f32 %v527, %v598
    %v600 = vand.u32 %v599, 4294901760
    %v601 = vsub.f32 %v599, %v600
    %v602 = vand.u32 %v601, 4294901760
    %603 = vmatmul.mubr.f32.gmra.mxu0 %v602
    %v604 = vpop.f32.mrf.mxu0
    %v605 = vadd.f32 0.0, %v604
    %v606 = vpop.f32.mrf.mxu0
    %607 = vdwg.mxu0
    %608 = vmatprep.subr.mxu0 0.0
    %609 = vmatpush1.msra.mxu0 0.0
    %610 = vmatprep.subr.mxu0 0.0
    %611 = vmatpush1.msra.mxu0 0.0
    %612 = vmatprep.subr.mxu0 0.0
    %613 = vmatpush1.msra.mxu0 0.0
    %614 = vmatprep.subr.mxu0 0.0
    %615 = vmatpush1.msra.mxu0 0.0
    %616 = vmatprep.subr.mxu0 0.0
    %617 = vmatpush1.msra.mxu0 0.0
    %618 = vmatprep.subr.mxu0 0.0
    %619 = vmatpush1.msra.mxu0 0.0
    %620 = vmatprep.subr.mxu0 0.0
    %621 = vmatpush1.msra.mxu0 0.0
    %622 = vmatprep.subr.mxu0 0.0
    %623 = vmatpush1.msra.mxu0 0.0
    %624 = vmatprep.subr.mxu0 0.0
    %625 = vmatpush1.msra.mxu0 0.0
    %626 = vmatprep.subr.mxu0 0.0
    %627 = vmatpush1.msra.mxu0 0.0
    %628 = vmatprep.subr.mxu0 0.0
    %629 = vmatpush1.msra.mxu0 0.0
    %630 = vmatprep.subr.mxu0 0.0
    %631 = vmatpush1.msra.mxu0 0.0
    %632 = vmatprep.subr.mxu0 0.0
    %v633 = vand.u32 %v16, 4294901760
    %v634 = vsub.f32 %v16, %v633
    %v635 = vand.u32 %v634, 4294901760
    %v636 = vsub.f32 %v634, %v635
    %v637 = vand.u32 %v636, 4294901760
    %638 = vmatpush1.msra.mxu0 %v637
    %639 = vmatprep.subr.mxu0 0.0
    %v640 = vand.u32 %v15, 4294901760
    %v641 = vsub.f32 %v15, %v640
    %v642 = vand.u32 %v641, 4294901760
    %v643 = vsub.f32 %v641, %v642
    %v644 = vand.u32 %v643, 4294901760
    %645 = vmatpush1.msra.mxu0 %v644
    %646 = vmatprep.subr.mxu0 0.0
    %v647 = vand.u32 %v14, 4294901760
    %v648 = vsub.f32 %v14, %v647
    %v649 = vand.u32 %v648, 4294901760
    %v650 = vsub.f32 %v648, %v649
    %v651 = vand.u32 %v650, 4294901760
    %652 = vmatpush1.msra.mxu0 %v651
    %653 = vmatprep.subr.mxu0 0.0
    %v654 = vand.u32 %v13, 4294901760
    %v655 = vsub.f32 %v13, %v654
    %v656 = vand.u32 %v655, 4294901760
    %v657 = vsub.f32 %v655, %v656
    %v658 = vand.u32 %v657, 4294901760
    %659 = vmatpush1.msra.mxu0 %v658
    %660 = vmatprep.subr.mxu0 0.0
    %661 = vmatpush2.msra.mxu0 0.0
    %662 = vmatprep.subr.mxu0 0.0
    %663 = vmatpush2.msra.mxu0 0.0
    %664 = vmatprep.subr.mxu0 0.0
    %665 = vmatpush2.msra.mxu0 0.0
    %666 = vmatprep.subr.mxu0 0.0
    %667 = vmatpush2.msra.mxu0 0.0
    %668 = vmatprep.subr.mxu0 0.0
    %669 = vmatpush2.msra.mxu0 0.0
    %670 = vmatprep.subr.mxu0 0.0
    %671 = vmatpush2.msra.mxu0 0.0
    %672 = vmatprep.subr.mxu0 0.0
    %673 = vmatpush2.msra.mxu0 0.0
    %674 = vmatprep.subr.mxu0 0.0
    %675 = vmatpush2.msra.mxu0 0.0
    %676 = vmatprep.subr.mxu0 0.0
    %677 = vmatpush2.msra.mxu0 0.0
    %678 = vmatprep.subr.mxu0 0.0
    %679 = vmatpush2.msra.mxu0 0.0
    %680 = vmatprep.subr.mxu0 0.0
    %681 = vmatpush2.msra.mxu0 0.0
    %682 = vmatprep.subr.mxu0 0.0
    %683 = vmatpush2.msra.mxu0 0.0
    %684 = vmatprep.subr.mxu0 0.0
    %685 = vmatpush2.msra.mxu0 0.0
    %686 = vmatprep.subr.mxu0 0.0
    %687 = vmatpush2.msra.mxu0 0.0
    %688 = vmatprep.subr.mxu0 0.0
    %689 = vmatpush2.msra.mxu0 0.0
    %690 = vmatprep.subr.mxu0 0.0
    %691 = vmatpush2.msra.mxu0 0.0
    %692 = vmatprep.mubr.f32.mxu0 0.0
    %v693 = vand.u32 %v527, 4294901760
    %694 = vmatmul.mubr.f32.gmra.mxu0 %v693
    %v695 = vpop.f32.mrf.mxu0
    %v696 = vadd.f32 %v605, %v695
    %v697 = vpop.f32.mrf.mxu0
    %698 = vdwg.mxu0
    %699 = vmatprep.subr.mxu0 0.0
    %700 = vmatpush1.msra.mxu0 0.0
    %701 = vmatprep.subr.mxu0 0.0
    %702 = vmatpush1.msra.mxu0 0.0
    %703 = vmatprep.subr.mxu0 0.0
    %704 = vmatpush1.msra.mxu0 0.0
    %705 = vmatprep.subr.mxu0 0.0
    %706 = vmatpush1.msra.mxu0 0.0
    %707 = vmatprep.subr.mxu0 0.0
    %708 = vmatpush1.msra.mxu0 0.0
    %709 = vmatprep.subr.mxu0 0.0
    %710 = vmatpush1.msra.mxu0 0.0
    %711 = vmatprep.subr.mxu0 0.0
    %712 = vmatpush1.msra.mxu0 0.0
    %713 = vmatprep.subr.mxu0 0.0
    %714 = vmatpush1.msra.mxu0 0.0
    %715 = vmatprep.subr.mxu0 0.0
    %716 = vmatpush1.msra.mxu0 0.0
    %717 = vmatprep.subr.mxu0 0.0
    %718 = vmatpush1.msra.mxu0 0.0
    %719 = vmatprep.subr.mxu0 0.0
    %720 = vmatpush1.msra.mxu0 0.0
    %721 = vmatprep.subr.mxu0 0.0
    %722 = vmatpush1.msra.mxu0 0.0
    %723 = vmatprep.subr.mxu0 0.0
    %v724 = vand.u32 %v16, 4294901760
    %v725 = vsub.f32 %v16, %v724
    %726 = vmatpush1.msra.mxu0 %v725
    %727 = vmatprep.subr.mxu0 0.0
    %v728 = vand.u32 %v15, 4294901760
    %v729 = vsub.f32 %v15, %v728
    %730 = vmatpush1.msra.mxu0 %v729
    %731 = vmatprep.subr.mxu0 0.0
    %v732 = vand.u32 %v14, 4294901760
    %v733 = vsub.f32 %v14, %v732
    %734 = vmatpush1.msra.mxu0 %v733
    %735 = vmatprep.subr.mxu0 0.0
    %v736 = vand.u32 %v13, 4294901760
    %v737 = vsub.f32 %v13, %v736
    %738 = vmatpush1.msra.mxu0 %v737
    %739 = vmatprep.subr.mxu0 0.0
    %740 = vmatpush2.msra.mxu0 0.0
    %741 = vmatprep.subr.mxu0 0.0
    %742 = vmatpush2.msra.mxu0 0.0
    %743 = vmatprep.subr.mxu0 0.0
    %744 = vmatpush2.msra.mxu0 0.0
    %745 = vmatprep.subr.mxu0 0.0
    %746 = vmatpush2.msra.mxu0 0.0
    %747 = vmatprep.subr.mxu0 0.0
    %748 = vmatpush2.msra.mxu0 0.0
    %749 = vmatprep.subr.mxu0 0.0
    %750 = vmatpush2.msra.mxu0 0.0
    %751 = vmatprep.subr.mxu0 0.0
    %752 = vmatpush2.msra.mxu0 0.0
    %753 = vmatprep.subr.mxu0 0.0
    %754 = vmatpush2.msra.mxu0 0.0
    %755 = vmatprep.subr.mxu0 0.0
    %756 = vmatpush2.msra.mxu0 0.0
    %757 = vmatprep.subr.mxu0 0.0
    %758 = vmatpush2.msra.mxu0 0.0
    %759 = vmatprep.subr.mxu0 0.0
    %760 = vmatpush2.msra.mxu0 0.0
    %761 = vmatprep.subr.mxu0 0.0
    %762 = vmatpush2.msra.mxu0 0.0
    %763 = vmatprep.subr.mxu0 0.0
    %764 = vmatpush2.msra.mxu0 0.0
    %765 = vmatprep.subr.mxu0 0.0
    %766 = vmatpush2.msra.mxu0 0.0
    %767 = vmatprep.subr.mxu0 0.0
    %768 = vmatpush2.msra.mxu0 0.0
    %769 = vmatprep.subr.mxu0 0.0
    %770 = vmatpush2.msra.mxu0 0.0
    %771 = vmatprep.mubr.f32.mxu0 0.0
    %v772 = vand.u32 %v527, 4294901760
    %v773 = vsub.f32 %v527, %v772
    %774 = vmatmul.mubr.f32.gmra.mxu0 %v773
    %v775 = vpop.f32.mrf.mxu0
    %v776 = vadd.f32 %v696, %v775
    %v777 = vpop.f32.mrf.mxu0
    %778 = vdwg.mxu0
    %779 = vmatprep.subr.mxu0 0.0
    %780 = vmatpush1.msra.mxu0 0.0
    %781 = vmatprep.subr.mxu0 0.0
    %782 = vmatpush1.msra.mxu0 0.0
    %783 = vmatprep.subr.mxu0 0.0
    %784 = vmatpush1.msra.mxu0 0.0
    %785 = vmatprep.subr.mxu0 0.0
    %786 = vmatpush1.msra.mxu0 0.0
    %787 = vmatprep.subr.mxu0 0.0
    %788 = vmatpush1.msra.mxu0 0.0
    %789 = vmatprep.subr.mxu0 0.0
    %790 = vmatpush1.msra.mxu0 0.0
    %791 = vmatprep.subr.mxu0 0.0
    %792 = vmatpush1.msra.mxu0 0.0
    %793 = vmatprep.subr.mxu0 0.0
    %794 = vmatpush1.msra.mxu0 0.0
    %795 = vmatprep.subr.mxu0 0.0
    %796 = vmatpush1.msra.mxu0 0.0
    %797 = vmatprep.subr.mxu0 0.0
    %798 = vmatpush1.msra.mxu0 0.0
    %799 = vmatprep.subr.mxu0 0.0
    %800 = vmatpush1.msra.mxu0 0.0
    %801 = vmatprep.subr.mxu0 0.0
    %802 = vmatpush1.msra.mxu0 0.0
    %803 = vmatprep.subr.mxu0 0.0
    %v804 = vand.u32 %v16, 4294901760
    %805 = vmatpush1.msra.mxu0 %v804
    %806 = vmatprep.subr.mxu0 0.0
    %v807 = vand.u32 %v15, 4294901760
    %808 = vmatpush1.msra.mxu0 %v807
    %809 = vmatprep.subr.mxu0 0.0
    %v810 = vand.u32 %v14, 4294901760
    %811 = vmatpush1.msra.mxu0 %v810
    %812 = vmatprep.subr.mxu0 0.0
    %v813 = vand.u32 %v13, 4294901760
    %814 = vmatpush1.msra.mxu0 %v813
    %815 = vmatprep.subr.mxu0 0.0
    %816 = vmatpush2.msra.mxu0 0.0
    %817 = vmatprep.subr.mxu0 0.0
    %818 = vmatpush2.msra.mxu0 0.0
    %819 = vmatprep.subr.mxu0 0.0
    %820 = vmatpush2.msra.mxu0 0.0
    %821 = vmatprep.subr.mxu0 0.0
    %822 = vmatpush2.msra.mxu0 0.0
    %823 = vmatprep.subr.mxu0 0.0
    %824 = vmatpush2.msra.mxu0 0.0
    %825 = vmatprep.subr.mxu0 0.0
    %826 = vmatpush2.msra.mxu0 0.0
    %827 = vmatprep.subr.mxu0 0.0
    %828 = vmatpush2.msra.mxu0 0.0
    %829 = vmatprep.subr.mxu0 0.0
    %830 = vmatpush2.msra.mxu0 0.0
    %831 = vmatprep.subr.mxu0 0.0
    %832 = vmatpush2.msra.mxu0 0.0
    %833 = vmatprep.subr.mxu0 0.0
    %834 = vmatpush2.msra.mxu0 0.0
    %835 = vmatprep.subr.mxu0 0.0
    %836 = vmatpush2.msra.mxu0 0.0
    %837 = vmatprep.subr.mxu0 0.0
    %838 = vmatpush2.msra.mxu0 0.0
    %839 = vmatprep.subr.mxu0 0.0
    %840 = vmatpush2.msra.mxu0 0.0
    %841 = vmatprep.subr.mxu0 0.0
    %842 = vmatpush2.msra.mxu0 0.0
    %843 = vmatprep.subr.mxu0 0.0
    %844 = vmatpush2.msra.mxu0 0.0
    %845 = vmatprep.subr.mxu0 0.0
    %846 = vmatpush2.msra.mxu0 0.0
    %847 = vmatprep.mubr.f32.mxu0 0.0
    %v848 = vand.u32 %v527, 4294901760
    %v849 = vsub.f32 %v527, %v848
    %v850 = vand.u32 %v849, 4294901760
    %851 = vmatmul.mubr.f32.gmra.mxu0 %v850
    %v852 = vpop.f32.mrf.mxu0
    %v853 = vadd.f32 %v776, %v852
    %v854 = vpop.f32.mrf.mxu0
    %855 = vdwg.mxu0
    %856 = vmatprep.subr.mxu0 0.0
    %857 = vmatpush1.msra.mxu0 0.0
    %858 = vmatprep.subr.mxu0 0.0
    %859 = vmatpush1.msra.mxu0 0.0
    %860 = vmatprep.subr.mxu0 0.0
    %861 = vmatpush1.msra.mxu0 0.0
    %862 = vmatprep.subr.mxu0 0.0
    %863 = vmatpush1.msra.mxu0 0.0
    %864 = vmatprep.subr.mxu0 0.0
    %865 = vmatpush1.msra.mxu0 0.0
    %866 = vmatprep.subr.mxu0 0.0
    %867 = vmatpush1.msra.mxu0 0.0
    %868 = vmatprep.subr.mxu0 0.0
    %869 = vmatpush1.msra.mxu0 0.0
    %870 = vmatprep.subr.mxu0 0.0
    %871 = vmatpush1.msra.mxu0 0.0
    %872 = vmatprep.subr.mxu0 0.0
    %873 = vmatpush1.msra.mxu0 0.0
    %874 = vmatprep.subr.mxu0 0.0
    %875 = vmatpush1.msra.mxu0 0.0
    %876 = vmatprep.subr.mxu0 0.0
    %877 = vmatpush1.msra.mxu0 0.0
    %878 = vmatprep.subr.mxu0 0.0
    %879 = vmatpush1.msra.mxu0 0.0
    %880 = vmatprep.subr.mxu0 0.0
    %v881 = vand.u32 %v16, 4294901760
    %v882 = vsub.f32 %v16, %v881
    %v883 = vand.u32 %v882, 4294901760
    %884 = vmatpush1.msra.mxu0 %v883
    %885 = vmatprep.subr.mxu0 0.0
    %v886 = vand.u32 %v15, 4294901760
    %v887 = vsub.f32 %v15, %v886
    %v888 = vand.u32 %v887, 4294901760
    %889 = vmatpush1.msra.mxu0 %v888
    %890 = vmatprep.subr.mxu0 0.0
    %v891 = vand.u32 %v14, 4294901760
    %v892 = vsub.f32 %v14, %v891
    %v893 = vand.u32 %v892, 4294901760
    %894 = vmatpush1.msra.mxu0 %v893
    %895 = vmatprep.subr.mxu0 0.0
    %v896 = vand.u32 %v13, 4294901760
    %v897 = vsub.f32 %v13, %v896
    %v898 = vand.u32 %v897, 4294901760
    %899 = vmatpush1.msra.mxu0 %v898
    %900 = vmatprep.subr.mxu0 0.0
    %901 = vmatpush2.msra.mxu0 0.0
    %902 = vmatprep.subr.mxu0 0.0
    %903 = vmatpush2.msra.mxu0 0.0
    %904 = vmatprep.subr.mxu0 0.0
    %905 = vmatpush2.msra.mxu0 0.0
    %906 = vmatprep.subr.mxu0 0.0
    %907 = vmatpush2.msra.mxu0 0.0
    %908 = vmatprep.subr.mxu0 0.0
    %909 = vmatpush2.msra.mxu0 0.0
    %910 = vmatprep.subr.mxu0 0.0
    %911 = vmatpush2.msra.mxu0 0.0
    %912 = vmatprep.subr.mxu0 0.0
    %913 = vmatpush2.msra.mxu0 0.0
    %914 = vmatprep.subr.mxu0 0.0
    %915 = vmatpush2.msra.mxu0 0.0
    %916 = vmatprep.subr.mxu0 0.0
    %917 = vmatpush2.msra.mxu0 0.0
    %918 = vmatprep.subr.mxu0 0.0
    %919 = vmatpush2.msra.mxu0 0.0
    %920 = vmatprep.subr.mxu0 0.0
    %921 = vmatpush2.msra.mxu0 0.0
    %922 = vmatprep.subr.mxu0 0.0
    %923 = vmatpush2.msra.mxu0 0.0
    %924 = vmatprep.subr.mxu0 0.0
    %925 = vmatpush2.msra.mxu0 0.0
    %926 = vmatprep.subr.mxu0 0.0
    %927 = vmatpush2.msra.mxu0 0.0
    %928 = vmatprep.subr.mxu0 0.0
    %929 = vmatpush2.msra.mxu0 0.0
    %930 = vmatprep.subr.mxu0 0.0
    %931 = vmatpush2.msra.mxu0 0.0
    %932 = vmatprep.mubr.f32.mxu0 0.0
    %v933 = vand.u32 %v527, 4294901760
    %934 = vmatmul.mubr.f32.gmra.mxu0 %v933
    %v935 = vpop.f32.mrf.mxu0
    %v936 = vadd.f32 %v853, %v935
    %v937 = vpop.f32.mrf.mxu0
    %938 = vdwg.mxu0
    %939 = vmatprep.subr.mxu0 0.0
    %940 = vmatpush1.msra.mxu0 0.0
    %941 = vmatprep.subr.mxu0 0.0
    %942 = vmatpush1.msra.mxu0 0.0
    %943 = vmatprep.subr.mxu0 0.0
    %944 = vmatpush1.msra.mxu0 0.0
    %945 = vmatprep.subr.mxu0 0.0
    %946 = vmatpush1.msra.mxu0 0.0
    %947 = vmatprep.subr.mxu0 0.0
    %948 = vmatpush1.msra.mxu0 0.0
    %949 = vmatprep.subr.mxu0 0.0
    %950 = vmatpush1.msra.mxu0 0.0
    %951 = vmatprep.subr.mxu0 0.0
    %952 = vmatpush1.msra.mxu0 0.0
    %953 = vmatprep.subr.mxu0 0.0
    %954 = vmatpush1.msra.mxu0 0.0
    %955 = vmatprep.subr.mxu0 0.0
    %956 = vmatpush1.msra.mxu0 0.0
    %957 = vmatprep.subr.mxu0 0.0
    %958 = vmatpush1.msra.mxu0 0.0
    %959 = vmatprep.subr.mxu0 0.0
    %960 = vmatpush1.msra.mxu0 0.0
    %961 = vmatprep.subr.mxu0 0.0
    %962 = vmatpush1.msra.mxu0 0.0
    %963 = vmatprep.subr.mxu0 0.0
    %v964 = vand.u32 %v16, 4294901760
    %965 = vmatpush1.msra.mxu0 %v964
    %966 = vmatprep.subr.mxu0 0.0
    %v967 = vand.u32 %v15, 4294901760
    %968 = vmatpush1.msra.mxu0 %v967
    %969 = vmatprep.subr.mxu0 0.0
    %v970 = vand.u32 %v14, 4294901760
    %971 = vmatpush1.msra.mxu0 %v970
    %972 = vmatprep.subr.mxu0 0.0
    %v973 = vand.u32 %v13, 4294901760
    %974 = vmatpush1.msra.mxu0 %v973
    %975 = vmatprep.subr.mxu0 0.0
    %976 = vmatpush2.msra.mxu0 0.0
    %977 = vmatprep.subr.mxu0 0.0
    %978 = vmatpush2.msra.mxu0 0.0
    %979 = vmatprep.subr.mxu0 0.0
    %980 = vmatpush2.msra.mxu0 0.0
    %981 = vmatprep.subr.mxu0 0.0
    %982 = vmatpush2.msra.mxu0 0.0
    %983 = vmatprep.subr.mxu0 0.0
    %984 = vmatpush2.msra.mxu0 0.0
    %985 = vmatprep.subr.mxu0 0.0
    %986 = vmatpush2.msra.mxu0 0.0
    %987 = vmatprep.subr.mxu0 0.0
    %988 = vmatpush2.msra.mxu0 0.0
    %989 = vmatprep.subr.mxu0 0.0
    %990 = vmatpush2.msra.mxu0 0.0
    %991 = vmatprep.subr.mxu0 0.0
    %992 = vmatpush2.msra.mxu0 0.0
    %993 = vmatprep.subr.mxu0 0.0
    %994 = vmatpush2.msra.mxu0 0.0
    %995 = vmatprep.subr.mxu0 0.0
    %996 = vmatpush2.msra.mxu0 0.0
    %997 = vmatprep.subr.mxu0 0.0
    %998 = vmatpush2.msra.mxu0 0.0
    %999 = vmatprep.subr.mxu0 0.0
    %1000 = vmatpush2.msra.mxu0 0.0
    %1001 = vmatprep.subr.mxu0 0.0
    %1002 = vmatpush2.msra.mxu0 0.0
    %1003 = vmatprep.subr.mxu0 0.0
    %1004 = vmatpush2.msra.mxu0 0.0
    %1005 = vmatprep.subr.mxu0 0.0
    %1006 = vmatpush2.msra.mxu0 0.0
    %1007 = vmatprep.mubr.f32.mxu0 0.0
    %v1008 = vand.u32 %v527, 4294901760
    %1009 = vmatmul.mubr.f32.gmra.mxu0 %v1008
    %v1010 = vpop.f32.mrf.mxu0
    %v1011 = vadd.f32 %v936, %v1010
    %v1012 = vpop.f32.mrf.mxu0
    %1013 = vdwg.mxu0
    %v1014 = vadd.f32 %v516, %v1011
    %v1015 = vtanh.pop %v1014
    %v1017 = vsel %vm525, %v1015, 0
    %1019 = vmatprep.subr.mxu0 0.0
    %1020 = vmatpush1.msra.mxu0 0.0
    %1021 = vmatprep.subr.mxu0 0.0
    %1022 = vmatpush1.msra.mxu0 0.0
    %1023 = vmatprep.subr.mxu0 0.0
    %1024 = vmatpush1.msra.mxu0 0.0
    %1025 = vmatprep.subr.mxu0 0.0
    %1026 = vmatpush1.msra.mxu0 0.0
    %1027 = vmatprep.subr.mxu0 0.0
    %1028 = vmatpush1.msra.mxu0 0.0
    %1029 = vmatprep.subr.mxu0 0.0
    %1030 = vmatpush1.msra.mxu0 0.0
    %1031 = vmatprep.subr.mxu0 0.0
    %1032 = vmatpush1.msra.mxu0 0.0
    %1033 = vmatprep.subr.mxu0 0.0
    %1034 = vmatpush1.msra.mxu0 0.0
    %1035 = vmatprep.subr.mxu0 0.0
    %1036 = vmatpush1.msra.mxu0 0.0
    %1037 = vmatprep.subr.mxu0 0.0
    %1038 = vmatpush1.msra.mxu0 0.0
    %1039 = vmatprep.subr.mxu0 0.0
    %1040 = vmatpush1.msra.mxu0 0.0
    %1041 = vmatprep.subr.mxu0 0.0
    %1042 = vmatpush1.msra.mxu0 0.0
    %1043 = vmatprep.subr.mxu0 0.0
    %v1044 = vand.u32 %v16, 4294901760
    %1045 = vmatpush1.msra.mxu0 %v1044
    %1046 = vmatprep.subr.mxu0 0.0
    %v1047 = vand.u32 %v15, 4294901760
    %1048 = vmatpush1.msra.mxu0 %v1047
    %1049 = vmatprep.subr.mxu0 0.0
    %v1050 = vand.u32 %v14, 4294901760
    %1051 = vmatpush1.msra.mxu0 %v1050
    %1052 = vmatprep.subr.mxu0 0.0
    %v1053 = vand.u32 %v13, 4294901760
    %1054 = vmatpush1.msra.mxu0 %v1053
    %1055 = vmatprep.subr.mxu0 0.0
    %1056 = vmatpush2.msra.mxu0 0.0
    %1057 = vmatprep.subr.mxu0 0.0
    %1058 = vmatpush2.msra.mxu0 0.0
    %1059 = vmatprep.subr.mxu0 0.0
    %1060 = vmatpush2.msra.mxu0 0.0
    %1061 = vmatprep.subr.mxu0 0.0
    %1062 = vmatpush2.msra.mxu0 0.0
    %1063 = vmatprep.subr.mxu0 0.0
    %1064 = vmatpush2.msra.mxu0 0.0
    %1065 = vmatprep.subr.mxu0 0.0
    %1066 = vmatpush2.msra.mxu0 0.0
    %1067 = vmatprep.subr.mxu0 0.0
    %1068 = vmatpush2.msra.mxu0 0.0
    %1069 = vmatprep.subr.mxu0 0.0
    %1070 = vmatpush2.msra.mxu0 0.0
    %1071 = vmatprep.subr.mxu0 0.0
    %1072 = vmatpush2.msra.mxu0 0.0
    %1073 = vmatprep.subr.mxu0 0.0
    %1074 = vmatpush2.msra.mxu0 0.0
    %1075 = vmatprep.subr.mxu0 0.0
    %1076 = vmatpush2.msra.mxu0 0.0
    %1077 = vmatprep.subr.mxu0 0.0
    %1078 = vmatpush2.msra.mxu0 0.0
    %1079 = vmatprep.subr.mxu0 0.0
    %1080 = vmatpush2.msra.mxu0 0.0
    %1081 = vmatprep.subr.mxu0 0.0
    %1082 = vmatpush2.msra.mxu0 0.0
    %1083 = vmatprep.subr.mxu0 0.0
    %1084 = vmatpush2.msra.mxu0 0.0
    %1085 = vmatprep.subr.mxu0 0.0
    %1086 = vmatpush2.msra.mxu0 0.0
    %1087 = vmatprep.mubr.f32.mxu0 0.0
    %v1088 = vand.u32 %v1017, 4294901760
    %v1089 = vsub.f32 %v1017, %v1088
    %v1090 = vand.u32 %v1089, 4294901760
    %v1091 = vsub.f32 %v1089, %v1090
    %v1092 = vand.u32 %v1091, 4294901760
    %1093 = vmatmul.mubr.f32.gmra.mxu0 %v1092
    %v1094 = vpop.f32.mrf.mxu0
    %v1095 = vadd.f32 0.0, %v1094
    %v1096 = vpop.f32.mrf.mxu0
    %1097 = vdwg.mxu0
    %1098 = vmatprep.subr.mxu0 0.0
    %1099 = vmatpush1.msra.mxu0 0.0
    %1100 = vmatprep.subr.mxu0 0.0
    %1101 = vmatpush1.msra.mxu0 0.0
    %1102 = vmatprep.subr.mxu0 0.0
    %1103 = vmatpush1.msra.mxu0 0.0
    %1104 = vmatprep.subr.mxu0 0.0
    %1105 = vmatpush1.msra.mxu0 0.0
    %1106 = vmatprep.subr.mxu0 0.0
    %1107 = vmatpush1.msra.mxu0 0.0
    %1108 = vmatprep.subr.mxu0 0.0
    %1109 = vmatpush1.msra.mxu0 0.0
    %1110 = vmatprep.subr.mxu0 0.0
    %1111 = vmatpush1.msra.mxu0 0.0
    %1112 = vmatprep.subr.mxu0 0.0
    %1113 = vmatpush1.msra.mxu0 0.0
    %1114 = vmatprep.subr.mxu0 0.0
    %1115 = vmatpush1.msra.mxu0 0.0
    %1116 = vmatprep.subr.mxu0 0.0
    %1117 = vmatpush1.msra.mxu0 0.0
    %1118 = vmatprep.subr.mxu0 0.0
    %1119 = vmatpush1.msra.mxu0 0.0
    %1120 = vmatprep.subr.mxu0 0.0
    %1121 = vmatpush1.msra.mxu0 0.0
    %1122 = vmatprep.subr.mxu0 0.0
    %v1123 = vand.u32 %v16, 4294901760
    %v1124 = vsub.f32 %v16, %v1123
    %v1125 = vand.u32 %v1124, 4294901760
    %v1126 = vsub.f32 %v1124, %v1125
    %v1127 = vand.u32 %v1126, 4294901760
    %1128 = vmatpush1.msra.mxu0 %v1127
    %1129 = vmatprep.subr.mxu0 0.0
    %v1130 = vand.u32 %v15, 4294901760
    %v1131 = vsub.f32 %v15, %v1130
    %v1132 = vand.u32 %v1131, 4294901760
    %v1133 = vsub.f32 %v1131, %v1132
    %v1134 = vand.u32 %v1133, 4294901760
    %1135 = vmatpush1.msra.mxu0 %v1134
    %1136 = vmatprep.subr.mxu0 0.0
    %v1137 = vand.u32 %v14, 4294901760
    %v1138 = vsub.f32 %v14, %v1137
    %v1139 = vand.u32 %v1138, 4294901760
    %v1140 = vsub.f32 %v1138, %v1139
    %v1141 = vand.u32 %v1140, 4294901760
    %1142 = vmatpush1.msra.mxu0 %v1141
    %1143 = vmatprep.subr.mxu0 0.0
    %v1144 = vand.u32 %v13, 4294901760
    %v1145 = vsub.f32 %v13, %v1144
    %v1146 = vand.u32 %v1145, 4294901760
    %v1147 = vsub.f32 %v1145, %v1146
    %v1148 = vand.u32 %v1147, 4294901760
    %1149 = vmatpush1.msra.mxu0 %v1148
    %1150 = vmatprep.subr.mxu0 0.0
    %1151 = vmatpush2.msra.mxu0 0.0
    %1152 = vmatprep.subr.mxu0 0.0
    %1153 = vmatpush2.msra.mxu0 0.0
    %1154 = vmatprep.subr.mxu0 0.0
    %1155 = vmatpush2.msra.mxu0 0.0
    %1156 = vmatprep.subr.mxu0 0.0
    %1157 = vmatpush2.msra.mxu0 0.0
    %1158 = vmatprep.subr.mxu0 0.0
    %1159 = vmatpush2.msra.mxu0 0.0
    %1160 = vmatprep.subr.mxu0 0.0
    %1161 = vmatpush2.msra.mxu0 0.0
    %1162 = vmatprep.subr.mxu0 0.0
    %1163 = vmatpush2.msra.mxu0 0.0
    %1164 = vmatprep.subr.mxu0 0.0
    %1165 = vmatpush2.msra.mxu0 0.0
    %1166 = vmatprep.subr.mxu0 0.0
    %1167 = vmatpush2.msra.mxu0 0.0
    %1168 = vmatprep.subr.mxu0 0.0
    %1169 = vmatpush2.msra.mxu0 0.0
    %1170 = vmatprep.subr.mxu0 0.0
    %1171 = vmatpush2.msra.mxu0 0.0
    %1172 = vmatprep.subr.mxu0 0.0
    %1173 = vmatpush2.msra.mxu0 0.0
    %1174 = vmatprep.subr.mxu0 0.0
    %1175 = vmatpush2.msra.mxu0 0.0
    %1176 = vmatprep.subr.mxu0 0.0
    %1177 = vmatpush2.msra.mxu0 0.0
    %1178 = vmatprep.subr.mxu0 0.0
    %1179 = vmatpush2.msra.mxu0 0.0
    %1180 = vmatprep.subr.mxu0 0.0
    %1181 = vmatpush2.msra.mxu0 0.0
    %1182 = vmatprep.mubr.f32.mxu0 0.0
    %v1183 = vand.u32 %v1017, 4294901760
    %1184 = vmatmul.mubr.f32.gmra.mxu0 %v1183
    %v1185 = vpop.f32.mrf.mxu0
    %v1186 = vadd.f32 %v1095, %v1185
    %v1187 = vpop.f32.mrf.mxu0
    %1188 = vdwg.mxu0
    %1189 = vmatprep.subr.mxu0 0.0
    %1190 = vmatpush1.msra.mxu0 0.0
    %1191 = vmatprep.subr.mxu0 0.0
    %1192 = vmatpush1.msra.mxu0 0.0
    %1193 = vmatprep.subr.mxu0 0.0
    %1194 = vmatpush1.msra.mxu0 0.0
    %1195 = vmatprep.subr.mxu0 0.0
    %1196 = vmatpush1.msra.mxu0 0.0
    %1197 = vmatprep.subr.mxu0 0.0
    %1198 = vmatpush1.msra.mxu0 0.0
    %1199 = vmatprep.subr.mxu0 0.0
    %1200 = vmatpush1.msra.mxu0 0.0
    %1201 = vmatprep.subr.mxu0 0.0
    %1202 = vmatpush1.msra.mxu0 0.0
    %1203 = vmatprep.subr.mxu0 0.0
    %1204 = vmatpush1.msra.mxu0 0.0
    %1205 = vmatprep.subr.mxu0 0.0
    %1206 = vmatpush1.msra.mxu0 0.0
    %1207 = vmatprep.subr.mxu0 0.0
    %1208 = vmatpush1.msra.mxu0 0.0
    %1209 = vmatprep.subr.mxu0 0.0
    %1210 = vmatpush1.msra.mxu0 0.0
    %1211 = vmatprep.subr.mxu0 0.0
    %1212 = vmatpush1.msra.mxu0 0.0
    %1213 = vmatprep.subr.mxu0 0.0
    %v1214 = vand.u32 %v16, 4294901760
    %v1215 = vsub.f32 %v16, %v1214
    %1216 = vmatpush1.msra.mxu0 %v1215
    %1217 = vmatprep.subr.mxu0 0.0
    %v1218 = vand.u32 %v15, 4294901760
    %v1219 = vsub.f32 %v15, %v1218
    %1220 = vmatpush1.msra.mxu0 %v1219
    %1221 = vmatprep.subr.mxu0 0.0
    %v1222 = vand.u32 %v14, 4294901760
    %v1223 = vsub.f32 %v14, %v1222
    %1224 = vmatpush1.msra.mxu0 %v1223
    %1225 = vmatprep.subr.mxu0 0.0
    %v1226 = vand.u32 %v13, 4294901760
    %v1227 = vsub.f32 %v13, %v1226
    %1228 = vmatpush1.msra.mxu0 %v1227
    %1229 = vmatprep.subr.mxu0 0.0
    %1230 = vmatpush2.msra.mxu0 0.0
    %1231 = vmatprep.subr.mxu0 0.0
    %1232 = vmatpush2.msra.mxu0 0.0
    %1233 = vmatprep.subr.mxu0 0.0
    %1234 = vmatpush2.msra.mxu0 0.0
    %1235 = vmatprep.subr.mxu0 0.0
    %1236 = vmatpush2.msra.mxu0 0.0
    %1237 = vmatprep.subr.mxu0 0.0
    %1238 = vmatpush2.msra.mxu0 0.0
    %1239 = vmatprep.subr.mxu0 0.0
    %1240 = vmatpush2.msra.mxu0 0.0
    %1241 = vmatprep.subr.mxu0 0.0
    %1242 = vmatpush2.msra.mxu0 0.0
    %1243 = vmatprep.subr.mxu0 0.0
    %1244 = vmatpush2.msra.mxu0 0.0
    %1245 = vmatprep.subr.mxu0 0.0
    %1246 = vmatpush2.msra.mxu0 0.0
    %1247 = vmatprep.subr.mxu0 0.0
    %1248 = vmatpush2.msra.mxu0 0.0
    %1249 = vmatprep.subr.mxu0 0.0
    %1250 = vmatpush2.msra.mxu0 0.0
    %1251 = vmatprep.subr.mxu0 0.0
    %1252 = vmatpush2.msra.mxu0 0.0
    %1253 = vmatprep.subr.mxu0 0.0
    %1254 = vmatpush2.msra.mxu0 0.0
    %1255 = vmatprep.subr.mxu0 0.0
    %1256 = vmatpush2.msra.mxu0 0.0
    %1257 = vmatprep.subr.mxu0 0.0
    %1258 = vmatpush2.msra.mxu0 0.0
    %1259 = vmatprep.subr.mxu0 0.0
    %1260 = vmatpush2.msra.mxu0 0.0
    %1261 = vmatprep.mubr.f32.mxu0 0.0
    %v1262 = vand.u32 %v1017, 4294901760
    %v1263 = vsub.f32 %v1017, %v1262
    %1264 = vmatmul.mubr.f32.gmra.mxu0 %v1263
    %v1265 = vpop.f32.mrf.mxu0
    %v1266 = vadd.f32 %v1186, %v1265
    %v1267 = vpop.f32.mrf.mxu0
    %1268 = vdwg.mxu0
    %1269 = vmatprep.subr.mxu0 0.0
    %1270 = vmatpush1.msra.mxu0 0.0
    %1271 = vmatprep.subr.mxu0 0.0
    %1272 = vmatpush1.msra.mxu0 0.0
    %1273 = vmatprep.subr.mxu0 0.0
    %1274 = vmatpush1.msra.mxu0 0.0
    %1275 = vmatprep.subr.mxu0 0.0
    %1276 = vmatpush1.msra.mxu0 0.0
    %1277 = vmatprep.subr.mxu0 0.0
    %1278 = vmatpush1.msra.mxu0 0.0
    %1279 = vmatprep.subr.mxu0 0.0
    %1280 = vmatpush1.msra.mxu0 0.0
    %1281 = vmatprep.subr.mxu0 0.0
    %1282 = vmatpush1.msra.mxu0 0.0
    %1283 = vmatprep.subr.mxu0 0.0
    %1284 = vmatpush1.msra.mxu0 0.0
    %1285 = vmatprep.subr.mxu0 0.0
    %1286 = vmatpush1.msra.mxu0 0.0
    %1287 = vmatprep.subr.mxu0 0.0
    %1288 = vmatpush1.msra.mxu0 0.0
    %1289 = vmatprep.subr.mxu0 0.0
    %1290 = vmatpush1.msra.mxu0 0.0
    %1291 = vmatprep.subr.mxu0 0.0
    %1292 = vmatpush1.msra.mxu0 0.0
    %1293 = vmatprep.subr.mxu0 0.0
    %v1294 = vand.u32 %v16, 4294901760
    %1295 = vmatpush1.msra.mxu0 %v1294
    %1296 = vmatprep.subr.mxu0 0.0
    %v1297 = vand.u32 %v15, 4294901760
    %1298 = vmatpush1.msra.mxu0 %v1297
    %1299 = vmatprep.subr.mxu0 0.0
    %v1300 = vand.u32 %v14, 4294901760
    %1301 = vmatpush1.msra.mxu0 %v1300
    %1302 = vmatprep.subr.mxu0 0.0
    %v1303 = vand.u32 %v13, 4294901760
    %1304 = vmatpush1.msra.mxu0 %v1303
    %1305 = vmatprep.subr.mxu0 0.0
    %1306 = vmatpush2.msra.mxu0 0.0
    %1307 = vmatprep.subr.mxu0 0.0
    %1308 = vmatpush2.msra.mxu0 0.0
    %1309 = vmatprep.subr.mxu0 0.0
    %1310 = vmatpush2.msra.mxu0 0.0
    %1311 = vmatprep.subr.mxu0 0.0
    %1312 = vmatpush2.msra.mxu0 0.0
    %1313 = vmatprep.subr.mxu0 0.0
    %1314 = vmatpush2.msra.mxu0 0.0
    %1315 = vmatprep.subr.mxu0 0.0
    %1316 = vmatpush2.msra.mxu0 0.0
    %1317 = vmatprep.subr.mxu0 0.0
    %1318 = vmatpush2.msra.mxu0 0.0
    %1319 = vmatprep.subr.mxu0 0.0
    %1320 = vmatpush2.msra.mxu0 0.0
    %1321 = vmatprep.subr.mxu0 0.0
    %1322 = vmatpush2.msra.mxu0 0.0
    %1323 = vmatprep.subr.mxu0 0.0
    %1324 = vmatpush2.msra.mxu0 0.0
    %1325 = vmatprep.subr.mxu0 0.0
    %1326 = vmatpush2.msra.mxu0 0.0
    %1327 = vmatprep.subr.mxu0 0.0
    %1328 = vmatpush2.msra.mxu0 0.0
    %1329 = vmatprep.subr.mxu0 0.0
    %1330 = vmatpush2.msra.mxu0 0.0
    %1331 = vmatprep.subr.mxu0 0.0
    %1332 = vmatpush2.msra.mxu0 0.0
    %1333 = vmatprep.subr.mxu0 0.0
    %1334 = vmatpush2.msra.mxu0 0.0
    %1335 = vmatprep.subr.mxu0 0.0
    %1336 = vmatpush2.msra.mxu0 0.0
    %1337 = vmatprep.mubr.f32.mxu0 0.0
    %v1338 = vand.u32 %v1017, 4294901760
    %v1339 = vsub.f32 %v1017, %v1338
    %v1340 = vand.u32 %v1339, 4294901760
    %1341 = vmatmul.mubr.f32.gmra.mxu0 %v1340
    %v1342 = vpop.f32.mrf.mxu0
    %v1343 = vadd.f32 %v1266, %v1342
    %v1344 = vpop.f32.mrf.mxu0
    %1345 = vdwg.mxu0
    %1346 = vmatprep.subr.mxu0 0.0
    %1347 = vmatpush1.msra.mxu0 0.0
    %1348 = vmatprep.subr.mxu0 0.0
    %1349 = vmatpush1.msra.mxu0 0.0
    %1350 = vmatprep.subr.mxu0 0.0
    %1351 = vmatpush1.msra.mxu0 0.0
    %1352 = vmatprep.subr.mxu0 0.0
    %1353 = vmatpush1.msra.mxu0 0.0
    %1354 = vmatprep.subr.mxu0 0.0
    %1355 = vmatpush1.msra.mxu0 0.0
    %1356 = vmatprep.subr.mxu0 0.0
    %1357 = vmatpush1.msra.mxu0 0.0
    %1358 = vmatprep.subr.mxu0 0.0
    %1359 = vmatpush1.msra.mxu0 0.0
    %1360 = vmatprep.subr.mxu0 0.0
    %1361 = vmatpush1.msra.mxu0 0.0
    %1362 = vmatprep.subr.mxu0 0.0
    %1363 = vmatpush1.msra.mxu0 0.0
    %1364 = vmatprep.subr.mxu0 0.0
    %1365 = vmatpush1.msra.mxu0 0.0
    %1366 = vmatprep.subr.mxu0 0.0
    %1367 = vmatpush1.msra.mxu0 0.0
    %1368 = vmatprep.subr.mxu0 0.0
    %1369 = vmatpush1.msra.mxu0 0.0
    %1370 = vmatprep.subr.mxu0 0.0
    %v1371 = vand.u32 %v16, 4294901760
    %v1372 = vsub.f32 %v16, %v1371
    %v1373 = vand.u32 %v1372, 4294901760
    %1374 = vmatpush1.msra.mxu0 %v1373
    %1375 = vmatprep.subr.mxu0 0.0
    %v1376 = vand.u32 %v15, 4294901760
    %v1377 = vsub.f32 %v15, %v1376
    %v1378 = vand.u32 %v1377, 4294901760
    %1379 = vmatpush1.msra.mxu0 %v1378
    %1380 = vmatprep.subr.mxu0 0.0
    %v1381 = vand.u32 %v14, 4294901760
    %v1382 = vsub.f32 %v14, %v1381
    %v1383 = vand.u32 %v1382, 4294901760
    %1384 = vmatpush1.msra.mxu0 %v1383
    %1385 = vmatprep.subr.mxu0 0.0
    %v1386 = vand.u32 %v13, 4294901760
    %v1387 = vsub.f32 %v13, %v1386
    %v1388 = vand.u32 %v1387, 4294901760
    %1389 = vmatpush1.msra.mxu0 %v1388
    %1390 = vmatprep.subr.mxu0 0.0
    %1391 = vmatpush2.msra.mxu0 0.0
    %1392 = vmatprep.subr.mxu0 0.0
    %1393 = vmatpush2.msra.mxu0 0.0
    %1394 = vmatprep.subr.mxu0 0.0
    %1395 = vmatpush2.msra.mxu0 0.0
    %1396 = vmatprep.subr.mxu0 0.0
    %1397 = vmatpush2.msra.mxu0 0.0
    %1398 = vmatprep.subr.mxu0 0.0
    %1399 = vmatpush2.msra.mxu0 0.0
    %1400 = vmatprep.subr.mxu0 0.0
    %1401 = vmatpush2.msra.mxu0 0.0
    %1402 = vmatprep.subr.mxu0 0.0
    %1403 = vmatpush2.msra.mxu0 0.0
    %1404 = vmatprep.subr.mxu0 0.0
    %1405 = vmatpush2.msra.mxu0 0.0
    %1406 = vmatprep.subr.mxu0 0.0
    %1407 = vmatpush2.msra.mxu0 0.0
    %1408 = vmatprep.subr.mxu0 0.0
    %1409 = vmatpush2.msra.mxu0 0.0
    %1410 = vmatprep.subr.mxu0 0.0
    %1411 = vmatpush2.msra.mxu0 0.0
    %1412 = vmatprep.subr.mxu0 0.0
    %1413 = vmatpush2.msra.mxu0 0.0
    %1414 = vmatprep.subr.mxu0 0.0
    %1415 = vmatpush2.msra.mxu0 0.0
    %1416 = vmatprep.subr.mxu0 0.0
    %1417 = vmatpush2.msra.mxu0 0.0
    %1418 = vmatprep.subr.mxu0 0.0
    %1419 = vmatpush2.msra.mxu0 0.0
    %1420 = vmatprep.subr.mxu0 0.0
    %1421 = vmatpush2.msra.mxu0 0.0
    %1422 = vmatprep.mubr.f32.mxu0 0.0
    %v1423 = vand.u32 %v1017, 4294901760
    %1424 = vmatmul.mubr.f32.gmra.mxu0 %v1423
    %v1425 = vpop.f32.mrf.mxu0
    %v1426 = vadd.f32 %v1343, %v1425
    %v1427 = vpop.f32.mrf.mxu0
    %1428 = vdwg.mxu0
    %1429 = vmatprep.subr.mxu0 0.0
    %1430 = vmatpush1.msra.mxu0 0.0
    %1431 = vmatprep.subr.mxu0 0.0
    %1432 = vmatpush1.msra.mxu0 0.0
    %1433 = vmatprep.subr.mxu0 0.0
    %1434 = vmatpush1.msra.mxu0 0.0
    %1435 = vmatprep.subr.mxu0 0.0
    %1436 = vmatpush1.msra.mxu0 0.0
    %1437 = vmatprep.subr.mxu0 0.0
    %1438 = vmatpush1.msra.mxu0 0.0
    %1439 = vmatprep.subr.mxu0 0.0
    %1440 = vmatpush1.msra.mxu0 0.0
    %1441 = vmatprep.subr.mxu0 0.0
    %1442 = vmatpush1.msra.mxu0 0.0
    %1443 = vmatprep.subr.mxu0 0.0
    %1444 = vmatpush1.msra.mxu0 0.0
    %1445 = vmatprep.subr.mxu0 0.0
    %1446 = vmatpush1.msra.mxu0 0.0
    %1447 = vmatprep.subr.mxu0 0.0
    %1448 = vmatpush1.msra.mxu0 0.0
    %1449 = vmatprep.subr.mxu0 0.0
    %1450 = vmatpush1.msra.mxu0 0.0
    %1451 = vmatprep.subr.mxu0 0.0
    %1452 = vmatpush1.msra.mxu0 0.0
    %1453 = vmatprep.subr.mxu0 0.0
    %v1454 = vand.u32 %v16, 4294901760
    %1455 = vmatpush1.msra.mxu0 %v1454
    %1456 = vmatprep.subr.mxu0 0.0
    %v1457 = vand.u32 %v15, 4294901760
    %1458 = vmatpush1.msra.mxu0 %v1457
    %1459 = vmatprep.subr.mxu0 0.0
    %v1460 = vand.u32 %v14, 4294901760
    %1461 = vmatpush1.msra.mxu0 %v1460
    %1462 = vmatprep.subr.mxu0 0.0
    %v1463 = vand.u32 %v13, 4294901760
    %1464 = vmatpush1.msra.mxu0 %v1463
    %1465 = vmatprep.subr.mxu0 0.0
    %1466 = vmatpush2.msra.mxu0 0.0
    %1467 = vmatprep.subr.mxu0 0.0
    %1468 = vmatpush2.msra.mxu0 0.0
    %1469 = vmatprep.subr.mxu0 0.0
    %1470 = vmatpush2.msra.mxu0 0.0
    %1471 = vmatprep.subr.mxu0 0.0
    %1472 = vmatpush2.msra.mxu0 0.0
    %1473 = vmatprep.subr.mxu0 0.0
    %1474 = vmatpush2.msra.mxu0 0.0
    %1475 = vmatprep.subr.mxu0 0.0
    %1476 = vmatpush2.msra.mxu0 0.0
    %1477 = vmatprep.subr.mxu0 0.0
    %1478 = vmatpush2.msra.mxu0 0.0
    %1479 = vmatprep.subr.mxu0 0.0
    %1480 = vmatpush2.msra.mxu0 0.0
    %1481 = vmatprep.subr.mxu0 0.0
    %1482 = vmatpush2.msra.mxu0 0.0
    %1483 = vmatprep.subr.mxu0 0.0
    %1484 = vmatpush2.msra.mxu0 0.0
    %1485 = vmatprep.subr.mxu0 0.0
    %1486 = vmatpush2.msra.mxu0 0.0
    %1487 = vmatprep.subr.mxu0 0.0
    %1488 = vmatpush2.msra.mxu0 0.0
    %1489 = vmatprep.subr.mxu0 0.0
    %1490 = vmatpush2.msra.mxu0 0.0
    %1491 = vmatprep.subr.mxu0 0.0
    %1492 = vmatpush2.msra.mxu0 0.0
    %1493 = vmatprep.subr.mxu0 0.0
    %1494 = vmatpush2.msra.mxu0 0.0
    %1495 = vmatprep.subr.mxu0 0.0
    %1496 = vmatpush2.msra.mxu0 0.0
    %1497 = vmatprep.mubr.f32.mxu0 0.0
    %v1498 = vand.u32 %v1017, 4294901760
    %1499 = vmatmul.mubr.f32.gmra.mxu0 %v1498
    %v1500 = vpop.f32.mrf.mxu0
    %v1501 = vadd.f32 %v1426, %v1500
    %v1502 = vpop.f32.mrf.mxu0
    %1503 = vdwg.mxu0
    %v1505 = vrot.slane %v1501, 6
    %v1507 = vadd.f32 %v516, %v1505
    %v1508 = vtanh.pop %v1507
    %v1510 = vrot.slane %v1508, 2
    %v1511 = vsel %vm525, %v1510, 0
    %1513 = vmatprep.subr.mxu0 0.0
    %1514 = vmatpush1.msra.mxu0 0.0
    %1515 = vmatprep.subr.mxu0 0.0
    %1516 = vmatpush1.msra.mxu0 0.0
    %1517 = vmatprep.subr.mxu0 0.0
    %1518 = vmatpush1.msra.mxu0 0.0
    %1519 = vmatprep.subr.mxu0 0.0
    %1520 = vmatpush1.msra.mxu0 0.0
    %1521 = vmatprep.subr.mxu0 0.0
    %1522 = vmatpush1.msra.mxu0 0.0
    %1523 = vmatprep.subr.mxu0 0.0
    %1524 = vmatpush1.msra.mxu0 0.0
    %1525 = vmatprep.subr.mxu0 0.0
    %1526 = vmatpush1.msra.mxu0 0.0
    %1527 = vmatprep.subr.mxu0 0.0
    %1528 = vmatpush1.msra.mxu0 0.0
    %1529 = vmatprep.subr.mxu0 0.0
    %1530 = vmatpush1.msra.mxu0 0.0
    %1531 = vmatprep.subr.mxu0 0.0
    %1532 = vmatpush1.msra.mxu0 0.0
    %1533 = vmatprep.subr.mxu0 0.0
    %1534 = vmatpush1.msra.mxu0 0.0
    %1535 = vmatprep.subr.mxu0 0.0
    %1536 = vmatpush1.msra.mxu0 0.0
    %1537 = vmatprep.subr.mxu0 0.0
    %v1538 = vand.u32 %v16, 4294901760
    %1539 = vmatpush1.msra.mxu0 %v1538
    %1540 = vmatprep.subr.mxu0 0.0
    %v1541 = vand.u32 %v15, 4294901760
    %1542 = vmatpush1.msra.mxu0 %v1541
    %1543 = vmatprep.subr.mxu0 0.0
    %v1544 = vand.u32 %v14, 4294901760
    %1545 = vmatpush1.msra.mxu0 %v1544
    %1546 = vmatprep.subr.mxu0 0.0
    %v1547 = vand.u32 %v13, 4294901760
    %1548 = vmatpush1.msra.mxu0 %v1547
    %1549 = vmatprep.subr.mxu0 0.0
    %1550 = vmatpush2.msra.mxu0 0.0
    %1551 = vmatprep.subr.mxu0 0.0
    %1552 = vmatpush2.msra.mxu0 0.0
    %1553 = vmatprep.subr.mxu0 0.0
    %1554 = vmatpush2.msra.mxu0 0.0
    %1555 = vmatprep.subr.mxu0 0.0
    %1556 = vmatpush2.msra.mxu0 0.0
    %1557 = vmatprep.subr.mxu0 0.0
    %1558 = vmatpush2.msra.mxu0 0.0
    %1559 = vmatprep.subr.mxu0 0.0
    %1560 = vmatpush2.msra.mxu0 0.0
    %1561 = vmatprep.subr.mxu0 0.0
    %1562 = vmatpush2.msra.mxu0 0.0
    %1563 = vmatprep.subr.mxu0 0.0
    %1564 = vmatpush2.msra.mxu0 0.0
    %1565 = vmatprep.subr.mxu0 0.0
    %1566 = vmatpush2.msra.mxu0 0.0
    %1567 = vmatprep.subr.mxu0 0.0
    %1568 = vmatpush2.msra.mxu0 0.0
    %1569 = vmatprep.subr.mxu0 0.0
    %1570 = vmatpush2.msra.mxu0 0.0
    %1571 = vmatprep.subr.mxu0 0.0
    %1572 = vmatpush2.msra.mxu0 0.0
    %1573 = vmatprep.subr.mxu0 0.0
    %1574 = vmatpush2.msra.mxu0 0.0
    %1575 = vmatprep.subr.mxu0 0.0
    %1576 = vmatpush2.msra.mxu0 0.0
    %1577 = vmatprep.subr.mxu0 0.0
    %1578 = vmatpush2.msra.mxu0 0.0
    %1579 = vmatprep.subr.mxu0 0.0
    %1580 = vmatpush2.msra.mxu0 0.0
    %1581 = vmatprep.mubr.f32.mxu0 0.0
    %v1582 = vand.u32 %v1511, 4294901760
    %v1583 = vsub.f32 %v1511, %v1582
    %v1584 = vand.u32 %v1583, 4294901760
    %v1585 = vsub.f32 %v1583, %v1584
    %v1586 = vand.u32 %v1585, 4294901760
    %1587 = vmatmul.mubr.f32.gmra.mxu0 %v1586
    %v1588 = vpop.f32.mrf.mxu0
    %v1589 = vadd.f32 0.0, %v1588
    %v1590 = vpop.f32.mrf.mxu0
    %1591 = vdwg.mxu0
    %1592 = vmatprep.subr.mxu0 0.0
    %1593 = vmatpush1.msra.mxu0 0.0
    %1594 = vmatprep.subr.mxu0 0.0
    %1595 = vmatpush1.msra.mxu0 0.0
    %1596 = vmatprep.subr.mxu0 0.0
    %1597 = vmatpush1.msra.mxu0 0.0
    %1598 = vmatprep.subr.mxu0 0.0
    %1599 = vmatpush1.msra.mxu0 0.0
    %1600 = vmatprep.subr.mxu0 0.0
    %1601 = vmatpush1.msra.mxu0 0.0
    %1602 = vmatprep.subr.mxu0 0.0
    %1603 = vmatpush1.msra.mxu0 0.0
    %1604 = vmatprep.subr.mxu0 0.0
    %1605 = vmatpush1.msra.mxu0 0.0
    %1606 = vmatprep.subr.mxu0 0.0
    %1607 = vmatpush1.msra.mxu0 0.0
    %1608 = vmatprep.subr.mxu0 0.0
    %1609 = vmatpush1.msra.mxu0 0.0
    %1610 = vmatprep.subr.mxu0 0.0
    %1611 = vmatpush1.msra.mxu0 0.0
    %1612 = vmatprep.subr.mxu0 0.0
    %1613 = vmatpush1.msra.mxu0 0.0
    %1614 = vmatprep.subr.mxu0 0.0
    %1615 = vmatpush1.msra.mxu0 0.0
    %1616 = vmatprep.subr.mxu0 0.0
    %v1617 = vand.u32 %v16, 4294901760
    %v1618 = vsub.f32 %v16, %v1617
    %v1619 = vand.u32 %v1618, 4294901760
    %v1620 = vsub.f32 %v1618, %v1619
    %v1621 = vand.u32 %v1620, 4294901760
    %1622 = vmatpush1.msra.mxu0 %v1621
    %1623 = vmatprep.subr.mxu0 0.0
    %v1624 = vand.u32 %v15, 4294901760
    %v1625 = vsub.f32 %v15, %v1624
    %v1626 = vand.u32 %v1625, 4294901760
    %v1627 = vsub.f32 %v1625, %v1626
    %v1628 = vand.u32 %v1627, 4294901760
    %1629 = vmatpush1.msra.mxu0 %v1628
    %1630 = vmatprep.subr.mxu0 0.0
    %v1631 = vand.u32 %v14, 4294901760
    %v1632 = vsub.f32 %v14, %v1631
    %v1633 = vand.u32 %v1632, 4294901760
    %v1634 = vsub.f32 %v1632, %v1633
    %v1635 = vand.u32 %v1634, 4294901760
    %1636 = vmatpush1.msra.mxu0 %v1635
    %1637 = vmatprep.subr.mxu0 0.0
    %v1638 = vand.u32 %v13, 4294901760
    %v1639 = vsub.f32 %v13, %v1638
    %v1640 = vand.u32 %v1639, 4294901760
    %v1641 = vsub.f32 %v1639, %v1640
    %v1642 = vand.u32 %v1641, 4294901760
    %1643 = vmatpush1.msra.mxu0 %v1642
    %1644 = vmatprep.subr.mxu0 0.0
    %1645 = vmatpush2.msra.mxu0 0.0
    %1646 = vmatprep.subr.mxu0 0.0
    %1647 = vmatpush2.msra.mxu0 0.0
    %1648 = vmatprep.subr.mxu0 0.0
    %1649 = vmatpush2.msra.mxu0 0.0
    %1650 = vmatprep.subr.mxu0 0.0
    %1651 = vmatpush2.msra.mxu0 0.0
    %1652 = vmatprep.subr.mxu0 0.0
    %1653 = vmatpush2.msra.mxu0 0.0
    %1654 = vmatprep.subr.mxu0 0.0
    %1655 = vmatpush2.msra.mxu0 0.0
    %1656 = vmatprep.subr.mxu0 0.0
    %1657 = vmatpush2.msra.mxu0 0.0
    %1658 = vmatprep.subr.mxu0 0.0
    %1659 = vmatpush2.msra.mxu0 0.0
    %1660 = vmatprep.subr.mxu0 0.0
    %1661 = vmatpush2.msra.mxu0 0.0
    %1662 = vmatprep.subr.mxu0 0.0
    %1663 = vmatpush2.msra.mxu0 0.0
    %1664 = vmatprep.subr.mxu0 0.0
    %1665 = vmatpush2.msra.mxu0 0.0
    %1666 = vmatprep.subr.mxu0 0.0
    %1667 = vmatpush2.msra.mxu0 0.0
    %1668 = vmatprep.subr.mxu0 0.0
    %1669 = vmatpush2.msra.mxu0 0.0
    %1670 = vmatprep.subr.mxu0 0.0
    %1671 = vmatpush2.msra.mxu0 0.0
    %1672 = vmatprep.subr.mxu0 0.0
    %1673 = vmatpush2.msra.mxu0 0.0
    %1674 = vmatprep.subr.mxu0 0.0
    %1675 = vmatpush2.msra.mxu0 0.0
    %1676 = vmatprep.mubr.f32.mxu0 0.0
    %v1677 = vand.u32 %v1511, 4294901760
    %1678 = vmatmul.mubr.f32.gmra.mxu0 %v1677
    %v1679 = vpop.f32.mrf.mxu0
    %v1680 = vadd.f32 %v1589, %v1679
    %v1681 = vpop.f32.mrf.mxu0
    %1682 = vdwg.mxu0
    %1683 = vmatprep.subr.mxu0 0.0
    %1684 = vmatpush1.msra.mxu0 0.0
    %1685 = vmatprep.subr.mxu0 0.0
    %1686 = vmatpush1.msra.mxu0 0.0
    %1687 = vmatprep.subr.mxu0 0.0
    %1688 = vmatpush1.msra.mxu0 0.0
    %1689 = vmatprep.subr.mxu0 0.0
    %1690 = vmatpush1.msra.mxu0 0.0
    %1691 = vmatprep.subr.mxu0 0.0
    %1692 = vmatpush1.msra.mxu0 0.0
    %1693 = vmatprep.subr.mxu0 0.0
    %1694 = vmatpush1.msra.mxu0 0.0
    %1695 = vmatprep.subr.mxu0 0.0
    %1696 = vmatpush1.msra.mxu0 0.0
    %1697 = vmatprep.subr.mxu0 0.0
    %1698 = vmatpush1.msra.mxu0 0.0
    %1699 = vmatprep.subr.mxu0 0.0
    %1700 = vmatpush1.msra.mxu0 0.0
    %1701 = vmatprep.subr.mxu0 0.0
    %1702 = vmatpush1.msra.mxu0 0.0
    %1703 = vmatprep.subr.mxu0 0.0
    %1704 = vmatpush1.msra.mxu0 0.0
    %1705 = vmatprep.subr.mxu0 0.0
    %1706 = vmatpush1.msra.mxu0 0.0
    %1707 = vmatprep.subr.mxu0 0.0
    %v1708 = vand.u32 %v16, 4294901760
    %v1709 = vsub.f32 %v16, %v1708
    %1710 = vmatpush1.msra.mxu0 %v1709
    %1711 = vmatprep.subr.mxu0 0.0
    %v1712 = vand.u32 %v15, 4294901760
    %v1713 = vsub.f32 %v15, %v1712
    %1714 = vmatpush1.msra.mxu0 %v1713
    %1715 = vmatprep.subr.mxu0 0.0
    %v1716 = vand.u32 %v14, 4294901760
    %v1717 = vsub.f32 %v14, %v1716
    %1718 = vmatpush1.msra.mxu0 %v1717
    %1719 = vmatprep.subr.mxu0 0.0
    %v1720 = vand.u32 %v13, 4294901760
    %v1721 = vsub.f32 %v13, %v1720
    %1722 = vmatpush1.msra.mxu0 %v1721
    %1723 = vmatprep.subr.mxu0 0.0
    %1724 = vmatpush2.msra.mxu0 0.0
    %1725 = vmatprep.subr.mxu0 0.0
    %1726 = vmatpush2.msra.mxu0 0.0
    %1727 = vmatprep.subr.mxu0 0.0
    %1728 = vmatpush2.msra.mxu0 0.0
    %1729 = vmatprep.subr.mxu0 0.0
    %1730 = vmatpush2.msra.mxu0 0.0
    %1731 = vmatprep.subr.mxu0 0.0
    %1732 = vmatpush2.msra.mxu0 0.0
    %1733 = vmatprep.subr.mxu0 0.0
    %1734 = vmatpush2.msra.mxu0 0.0
    %1735 = vmatprep.subr.mxu0 0.0
    %1736 = vmatpush2.msra.mxu0 0.0
    %1737 = vmatprep.subr.mxu0 0.0
    %1738 = vmatpush2.msra.mxu0 0.0
    %1739 = vmatprep.subr.mxu0 0.0
    %1740 = vmatpush2.msra.mxu0 0.0
    %1741 = vmatprep.subr.mxu0 0.0
    %1742 = vmatpush2.msra.mxu0 0.0
    %1743 = vmatprep.subr.mxu0 0.0
    %1744 = vmatpush2.msra.mxu0 0.0
    %1745 = vmatprep.subr.mxu0 0.0
    %1746 = vmatpush2.msra.mxu0 0.0
    %1747 = vmatprep.subr.mxu0 0.0
    %1748 = vmatpush2.msra.mxu0 0.0
    %1749 = vmatprep.subr.mxu0 0.0
    %1750 = vmatpush2.msra.mxu0 0.0
    %1751 = vmatprep.subr.mxu0 0.0
    %1752 = vmatpush2.msra.mxu0 0.0
    %1753 = vmatprep.subr.mxu0 0.0
    %1754 = vmatpush2.msra.mxu0 0.0
    %1755 = vmatprep.mubr.f32.mxu0 0.0
    %v1756 = vand.u32 %v1511, 4294901760
    %v1757 = vsub.f32 %v1511, %v1756
    %1758 = vmatmul.mubr.f32.gmra.mxu0 %v1757
    %v1759 = vpop.f32.mrf.mxu0
    %v1760 = vadd.f32 %v1680, %v1759
    %v1761 = vpop.f32.mrf.mxu0
    %1762 = vdwg.mxu0
    %1763 = vmatprep.subr.mxu0 0.0
    %1764 = vmatpush1.msra.mxu0 0.0
    %1765 = vmatprep.subr.mxu0 0.0
    %1766 = vmatpush1.msra.mxu0 0.0
    %1767 = vmatprep.subr.mxu0 0.0
    %1768 = vmatpush1.msra.mxu0 0.0
    %1769 = vmatprep.subr.mxu0 0.0
    %1770 = vmatpush1.msra.mxu0 0.0
    %1771 = vmatprep.subr.mxu0 0.0
    %1772 = vmatpush1.msra.mxu0 0.0
    %1773 = vmatprep.subr.mxu0 0.0
    %1774 = vmatpush1.msra.mxu0 0.0
    %1775 = vmatprep.subr.mxu0 0.0
    %1776 = vmatpush1.msra.mxu0 0.0
    %1777 = vmatprep.subr.mxu0 0.0
    %1778 = vmatpush1.msra.mxu0 0.0
    %1779 = vmatprep.subr.mxu0 0.0
    %1780 = vmatpush1.msra.mxu0 0.0
    %1781 = vmatprep.subr.mxu0 0.0
    %1782 = vmatpush1.msra.mxu0 0.0
    %1783 = vmatprep.subr.mxu0 0.0
    %1784 = vmatpush1.msra.mxu0 0.0
    %1785 = vmatprep.subr.mxu0 0.0
    %1786 = vmatpush1.msra.mxu0 0.0
    %1787 = vmatprep.subr.mxu0 0.0
    %v1788 = vand.u32 %v16, 4294901760
    %1789 = vmatpush1.msra.mxu0 %v1788
    %1790 = vmatprep.subr.mxu0 0.0
    %v1791 = vand.u32 %v15, 4294901760
    %1792 = vmatpush1.msra.mxu0 %v1791
    %1793 = vmatprep.subr.mxu0 0.0
    %v1794 = vand.u32 %v14, 4294901760
    %1795 = vmatpush1.msra.mxu0 %v1794
    %1796 = vmatprep.subr.mxu0 0.0
    %v1797 = vand.u32 %v13, 4294901760
    %1798 = vmatpush1.msra.mxu0 %v1797
    %1799 = vmatprep.subr.mxu0 0.0
    %1800 = vmatpush2.msra.mxu0 0.0
    %1801 = vmatprep.subr.mxu0 0.0
    %1802 = vmatpush2.msra.mxu0 0.0
    %1803 = vmatprep.subr.mxu0 0.0
    %1804 = vmatpush2.msra.mxu0 0.0
    %1805 = vmatprep.subr.mxu0 0.0
    %1806 = vmatpush2.msra.mxu0 0.0
    %1807 = vmatprep.subr.mxu0 0.0
    %1808 = vmatpush2.msra.mxu0 0.0
    %1809 = vmatprep.subr.mxu0 0.0
    %1810 = vmatpush2.msra.mxu0 0.0
    %1811 = vmatprep.subr.mxu0 0.0
    %1812 = vmatpush2.msra.mxu0 0.0
    %1813 = vmatprep.subr.mxu0 0.0
    %1814 = vmatpush2.msra.mxu0 0.0
    %1815 = vmatprep.subr.mxu0 0.0
    %1816 = vmatpush2.msra.mxu0 0.0
    %1817 = vmatprep.subr.mxu0 0.0
    %1818 = vmatpush2.msra.mxu0 0.0
    %1819 = vmatprep.subr.mxu0 0.0
    %1820 = vmatpush2.msra.mxu0 0.0
    %1821 = vmatprep.subr.mxu0 0.0
    %1822 = vmatpush2.msra.mxu0 0.0
    %1823 = vmatprep.subr.mxu0 0.0
    %1824 = vmatpush2.msra.mxu0 0.0
    %1825 = vmatprep.subr.mxu0 0.0
    %1826 = vmatpush2.msra.mxu0 0.0
    %1827 = vmatprep.subr.mxu0 0.0
    %1828 = vmatpush2.msra.mxu0 0.0
    %1829 = vmatprep.subr.mxu0 0.0
    %1830 = vmatpush2.msra.mxu0 0.0
    %1831 = vmatprep.mubr.f32.mxu0 0.0
    %v1832 = vand.u32 %v1511, 4294901760
    %v1833 = vsub.f32 %v1511, %v1832
    %v1834 = vand.u32 %v1833, 4294901760
    %1835 = vmatmul.mubr.f32.gmra.mxu0 %v1834
    %v1836 = vpop.f32.mrf.mxu0
    %v1837 = vadd.f32 %v1760, %v1836
    %v1838 = vpop.f32.mrf.mxu0
    %1839 = vdwg.mxu0
    %1840 = vmatprep.subr.mxu0 0.0
    %1841 = vmatpush1.msra.mxu0 0.0
    %1842 = vmatprep.subr.mxu0 0.0
    %1843 = vmatpush1.msra.mxu0 0.0
    %1844 = vmatprep.subr.mxu0 0.0
    %1845 = vmatpush1.msra.mxu0 0.0
    %1846 = vmatprep.subr.mxu0 0.0
    %1847 = vmatpush1.msra.mxu0 0.0
    %1848 = vmatprep.subr.mxu0 0.0
    %1849 = vmatpush1.msra.mxu0 0.0
    %1850 = vmatprep.subr.mxu0 0.0
    %1851 = vmatpush1.msra.mxu0 0.0
    %1852 = vmatprep.subr.mxu0 0.0
    %1853 = vmatpush1.msra.mxu0 0.0
    %1854 = vmatprep.subr.mxu0 0.0
    %1855 = vmatpush1.msra.mxu0 0.0
    %1856 = vmatprep.subr.mxu0 0.0
    %1857 = vmatpush1.msra.mxu0 0.0
    %1858 = vmatprep.subr.mxu0 0.0
    %1859 = vmatpush1.msra.mxu0 0.0
    %1860 = vmatprep.subr.mxu0 0.0
    %1861 = vmatpush1.msra.mxu0 0.0
    %1862 = vmatprep.subr.mxu0 0.0
    %1863 = vmatpush1.msra.mxu0 0.0
    %1864 = vmatprep.subr.mxu0 0.0
    %v1865 = vand.u32 %v16, 4294901760
    %v1866 = vsub.f32 %v16, %v1865
    %v1867 = vand.u32 %v1866, 4294901760
    %1868 = vmatpush1.msra.mxu0 %v1867
    %1869 = vmatprep.subr.mxu0 0.0
    %v1870 = vand.u32 %v15, 4294901760
    %v1871 = vsub.f32 %v15, %v1870
    %v1872 = vand.u32 %v1871, 4294901760
    %1873 = vmatpush1.msra.mxu0 %v1872
    %1874 = vmatprep.subr.mxu0 0.0
    %v1875 = vand.u32 %v14, 4294901760
    %v1876 = vsub.f32 %v14, %v1875
    %v1877 = vand.u32 %v1876, 4294901760
    %1878 = vmatpush1.msra.mxu0 %v1877
    %1879 = vmatprep.subr.mxu0 0.0
    %v1880 = vand.u32 %v13, 4294901760
    %v1881 = vsub.f32 %v13, %v1880
    %v1882 = vand.u32 %v1881, 4294901760
    %1883 = vmatpush1.msra.mxu0 %v1882
    %1884 = vmatprep.subr.mxu0 0.0
    %1885 = vmatpush2.msra.mxu0 0.0
    %1886 = vmatprep.subr.mxu0 0.0
    %1887 = vmatpush2.msra.mxu0 0.0
    %1888 = vmatprep.subr.mxu0 0.0
    %1889 = vmatpush2.msra.mxu0 0.0
    %1890 = vmatprep.subr.mxu0 0.0
    %1891 = vmatpush2.msra.mxu0 0.0
    %1892 = vmatprep.subr.mxu0 0.0
    %1893 = vmatpush2.msra.mxu0 0.0
    %1894 = vmatprep.subr.mxu0 0.0
    %1895 = vmatpush2.msra.mxu0 0.0
    %1896 = vmatprep.subr.mxu0 0.0
    %1897 = vmatpush2.msra.mxu0 0.0
    %1898 = vmatprep.subr.mxu0 0.0
    %1899 = vmatpush2.msra.mxu0 0.0
    %1900 = vmatprep.subr.mxu0 0.0
    %1901 = vmatpush2.msra.mxu0 0.0
    %1902 = vmatprep.subr.mxu0 0.0
    %1903 = vmatpush2.msra.mxu0 0.0
    %1904 = vmatprep.subr.mxu0 0.0
    %1905 = vmatpush2.msra.mxu0 0.0
    %1906 = vmatprep.subr.mxu0 0.0
    %1907 = vmatpush2.msra.mxu0 0.0
    %1908 = vmatprep.subr.mxu0 0.0
    %1909 = vmatpush2.msra.mxu0 0.0
    %1910 = vmatprep.subr.mxu0 0.0
    %1911 = vmatpush2.msra.mxu0 0.0
    %1912 = vmatprep.subr.mxu0 0.0
    %1913 = vmatpush2.msra.mxu0 0.0
    %1914 = vmatprep.subr.mxu0 0.0
    %1915 = vmatpush2.msra.mxu0 0.0
    %1916 = vmatprep.mubr.f32.mxu0 0.0
    %v1917 = vand.u32 %v1511, 4294901760
    %1918 = vmatmul.mubr.f32.gmra.mxu0 %v1917
    %v1919 = vpop.f32.mrf.mxu0
    %v1920 = vadd.f32 %v1837, %v1919
    %v1921 = vpop.f32.mrf.mxu0
    %1922 = vdwg.mxu0
    %1923 = vmatprep.subr.mxu0 0.0
    %1924 = vmatpush1.msra.mxu0 0.0
    %1925 = vmatprep.subr.mxu0 0.0
    %1926 = vmatpush1.msra.mxu0 0.0
    %1927 = vmatprep.subr.mxu0 0.0
    %1928 = vmatpush1.msra.mxu0 0.0
    %1929 = vmatprep.subr.mxu0 0.0
    %1930 = vmatpush1.msra.mxu0 0.0
    %1931 = vmatprep.subr.mxu0 0.0
    %1932 = vmatpush1.msra.mxu0 0.0
    %1933 = vmatprep.subr.mxu0 0.0
    %1934 = vmatpush1.msra.mxu0 0.0
    %1935 = vmatprep.subr.mxu0 0.0
    %1936 = vmatpush1.msra.mxu0 0.0
    %1937 = vmatprep.subr.mxu0 0.0
    %1938 = vmatpush1.msra.mxu0 0.0
    %1939 = vmatprep.subr.mxu0 0.0
    %1940 = vmatpush1.msra.mxu0 0.0
    %1941 = vmatprep.subr.mxu0 0.0
    %1942 = vmatpush1.msra.mxu0 0.0
    %1943 = vmatprep.subr.mxu0 0.0
    %1944 = vmatpush1.msra.mxu0 0.0
    %1945 = vmatprep.subr.mxu0 0.0
    %1946 = vmatpush1.msra.mxu0 0.0
    %1947 = vmatprep.subr.mxu0 0.0
    %v1948 = vand.u32 %v16, 4294901760
    %1949 = vmatpush1.msra.mxu0 %v1948
    %1950 = vmatprep.subr.mxu0 0.0
    %v1951 = vand.u32 %v15, 4294901760
    %1952 = vmatpush1.msra.mxu0 %v1951
    %1953 = vmatprep.subr.mxu0 0.0
    %v1954 = vand.u32 %v14, 4294901760
    %1955 = vmatpush1.msra.mxu0 %v1954
    %1956 = vmatprep.subr.mxu0 0.0
    %v1957 = vand.u32 %v13, 4294901760
    %1958 = vmatpush1.msra.mxu0 %v1957
    %1959 = vmatprep.subr.mxu0 0.0
    %1960 = vmatpush2.msra.mxu0 0.0
    %1961 = vmatprep.subr.mxu0 0.0
    %1962 = vmatpush2.msra.mxu0 0.0
    %1963 = vmatprep.subr.mxu0 0.0
    %1964 = vmatpush2.msra.mxu0 0.0
    %1965 = vmatprep.subr.mxu0 0.0
    %1966 = vmatpush2.msra.mxu0 0.0
    %1967 = vmatprep.subr.mxu0 0.0
    %1968 = vmatpush2.msra.mxu0 0.0
    %1969 = vmatprep.subr.mxu0 0.0
    %1970 = vmatpush2.msra.mxu0 0.0
    %1971 = vmatprep.subr.mxu0 0.0
    %1972 = vmatpush2.msra.mxu0 0.0
    %1973 = vmatprep.subr.mxu0 0.0
    %1974 = vmatpush2.msra.mxu0 0.0
    %1975 = vmatprep.subr.mxu0 0.0
    %1976 = vmatpush2.msra.mxu0 0.0
    %1977 = vmatprep.subr.mxu0 0.0
    %1978 = vmatpush2.msra.mxu0 0.0
    %1979 = vmatprep.subr.mxu0 0.0
    %1980 = vmatpush2.msra.mxu0 0.0
    %1981 = vmatprep.subr.mxu0 0.0
    %1982 = vmatpush2.msra.mxu0 0.0
    %1983 = vmatprep.subr.mxu0 0.0
    %1984 = vmatpush2.msra.mxu0 0.0
    %1985 = vmatprep.subr.mxu0 0.0
    %1986 = vmatpush2.msra.mxu0 0.0
    %1987 = vmatprep.subr.mxu0 0.0
    %1988 = vmatpush2.msra.mxu0 0.0
    %1989 = vmatprep.subr.mxu0 0.0
    %1990 = vmatpush2.msra.mxu0 0.0
    %1991 = vmatprep.mubr.f32.mxu0 0.0
    %v1992 = vand.u32 %v1511, 4294901760
    %1993 = vmatmul.mubr.f32.gmra.mxu0 %v1992
    %v1994 = vpop.f32.mrf.mxu0
    %v1995 = vadd.f32 %v1920, %v1994
    %v1996 = vpop.f32.mrf.mxu0
    %1997 = vdwg.mxu0
    %v1999 = vrot.slane %v1995, 4
    %v2001 = vadd.f32 %v516, %v1999
    %v2002 = vtanh.pop %v2001
    %v2004 = vrot.slane %v2002, 4
    %v2005 = vsel %vm525, %v2004, 0
    %2007 = vmatprep.subr.mxu0 0.0
    %2008 = vmatpush1.msra.mxu0 0.0
    %2009 = vmatprep.subr.mxu0 0.0
    %2010 = vmatpush1.msra.mxu0 0.0
    %2011 = vmatprep.subr.mxu0 0.0
    %2012 = vmatpush1.msra.mxu0 0.0
    %2013 = vmatprep.subr.mxu0 0.0
    %2014 = vmatpush1.msra.mxu0 0.0
    %2015 = vmatprep.subr.mxu0 0.0
    %2016 = vmatpush1.msra.mxu0 0.0
    %2017 = vmatprep.subr.mxu0 0.0
    %2018 = vmatpush1.msra.mxu0 0.0
    %2019 = vmatprep.subr.mxu0 0.0
    %2020 = vmatpush1.msra.mxu0 0.0
    %2021 = vmatprep.subr.mxu0 0.0
    %2022 = vmatpush1.msra.mxu0 0.0
    %2023 = vmatprep.subr.mxu0 0.0
    %2024 = vmatpush1.msra.mxu0 0.0
    %2025 = vmatprep.subr.mxu0 0.0
    %2026 = vmatpush1.msra.mxu0 0.0
    %2027 = vmatprep.subr.mxu0 0.0
    %2028 = vmatpush1.msra.mxu0 0.0
    %2029 = vmatprep.subr.mxu0 0.0
    %2030 = vmatpush1.msra.mxu0 0.0
    %2031 = vmatprep.subr.mxu0 0.0
    %v2032 = vand.u32 %v16, 4294901760
    %2033 = vmatpush1.msra.mxu0 %v2032
    %2034 = vmatprep.subr.mxu0 0.0
    %v2035 = vand.u32 %v15, 4294901760
    %2036 = vmatpush1.msra.mxu0 %v2035
    %2037 = vmatprep.subr.mxu0 0.0
    %v2038 = vand.u32 %v14, 4294901760
    %2039 = vmatpush1.msra.mxu0 %v2038
    %2040 = vmatprep.subr.mxu0 0.0
    %v2041 = vand.u32 %v13, 4294901760
    %2042 = vmatpush1.msra.mxu0 %v2041
    %2043 = vmatprep.subr.mxu0 0.0
    %2044 = vmatpush2.msra.mxu0 0.0
    %2045 = vmatprep.subr.mxu0 0.0
    %2046 = vmatpush2.msra.mxu0 0.0
    %2047 = vmatprep.subr.mxu0 0.0
    %2048 = vmatpush2.msra.mxu0 0.0
    %2049 = vmatprep.subr.mxu0 0.0
    %2050 = vmatpush2.msra.mxu0 0.0
    %2051 = vmatprep.subr.mxu0 0.0
    %2052 = vmatpush2.msra.mxu0 0.0
    %2053 = vmatprep.subr.mxu0 0.0
    %2054 = vmatpush2.msra.mxu0 0.0
    %2055 = vmatprep.subr.mxu0 0.0
    %2056 = vmatpush2.msra.mxu0 0.0
    %2057 = vmatprep.subr.mxu0 0.0
    %2058 = vmatpush2.msra.mxu0 0.0
    %2059 = vmatprep.subr.mxu0 0.0
    %2060 = vmatpush2.msra.mxu0 0.0
    %2061 = vmatprep.subr.mxu0 0.0
    %2062 = vmatpush2.msra.mxu0 0.0
    %2063 = vmatprep.subr.mxu0 0.0
    %2064 = vmatpush2.msra.mxu0 0.0
    %2065 = vmatprep.subr.mxu0 0.0
    %2066 = vmatpush2.msra.mxu0 0.0
    %2067 = vmatprep.subr.mxu0 0.0
    %2068 = vmatpush2.msra.mxu0 0.0
    %2069 = vmatprep.subr.mxu0 0.0
    %2070 = vmatpush2.msra.mxu0 0.0
    %2071 = vmatprep.subr.mxu0 0.0
    %2072 = vmatpush2.msra.mxu0 0.0
    %2073 = vmatprep.subr.mxu0 0.0
    %2074 = vmatpush2.msra.mxu0 0.0
    %2075 = vmatprep.mubr.f32.mxu0 0.0
    %v2076 = vand.u32 %v2005, 4294901760
    %v2077 = vsub.f32 %v2005, %v2076
    %v2078 = vand.u32 %v2077, 4294901760
    %v2079 = vsub.f32 %v2077, %v2078
    %v2080 = vand.u32 %v2079, 4294901760
    %2081 = vmatmul.mubr.f32.gmra.mxu0 %v2080
    %v2082 = vpop.f32.mrf.mxu0
    %v2083 = vadd.f32 0.0, %v2082
    %v2084 = vpop.f32.mrf.mxu0
    %2085 = vdwg.mxu0
    %2086 = vmatprep.subr.mxu0 0.0
    %2087 = vmatpush1.msra.mxu0 0.0
    %2088 = vmatprep.subr.mxu0 0.0
    %2089 = vmatpush1.msra.mxu0 0.0
    %2090 = vmatprep.subr.mxu0 0.0
    %2091 = vmatpush1.msra.mxu0 0.0
    %2092 = vmatprep.subr.mxu0 0.0
    %2093 = vmatpush1.msra.mxu0 0.0
    %2094 = vmatprep.subr.mxu0 0.0
    %2095 = vmatpush1.msra.mxu0 0.0
    %2096 = vmatprep.subr.mxu0 0.0
    %2097 = vmatpush1.msra.mxu0 0.0
    %2098 = vmatprep.subr.mxu0 0.0
    %2099 = vmatpush1.msra.mxu0 0.0
    %2100 = vmatprep.subr.mxu0 0.0
    %2101 = vmatpush1.msra.mxu0 0.0
    %2102 = vmatprep.subr.mxu0 0.0
    %2103 = vmatpush1.msra.mxu0 0.0
    %2104 = vmatprep.subr.mxu0 0.0
    %2105 = vmatpush1.msra.mxu0 0.0
    %2106 = vmatprep.subr.mxu0 0.0
    %2107 = vmatpush1.msra.mxu0 0.0
    %2108 = vmatprep.subr.mxu0 0.0
    %2109 = vmatpush1.msra.mxu0 0.0
    %2110 = vmatprep.subr.mxu0 0.0
    %v2111 = vand.u32 %v16, 4294901760
    %v2112 = vsub.f32 %v16, %v2111
    %v2113 = vand.u32 %v2112, 4294901760
    %v2114 = vsub.f32 %v2112, %v2113
    %v2115 = vand.u32 %v2114, 4294901760
    %2116 = vmatpush1.msra.mxu0 %v2115
    %2117 = vmatprep.subr.mxu0 0.0
    %v2118 = vand.u32 %v15, 4294901760
    %v2119 = vsub.f32 %v15, %v2118
    %v2120 = vand.u32 %v2119, 4294901760
    %v2121 = vsub.f32 %v2119, %v2120
    %v2122 = vand.u32 %v2121, 4294901760
    %2123 = vmatpush1.msra.mxu0 %v2122
    %2124 = vmatprep.subr.mxu0 0.0
    %v2125 = vand.u32 %v14, 4294901760
    %v2126 = vsub.f32 %v14, %v2125
    %v2127 = vand.u32 %v2126, 4294901760
    %v2128 = vsub.f32 %v2126, %v2127
    %v2129 = vand.u32 %v2128, 4294901760
    %2130 = vmatpush1.msra.mxu0 %v2129
    %2131 = vmatprep.subr.mxu0 0.0
    %v2132 = vand.u32 %v13, 4294901760
    %v2133 = vsub.f32 %v13, %v2132
    %v2134 = vand.u32 %v2133, 4294901760
    %v2135 = vsub.f32 %v2133, %v2134
    %v2136 = vand.u32 %v2135, 4294901760
    %2137 = vmatpush1.msra.mxu0 %v2136
    %2138 = vmatprep.subr.mxu0 0.0
    %2139 = vmatpush2.msra.mxu0 0.0
    %2140 = vmatprep.subr.mxu0 0.0
    %2141 = vmatpush2.msra.mxu0 0.0
    %2142 = vmatprep.subr.mxu0 0.0
    %2143 = vmatpush2.msra.mxu0 0.0
    %2144 = vmatprep.subr.mxu0 0.0
    %2145 = vmatpush2.msra.mxu0 0.0
    %2146 = vmatprep.subr.mxu0 0.0
    %2147 = vmatpush2.msra.mxu0 0.0
    %2148 = vmatprep.subr.mxu0 0.0
    %2149 = vmatpush2.msra.mxu0 0.0
    %2150 = vmatprep.subr.mxu0 0.0
    %2151 = vmatpush2.msra.mxu0 0.0
    %2152 = vmatprep.subr.mxu0 0.0
    %2153 = vmatpush2.msra.mxu0 0.0
    %2154 = vmatprep.subr.mxu0 0.0
    %2155 = vmatpush2.msra.mxu0 0.0
    %2156 = vmatprep.subr.mxu0 0.0
    %2157 = vmatpush2.msra.mxu0 0.0
    %2158 = vmatprep.subr.mxu0 0.0
    %2159 = vmatpush2.msra.mxu0 0.0
    %2160 = vmatprep.subr.mxu0 0.0
    %2161 = vmatpush2.msra.mxu0 0.0
    %2162 = vmatprep.subr.mxu0 0.0
    %2163 = vmatpush2.msra.mxu0 0.0
    %2164 = vmatprep.subr.mxu0 0.0
    %2165 = vmatpush2.msra.mxu0 0.0
    %2166 = vmatprep.subr.mxu0 0.0
    %2167 = vmatpush2.msra.mxu0 0.0
    %2168 = vmatprep.subr.mxu0 0.0
    %2169 = vmatpush2.msra.mxu0 0.0
    %2170 = vmatprep.mubr.f32.mxu0 0.0
    %v2171 = vand.u32 %v2005, 4294901760
    %2172 = vmatmul.mubr.f32.gmra.mxu0 %v2171
    %v2173 = vpop.f32.mrf.mxu0
    %v2174 = vadd.f32 %v2083, %v2173
    %v2175 = vpop.f32.mrf.mxu0
    %2176 = vdwg.mxu0
    %2177 = vmatprep.subr.mxu0 0.0
    %2178 = vmatpush1.msra.mxu0 0.0
    %2179 = vmatprep.subr.mxu0 0.0
    %2180 = vmatpush1.msra.mxu0 0.0
    %2181 = vmatprep.subr.mxu0 0.0
    %2182 = vmatpush1.msra.mxu0 0.0
    %2183 = vmatprep.subr.mxu0 0.0
    %2184 = vmatpush1.msra.mxu0 0.0
    %2185 = vmatprep.subr.mxu0 0.0
    %2186 = vmatpush1.msra.mxu0 0.0
    %2187 = vmatprep.subr.mxu0 0.0
    %2188 = vmatpush1.msra.mxu0 0.0
    %2189 = vmatprep.subr.mxu0 0.0
    %2190 = vmatpush1.msra.mxu0 0.0
    %2191 = vmatprep.subr.mxu0 0.0
    %2192 = vmatpush1.msra.mxu0 0.0
    %2193 = vmatprep.subr.mxu0 0.0
    %2194 = vmatpush1.msra.mxu0 0.0
    %2195 = vmatprep.subr.mxu0 0.0
    %2196 = vmatpush1.msra.mxu0 0.0
    %2197 = vmatprep.subr.mxu0 0.0
    %2198 = vmatpush1.msra.mxu0 0.0
    %2199 = vmatprep.subr.mxu0 0.0
    %2200 = vmatpush1.msra.mxu0 0.0
    %2201 = vmatprep.subr.mxu0 0.0
    %v2202 = vand.u32 %v16, 4294901760
    %v2203 = vsub.f32 %v16, %v2202
    %2204 = vmatpush1.msra.mxu0 %v2203
    %2205 = vmatprep.subr.mxu0 0.0
    %v2206 = vand.u32 %v15, 4294901760
    %v2207 = vsub.f32 %v15, %v2206
    %2208 = vmatpush1.msra.mxu0 %v2207
    %2209 = vmatprep.subr.mxu0 0.0
    %v2210 = vand.u32 %v14, 4294901760
    %v2211 = vsub.f32 %v14, %v2210
    %2212 = vmatpush1.msra.mxu0 %v2211
    %2213 = vmatprep.subr.mxu0 0.0
    %v2214 = vand.u32 %v13, 4294901760
    %v2215 = vsub.f32 %v13, %v2214
    %2216 = vmatpush1.msra.mxu0 %v2215
    %2217 = vmatprep.subr.mxu0 0.0
    %2218 = vmatpush2.msra.mxu0 0.0
    %2219 = vmatprep.subr.mxu0 0.0
    %2220 = vmatpush2.msra.mxu0 0.0
    %2221 = vmatprep.subr.mxu0 0.0
    %2222 = vmatpush2.msra.mxu0 0.0
    %2223 = vmatprep.subr.mxu0 0.0
    %2224 = vmatpush2.msra.mxu0 0.0
    %2225 = vmatprep.subr.mxu0 0.0
    %2226 = vmatpush2.msra.mxu0 0.0
    %2227 = vmatprep.subr.mxu0 0.0
    %2228 = vmatpush2.msra.mxu0 0.0
    %2229 = vmatprep.subr.mxu0 0.0
    %2230 = vmatpush2.msra.mxu0 0.0
    %2231 = vmatprep.subr.mxu0 0.0
    %2232 = vmatpush2.msra.mxu0 0.0
    %2233 = vmatprep.subr.mxu0 0.0
    %2234 = vmatpush2.msra.mxu0 0.0
    %2235 = vmatprep.subr.mxu0 0.0
    %2236 = vmatpush2.msra.mxu0 0.0
    %2237 = vmatprep.subr.mxu0 0.0
    %2238 = vmatpush2.msra.mxu0 0.0
    %2239 = vmatprep.subr.mxu0 0.0
    %2240 = vmatpush2.msra.mxu0 0.0
    %2241 = vmatprep.subr.mxu0 0.0
    %2242 = vmatpush2.msra.mxu0 0.0
    %2243 = vmatprep.subr.mxu0 0.0
    %2244 = vmatpush2.msra.mxu0 0.0
    %2245 = vmatprep.subr.mxu0 0.0
    %2246 = vmatpush2.msra.mxu0 0.0
    %2247 = vmatprep.subr.mxu0 0.0
    %2248 = vmatpush2.msra.mxu0 0.0
    %2249 = vmatprep.mubr.f32.mxu0 0.0
    %v2250 = vand.u32 %v2005, 4294901760
    %v2251 = vsub.f32 %v2005, %v2250
    %2252 = vmatmul.mubr.f32.gmra.mxu0 %v2251
    %v2253 = vpop.f32.mrf.mxu0
    %v2254 = vadd.f32 %v2174, %v2253
    %v2255 = vpop.f32.mrf.mxu0
    %2256 = vdwg.mxu0
    %2257 = vmatprep.subr.mxu0 0.0
    %2258 = vmatpush1.msra.mxu0 0.0
    %2259 = vmatprep.subr.mxu0 0.0
    %2260 = vmatpush1.msra.mxu0 0.0
    %2261 = vmatprep.subr.mxu0 0.0
    %2262 = vmatpush1.msra.mxu0 0.0
    %2263 = vmatprep.subr.mxu0 0.0
    %2264 = vmatpush1.msra.mxu0 0.0
    %2265 = vmatprep.subr.mxu0 0.0
    %2266 = vmatpush1.msra.mxu0 0.0
    %2267 = vmatprep.subr.mxu0 0.0
    %2268 = vmatpush1.msra.mxu0 0.0
    %2269 = vmatprep.subr.mxu0 0.0
    %2270 = vmatpush1.msra.mxu0 0.0
    %2271 = vmatprep.subr.mxu0 0.0
    %2272 = vmatpush1.msra.mxu0 0.0
    %2273 = vmatprep.subr.mxu0 0.0
    %2274 = vmatpush1.msra.mxu0 0.0
    %2275 = vmatprep.subr.mxu0 0.0
    %2276 = vmatpush1.msra.mxu0 0.0
    %2277 = vmatprep.subr.mxu0 0.0
    %2278 = vmatpush1.msra.mxu0 0.0
    %2279 = vmatprep.subr.mxu0 0.0
    %2280 = vmatpush1.msra.mxu0 0.0
    %2281 = vmatprep.subr.mxu0 0.0
    %v2282 = vand.u32 %v16, 4294901760
    %2283 = vmatpush1.msra.mxu0 %v2282
    %2284 = vmatprep.subr.mxu0 0.0
    %v2285 = vand.u32 %v15, 4294901760
    %2286 = vmatpush1.msra.mxu0 %v2285
    %2287 = vmatprep.subr.mxu0 0.0
    %v2288 = vand.u32 %v14, 4294901760
    %2289 = vmatpush1.msra.mxu0 %v2288
    %2290 = vmatprep.subr.mxu0 0.0
    %v2291 = vand.u32 %v13, 4294901760
    %2292 = vmatpush1.msra.mxu0 %v2291
    %2293 = vmatprep.subr.mxu0 0.0
    %2294 = vmatpush2.msra.mxu0 0.0
    %2295 = vmatprep.subr.mxu0 0.0
    %2296 = vmatpush2.msra.mxu0 0.0
    %2297 = vmatprep.subr.mxu0 0.0
    %2298 = vmatpush2.msra.mxu0 0.0
    %2299 = vmatprep.subr.mxu0 0.0
    %2300 = vmatpush2.msra.mxu0 0.0
    %2301 = vmatprep.subr.mxu0 0.0
    %2302 = vmatpush2.msra.mxu0 0.0
    %2303 = vmatprep.subr.mxu0 0.0
    %2304 = vmatpush2.msra.mxu0 0.0
    %2305 = vmatprep.subr.mxu0 0.0
    %2306 = vmatpush2.msra.mxu0 0.0
    %2307 = vmatprep.subr.mxu0 0.0
    %2308 = vmatpush2.msra.mxu0 0.0
    %2309 = vmatprep.subr.mxu0 0.0
    %2310 = vmatpush2.msra.mxu0 0.0
    %2311 = vmatprep.subr.mxu0 0.0
    %2312 = vmatpush2.msra.mxu0 0.0
    %2313 = vmatprep.subr.mxu0 0.0
    %2314 = vmatpush2.msra.mxu0 0.0
    %2315 = vmatprep.subr.mxu0 0.0
    %2316 = vmatpush2.msra.mxu0 0.0
    %2317 = vmatprep.subr.mxu0 0.0
    %2318 = vmatpush2.msra.mxu0 0.0
    %2319 = vmatprep.subr.mxu0 0.0
    %2320 = vmatpush2.msra.mxu0 0.0
    %2321 = vmatprep.subr.mxu0 0.0
    %2322 = vmatpush2.msra.mxu0 0.0
    %2323 = vmatprep.subr.mxu0 0.0
    %2324 = vmatpush2.msra.mxu0 0.0
    %2325 = vmatprep.mubr.f32.mxu0 0.0
    %v2326 = vand.u32 %v2005, 4294901760
    %v2327 = vsub.f32 %v2005, %v2326
    %v2328 = vand.u32 %v2327, 4294901760
    %2329 = vmatmul.mubr.f32.gmra.mxu0 %v2328
    %v2330 = vpop.f32.mrf.mxu0
    %v2331 = vadd.f32 %v2254, %v2330
    %v2332 = vpop.f32.mrf.mxu0
    %2333 = vdwg.mxu0
    %2334 = vmatprep.subr.mxu0 0.0
    %2335 = vmatpush1.msra.mxu0 0.0
    %2336 = vmatprep.subr.mxu0 0.0
    %2337 = vmatpush1.msra.mxu0 0.0
    %2338 = vmatprep.subr.mxu0 0.0
    %2339 = vmatpush1.msra.mxu0 0.0
    %2340 = vmatprep.subr.mxu0 0.0
    %2341 = vmatpush1.msra.mxu0 0.0
    %2342 = vmatprep.subr.mxu0 0.0
    %2343 = vmatpush1.msra.mxu0 0.0
    %2344 = vmatprep.subr.mxu0 0.0
    %2345 = vmatpush1.msra.mxu0 0.0
    %2346 = vmatprep.subr.mxu0 0.0
    %2347 = vmatpush1.msra.mxu0 0.0
    %2348 = vmatprep.subr.mxu0 0.0
    %2349 = vmatpush1.msra.mxu0 0.0
    %2350 = vmatprep.subr.mxu0 0.0
    %2351 = vmatpush1.msra.mxu0 0.0
    %2352 = vmatprep.subr.mxu0 0.0
    %2353 = vmatpush1.msra.mxu0 0.0
    %2354 = vmatprep.subr.mxu0 0.0
    %2355 = vmatpush1.msra.mxu0 0.0
    %2356 = vmatprep.subr.mxu0 0.0
    %2357 = vmatpush1.msra.mxu0 0.0
    %2358 = vmatprep.subr.mxu0 0.0
    %v2359 = vand.u32 %v16, 4294901760
    %v2360 = vsub.f32 %v16, %v2359
    %v2361 = vand.u32 %v2360, 4294901760
    %2362 = vmatpush1.msra.mxu0 %v2361
    %2363 = vmatprep.subr.mxu0 0.0
    %v2364 = vand.u32 %v15, 4294901760
    %v2365 = vsub.f32 %v15, %v2364
    %v2366 = vand.u32 %v2365, 4294901760
    %2367 = vmatpush1.msra.mxu0 %v2366
    %2368 = vmatprep.subr.mxu0 0.0
    %v2369 = vand.u32 %v14, 4294901760
    %v2370 = vsub.f32 %v14, %v2369
    %v2371 = vand.u32 %v2370, 4294901760
    %2372 = vmatpush1.msra.mxu0 %v2371
    %2373 = vmatprep.subr.mxu0 0.0
    %v2374 = vand.u32 %v13, 4294901760
    %v2375 = vsub.f32 %v13, %v2374
    %v2376 = vand.u32 %v2375, 4294901760
    %2377 = vmatpush1.msra.mxu0 %v2376
    %2378 = vmatprep.subr.mxu0 0.0
    %2379 = vmatpush2.msra.mxu0 0.0
    %2380 = vmatprep.subr.mxu0 0.0
    %2381 = vmatpush2.msra.mxu0 0.0
    %2382 = vmatprep.subr.mxu0 0.0
    %2383 = vmatpush2.msra.mxu0 0.0
    %2384 = vmatprep.subr.mxu0 0.0
    %2385 = vmatpush2.msra.mxu0 0.0
    %2386 = vmatprep.subr.mxu0 0.0
    %2387 = vmatpush2.msra.mxu0 0.0
    %2388 = vmatprep.subr.mxu0 0.0
    %2389 = vmatpush2.msra.mxu0 0.0
    %2390 = vmatprep.subr.mxu0 0.0
    %2391 = vmatpush2.msra.mxu0 0.0
    %2392 = vmatprep.subr.mxu0 0.0
    %2393 = vmatpush2.msra.mxu0 0.0
    %2394 = vmatprep.subr.mxu0 0.0
    %2395 = vmatpush2.msra.mxu0 0.0
    %2396 = vmatprep.subr.mxu0 0.0
    %2397 = vmatpush2.msra.mxu0 0.0
    %2398 = vmatprep.subr.mxu0 0.0
    %2399 = vmatpush2.msra.mxu0 0.0
    %2400 = vmatprep.subr.mxu0 0.0
    %2401 = vmatpush2.msra.mxu0 0.0
    %2402 = vmatprep.subr.mxu0 0.0
    %2403 = vmatpush2.msra.mxu0 0.0
    %2404 = vmatprep.subr.mxu0 0.0
    %2405 = vmatpush2.msra.mxu0 0.0
    %2406 = vmatprep.subr.mxu0 0.0
    %2407 = vmatpush2.msra.mxu0 0.0
    %2408 = vmatprep.subr.mxu0 0.0
    %2409 = vmatpush2.msra.mxu0 0.0
    %2410 = vmatprep.mubr.f32.mxu0 0.0
    %v2411 = vand.u32 %v2005, 4294901760
    %2412 = vmatmul.mubr.f32.gmra.mxu0 %v2411
    %v2413 = vpop.f32.mrf.mxu0
    %v2414 = vadd.f32 %v2331, %v2413
    %v2415 = vpop.f32.mrf.mxu0
    %2416 = vdwg.mxu0
    %2417 = vmatprep.subr.mxu0 0.0
    %2418 = vmatpush1.msra.mxu0 0.0
    %2419 = vmatprep.subr.mxu0 0.0
    %2420 = vmatpush1.msra.mxu0 0.0
    %2421 = vmatprep.subr.mxu0 0.0
    %2422 = vmatpush1.msra.mxu0 0.0
    %2423 = vmatprep.subr.mxu0 0.0
    %2424 = vmatpush1.msra.mxu0 0.0
    %2425 = vmatprep.subr.mxu0 0.0
    %2426 = vmatpush1.msra.mxu0 0.0
    %2427 = vmatprep.subr.mxu0 0.0
    %2428 = vmatpush1.msra.mxu0 0.0
    %2429 = vmatprep.subr.mxu0 0.0
    %2430 = vmatpush1.msra.mxu0 0.0
    %2431 = vmatprep.subr.mxu0 0.0
    %2432 = vmatpush1.msra.mxu0 0.0
    %2433 = vmatprep.subr.mxu0 0.0
    %2434 = vmatpush1.msra.mxu0 0.0
    %2435 = vmatprep.subr.mxu0 0.0
    %2436 = vmatpush1.msra.mxu0 0.0
    %2437 = vmatprep.subr.mxu0 0.0
    %2438 = vmatpush1.msra.mxu0 0.0
    %2439 = vmatprep.subr.mxu0 0.0
    %2440 = vmatpush1.msra.mxu0 0.0
    %2441 = vmatprep.subr.mxu0 0.0
    %v2442 = vand.u32 %v16, 4294901760
    %2443 = vmatpush1.msra.mxu0 %v2442
    %2444 = vmatprep.subr.mxu0 0.0
    %v2445 = vand.u32 %v15, 4294901760
    %2446 = vmatpush1.msra.mxu0 %v2445
    %2447 = vmatprep.subr.mxu0 0.0
    %v2448 = vand.u32 %v14, 4294901760
    %2449 = vmatpush1.msra.mxu0 %v2448
    %2450 = vmatprep.subr.mxu0 0.0
    %v2451 = vand.u32 %v13, 4294901760
    %2452 = vmatpush1.msra.mxu0 %v2451
    %2453 = vmatprep.subr.mxu0 0.0
    %2454 = vmatpush2.msra.mxu0 0.0
    %2455 = vmatprep.subr.mxu0 0.0
    %2456 = vmatpush2.msra.mxu0 0.0
    %2457 = vmatprep.subr.mxu0 0.0
    %2458 = vmatpush2.msra.mxu0 0.0
    %2459 = vmatprep.subr.mxu0 0.0
    %2460 = vmatpush2.msra.mxu0 0.0
    %2461 = vmatprep.subr.mxu0 0.0
    %2462 = vmatpush2.msra.mxu0 0.0
    %2463 = vmatprep.subr.mxu0 0.0
    %2464 = vmatpush2.msra.mxu0 0.0
    %2465 = vmatprep.subr.mxu0 0.0
    %2466 = vmatpush2.msra.mxu0 0.0
    %2467 = vmatprep.subr.mxu0 0.0
    %2468 = vmatpush2.msra.mxu0 0.0
    %2469 = vmatprep.subr.mxu0 0.0
    %2470 = vmatpush2.msra.mxu0 0.0
    %2471 = vmatprep.subr.mxu0 0.0
    %2472 = vmatpush2.msra.mxu0 0.0
    %2473 = vmatprep.subr.mxu0 0.0
    %2474 = vmatpush2.msra.mxu0 0.0
    %2475 = vmatprep.subr.mxu0 0.0
    %2476 = vmatpush2.msra.mxu0 0.0
    %2477 = vmatprep.subr.mxu0 0.0
    %2478 = vmatpush2.msra.mxu0 0.0
    %2479 = vmatprep.subr.mxu0 0.0
    %2480 = vmatpush2.msra.mxu0 0.0
    %2481 = vmatprep.subr.mxu0 0.0
    %2482 = vmatpush2.msra.mxu0 0.0
    %2483 = vmatprep.subr.mxu0 0.0
    %2484 = vmatpush2.msra.mxu0 0.0
    %2485 = vmatprep.mubr.f32.mxu0 0.0
    %v2486 = vand.u32 %v2005, 4294901760
    %2487 = vmatmul.mubr.f32.gmra.mxu0 %v2486
    %v2488 = vpop.f32.mrf.mxu0
    %v2489 = vadd.f32 %v2414, %v2488
    %v2490 = vpop.f32.mrf.mxu0
    %2491 = vdwg.mxu0
    %v2493 = vrot.slane %v2489, 2
    %v2495 = vadd.f32 %v516, %v2493
    %v2496 = vtanh.pop %v2495
    %v2498 = vrot.slane %v2496, 6
    %v2499 = vsel %vm525, %v2498, 0
    %2501 = vmatprep.subr.mxu0 0.0
    %2502 = vmatpush1.msra.mxu0 0.0
    %2503 = vmatprep.subr.mxu0 0.0
    %2504 = vmatpush1.msra.mxu0 0.0
    %2505 = vmatprep.subr.mxu0 0.0
    %2506 = vmatpush1.msra.mxu0 0.0
    %2507 = vmatprep.subr.mxu0 0.0
    %2508 = vmatpush1.msra.mxu0 0.0
    %2509 = vmatprep.subr.mxu0 0.0
    %2510 = vmatpush1.msra.mxu0 0.0
    %2511 = vmatprep.subr.mxu0 0.0
    %2512 = vmatpush1.msra.mxu0 0.0
    %2513 = vmatprep.subr.mxu0 0.0
    %2514 = vmatpush1.msra.mxu0 0.0
    %2515 = vmatprep.subr.mxu0 0.0
    %2516 = vmatpush1.msra.mxu0 0.0
    %2517 = vmatprep.subr.mxu0 0.0
    %2518 = vmatpush1.msra.mxu0 0.0
    %2519 = vmatprep.subr.mxu0 0.0
    %2520 = vmatpush1.msra.mxu0 0.0
    %2521 = vmatprep.subr.mxu0 0.0
    %2522 = vmatpush1.msra.mxu0 0.0
    %2523 = vmatprep.subr.mxu0 0.0
    %2524 = vmatpush1.msra.mxu0 0.0
    %2525 = vmatprep.subr.mxu0 0.0
    %v2526 = vand.u32 %v16, 4294901760
    %2527 = vmatpush1.msra.mxu0 %v2526
    %2528 = vmatprep.subr.mxu0 0.0
    %v2529 = vand.u32 %v15, 4294901760
    %2530 = vmatpush1.msra.mxu0 %v2529
    %2531 = vmatprep.subr.mxu0 0.0
    %v2532 = vand.u32 %v14, 4294901760
    %2533 = vmatpush1.msra.mxu0 %v2532
    %2534 = vmatprep.subr.mxu0 0.0
    %v2535 = vand.u32 %v13, 4294901760
    %2536 = vmatpush1.msra.mxu0 %v2535
    %2537 = vmatprep.subr.mxu0 0.0
    %2538 = vmatpush2.msra.mxu0 0.0
    %2539 = vmatprep.subr.mxu0 0.0
    %2540 = vmatpush2.msra.mxu0 0.0
    %2541 = vmatprep.subr.mxu0 0.0
    %2542 = vmatpush2.msra.mxu0 0.0
    %2543 = vmatprep.subr.mxu0 0.0
    %2544 = vmatpush2.msra.mxu0 0.0
    %2545 = vmatprep.subr.mxu0 0.0
    %2546 = vmatpush2.msra.mxu0 0.0
    %2547 = vmatprep.subr.mxu0 0.0
    %2548 = vmatpush2.msra.mxu0 0.0
    %2549 = vmatprep.subr.mxu0 0.0
    %2550 = vmatpush2.msra.mxu0 0.0
    %2551 = vmatprep.subr.mxu0 0.0
    %2552 = vmatpush2.msra.mxu0 0.0
    %2553 = vmatprep.subr.mxu0 0.0
    %2554 = vmatpush2.msra.mxu0 0.0
    %2555 = vmatprep.subr.mxu0 0.0
    %2556 = vmatpush2.msra.mxu0 0.0
    %2557 = vmatprep.subr.mxu0 0.0
    %2558 = vmatpush2.msra.mxu0 0.0
    %2559 = vmatprep.subr.mxu0 0.0
    %2560 = vmatpush2.msra.mxu0 0.0
    %2561 = vmatprep.subr.mxu0 0.0
    %2562 = vmatpush2.msra.mxu0 0.0
    %2563 = vmatprep.subr.mxu0 0.0
    %2564 = vmatpush2.msra.mxu0 0.0
    %2565 = vmatprep.subr.mxu0 0.0
    %2566 = vmatpush2.msra.mxu0 0.0
    %2567 = vmatprep.subr.mxu0 0.0
    %2568 = vmatpush2.msra.mxu0 0.0
    %2569 = vmatprep.mubr.f32.mxu0 0.0
    %v2570 = vand.u32 %v2499, 4294901760
    %v2571 = vsub.f32 %v2499, %v2570
    %v2572 = vand.u32 %v2571, 4294901760
    %v2573 = vsub.f32 %v2571, %v2572
    %v2574 = vand.u32 %v2573, 4294901760
    %2575 = vmatmul.mubr.f32.gmra.mxu0 %v2574
    %v2576 = vpop.f32.mrf.mxu0
    %v2577 = vadd.f32 0.0, %v2576
    %v2578 = vpop.f32.mrf.mxu0
    %2579 = vdwg.mxu0
    %2580 = vmatprep.subr.mxu0 0.0
    %2581 = vmatpush1.msra.mxu0 0.0
    %2582 = vmatprep.subr.mxu0 0.0
    %2583 = vmatpush1.msra.mxu0 0.0
    %2584 = vmatprep.subr.mxu0 0.0
    %2585 = vmatpush1.msra.mxu0 0.0
    %2586 = vmatprep.subr.mxu0 0.0
    %2587 = vmatpush1.msra.mxu0 0.0
    %2588 = vmatprep.subr.mxu0 0.0
    %2589 = vmatpush1.msra.mxu0 0.0
    %2590 = vmatprep.subr.mxu0 0.0
    %2591 = vmatpush1.msra.mxu0 0.0
    %2592 = vmatprep.subr.mxu0 0.0
    %2593 = vmatpush1.msra.mxu0 0.0
    %2594 = vmatprep.subr.mxu0 0.0
    %2595 = vmatpush1.msra.mxu0 0.0
    %2596 = vmatprep.subr.mxu0 0.0
    %2597 = vmatpush1.msra.mxu0 0.0
    %2598 = vmatprep.subr.mxu0 0.0
    %2599 = vmatpush1.msra.mxu0 0.0
    %2600 = vmatprep.subr.mxu0 0.0
    %2601 = vmatpush1.msra.mxu0 0.0
    %2602 = vmatprep.subr.mxu0 0.0
    %2603 = vmatpush1.msra.mxu0 0.0
    %2604 = vmatprep.subr.mxu0 0.0
    %v2605 = vand.u32 %v16, 4294901760
    %v2606 = vsub.f32 %v16, %v2605
    %v2607 = vand.u32 %v2606, 4294901760
    %v2608 = vsub.f32 %v2606, %v2607
    %v2609 = vand.u32 %v2608, 4294901760
    %2610 = vmatpush1.msra.mxu0 %v2609
    %2611 = vmatprep.subr.mxu0 0.0
    %v2612 = vand.u32 %v15, 4294901760
    %v2613 = vsub.f32 %v15, %v2612
    %v2614 = vand.u32 %v2613, 4294901760
    %v2615 = vsub.f32 %v2613, %v2614
    %v2616 = vand.u32 %v2615, 4294901760
    %2617 = vmatpush1.msra.mxu0 %v2616
    %2618 = vmatprep.subr.mxu0 0.0
    %v2619 = vand.u32 %v14, 4294901760
    %v2620 = vsub.f32 %v14, %v2619
    %v2621 = vand.u32 %v2620, 4294901760
    %v2622 = vsub.f32 %v2620, %v2621
    %v2623 = vand.u32 %v2622, 4294901760
    %2624 = vmatpush1.msra.mxu0 %v2623
    %2625 = vmatprep.subr.mxu0 0.0
    %v2626 = vand.u32 %v13, 4294901760
    %v2627 = vsub.f32 %v13, %v2626
    %v2628 = vand.u32 %v2627, 4294901760
    %v2629 = vsub.f32 %v2627, %v2628
    %v2630 = vand.u32 %v2629, 4294901760
    %2631 = vmatpush1.msra.mxu0 %v2630
    %2632 = vmatprep.subr.mxu0 0.0
    %2633 = vmatpush2.msra.mxu0 0.0
    %2634 = vmatprep.subr.mxu0 0.0
    %2635 = vmatpush2.msra.mxu0 0.0
    %2636 = vmatprep.subr.mxu0 0.0
    %2637 = vmatpush2.msra.mxu0 0.0
    %2638 = vmatprep.subr.mxu0 0.0
    %2639 = vmatpush2.msra.mxu0 0.0
    %2640 = vmatprep.subr.mxu0 0.0
    %2641 = vmatpush2.msra.mxu0 0.0
    %2642 = vmatprep.subr.mxu0 0.0
    %2643 = vmatpush2.msra.mxu0 0.0
    %2644 = vmatprep.subr.mxu0 0.0
    %2645 = vmatpush2.msra.mxu0 0.0
    %2646 = vmatprep.subr.mxu0 0.0
    %2647 = vmatpush2.msra.mxu0 0.0
    %2648 = vmatprep.subr.mxu0 0.0
    %2649 = vmatpush2.msra.mxu0 0.0
    %2650 = vmatprep.subr.mxu0 0.0
    %2651 = vmatpush2.msra.mxu0 0.0
    %2652 = vmatprep.subr.mxu0 0.0
    %2653 = vmatpush2.msra.mxu0 0.0
    %2654 = vmatprep.subr.mxu0 0.0
    %2655 = vmatpush2.msra.mxu0 0.0
    %2656 = vmatprep.subr.mxu0 0.0
    %2657 = vmatpush2.msra.mxu0 0.0
    %2658 = vmatprep.subr.mxu0 0.0
    %2659 = vmatpush2.msra.mxu0 0.0
    %2660 = vmatprep.subr.mxu0 0.0
    %2661 = vmatpush2.msra.mxu0 0.0
    %2662 = vmatprep.subr.mxu0 0.0
    %2663 = vmatpush2.msra.mxu0 0.0
    %2664 = vmatprep.mubr.f32.mxu0 0.0
    %v2665 = vand.u32 %v2499, 4294901760
    %2666 = vmatmul.mubr.f32.gmra.mxu0 %v2665
    %v2667 = vpop.f32.mrf.mxu0
    %v2668 = vadd.f32 %v2577, %v2667
    %v2669 = vpop.f32.mrf.mxu0
    %2670 = vdwg.mxu0
    %2671 = vmatprep.subr.mxu0 0.0
    %2672 = vmatpush1.msra.mxu0 0.0
    %2673 = vmatprep.subr.mxu0 0.0
    %2674 = vmatpush1.msra.mxu0 0.0
    %2675 = vmatprep.subr.mxu0 0.0
    %2676 = vmatpush1.msra.mxu0 0.0
    %2677 = vmatprep.subr.mxu0 0.0
    %2678 = vmatpush1.msra.mxu0 0.0
    %2679 = vmatprep.subr.mxu0 0.0
    %2680 = vmatpush1.msra.mxu0 0.0
    %2681 = vmatprep.subr.mxu0 0.0
    %2682 = vmatpush1.msra.mxu0 0.0
    %2683 = vmatprep.subr.mxu0 0.0
    %2684 = vmatpush1.msra.mxu0 0.0
    %2685 = vmatprep.subr.mxu0 0.0
    %2686 = vmatpush1.msra.mxu0 0.0
    %2687 = vmatprep.subr.mxu0 0.0
    %2688 = vmatpush1.msra.mxu0 0.0
    %2689 = vmatprep.subr.mxu0 0.0
    %2690 = vmatpush1.msra.mxu0 0.0
    %2691 = vmatprep.subr.mxu0 0.0
    %2692 = vmatpush1.msra.mxu0 0.0
    %2693 = vmatprep.subr.mxu0 0.0
    %2694 = vmatpush1.msra.mxu0 0.0
    %2695 = vmatprep.subr.mxu0 0.0
    %v2696 = vand.u32 %v16, 4294901760
    %v2697 = vsub.f32 %v16, %v2696
    %2698 = vmatpush1.msra.mxu0 %v2697
    %2699 = vmatprep.subr.mxu0 0.0
    %v2700 = vand.u32 %v15, 4294901760
    %v2701 = vsub.f32 %v15, %v2700
    %2702 = vmatpush1.msra.mxu0 %v2701
    %2703 = vmatprep.subr.mxu0 0.0
    %v2704 = vand.u32 %v14, 4294901760
    %v2705 = vsub.f32 %v14, %v2704
    %2706 = vmatpush1.msra.mxu0 %v2705
    %2707 = vmatprep.subr.mxu0 0.0
    %v2708 = vand.u32 %v13, 4294901760
    %v2709 = vsub.f32 %v13, %v2708
    %2710 = vmatpush1.msra.mxu0 %v2709
    %2711 = vmatprep.subr.mxu0 0.0
    %2712 = vmatpush2.msra.mxu0 0.0
    %2713 = vmatprep.subr.mxu0 0.0
    %2714 = vmatpush2.msra.mxu0 0.0
    %2715 = vmatprep.subr.mxu0 0.0
    %2716 = vmatpush2.msra.mxu0 0.0
    %2717 = vmatprep.subr.mxu0 0.0
    %2718 = vmatpush2.msra.mxu0 0.0
    %2719 = vmatprep.subr.mxu0 0.0
    %2720 = vmatpush2.msra.mxu0 0.0
    %2721 = vmatprep.subr.mxu0 0.0
    %2722 = vmatpush2.msra.mxu0 0.0
    %2723 = vmatprep.subr.mxu0 0.0
    %2724 = vmatpush2.msra.mxu0 0.0
    %2725 = vmatprep.subr.mxu0 0.0
    %2726 = vmatpush2.msra.mxu0 0.0
    %2727 = vmatprep.subr.mxu0 0.0
    %2728 = vmatpush2.msra.mxu0 0.0
    %2729 = vmatprep.subr.mxu0 0.0
    %2730 = vmatpush2.msra.mxu0 0.0
    %2731 = vmatprep.subr.mxu0 0.0
    %2732 = vmatpush2.msra.mxu0 0.0
    %2733 = vmatprep.subr.mxu0 0.0
    %2734 = vmatpush2.msra.mxu0 0.0
    %2735 = vmatprep.subr.mxu0 0.0
    %2736 = vmatpush2.msra.mxu0 0.0
    %2737 = vmatprep.subr.mxu0 0.0
    %2738 = vmatpush2.msra.mxu0 0.0
    %2739 = vmatprep.subr.mxu0 0.0
    %2740 = vmatpush2.msra.mxu0 0.0
    %2741 = vmatprep.subr.mxu0 0.0
    %2742 = vmatpush2.msra.mxu0 0.0
    %2743 = vmatprep.mubr.f32.mxu0 0.0
    %v2744 = vand.u32 %v2499, 4294901760
    %v2745 = vsub.f32 %v2499, %v2744
    %2746 = vmatmul.mubr.f32.gmra.mxu0 %v2745
    %v2747 = vpop.f32.mrf.mxu0
    %v2748 = vadd.f32 %v2668, %v2747
    %v2749 = vpop.f32.mrf.mxu0
    %2750 = vdwg.mxu0
    %2751 = vmatprep.subr.mxu0 0.0
    %2752 = vmatpush1.msra.mxu0 0.0
    %2753 = vmatprep.subr.mxu0 0.0
    %2754 = vmatpush1.msra.mxu0 0.0
    %2755 = vmatprep.subr.mxu0 0.0
    %2756 = vmatpush1.msra.mxu0 0.0
    %2757 = vmatprep.subr.mxu0 0.0
    %2758 = vmatpush1.msra.mxu0 0.0
    %2759 = vmatprep.subr.mxu0 0.0
    %2760 = vmatpush1.msra.mxu0 0.0
    %2761 = vmatprep.subr.mxu0 0.0
    %2762 = vmatpush1.msra.mxu0 0.0
    %2763 = vmatprep.subr.mxu0 0.0
    %2764 = vmatpush1.msra.mxu0 0.0
    %2765 = vmatprep.subr.mxu0 0.0
    %2766 = vmatpush1.msra.mxu0 0.0
    %2767 = vmatprep.subr.mxu0 0.0
    %2768 = vmatpush1.msra.mxu0 0.0
    %2769 = vmatprep.subr.mxu0 0.0
    %2770 = vmatpush1.msra.mxu0 0.0
    %2771 = vmatprep.subr.mxu0 0.0
    %2772 = vmatpush1.msra.mxu0 0.0
    %2773 = vmatprep.subr.mxu0 0.0
    %2774 = vmatpush1.msra.mxu0 0.0
    %2775 = vmatprep.subr.mxu0 0.0
    %v2776 = vand.u32 %v16, 4294901760
    %2777 = vmatpush1.msra.mxu0 %v2776
    %2778 = vmatprep.subr.mxu0 0.0
    %v2779 = vand.u32 %v15, 4294901760
    %2780 = vmatpush1.msra.mxu0 %v2779
    %2781 = vmatprep.subr.mxu0 0.0
    %v2782 = vand.u32 %v14, 4294901760
    %2783 = vmatpush1.msra.mxu0 %v2782
    %2784 = vmatprep.subr.mxu0 0.0
    %v2785 = vand.u32 %v13, 4294901760
    %2786 = vmatpush1.msra.mxu0 %v2785
    %2787 = vmatprep.subr.mxu0 0.0
    %2788 = vmatpush2.msra.mxu0 0.0
    %2789 = vmatprep.subr.mxu0 0.0
    %2790 = vmatpush2.msra.mxu0 0.0
    %2791 = vmatprep.subr.mxu0 0.0
    %2792 = vmatpush2.msra.mxu0 0.0
    %2793 = vmatprep.subr.mxu0 0.0
    %2794 = vmatpush2.msra.mxu0 0.0
    %2795 = vmatprep.subr.mxu0 0.0
    %2796 = vmatpush2.msra.mxu0 0.0
    %2797 = vmatprep.subr.mxu0 0.0
    %2798 = vmatpush2.msra.mxu0 0.0
    %2799 = vmatprep.subr.mxu0 0.0
    %2800 = vmatpush2.msra.mxu0 0.0
    %2801 = vmatprep.subr.mxu0 0.0
    %2802 = vmatpush2.msra.mxu0 0.0
    %2803 = vmatprep.subr.mxu0 0.0
    %2804 = vmatpush2.msra.mxu0 0.0
    %2805 = vmatprep.subr.mxu0 0.0
    %2806 = vmatpush2.msra.mxu0 0.0
    %2807 = vmatprep.subr.mxu0 0.0
    %2808 = vmatpush2.msra.mxu0 0.0
    %2809 = vmatprep.subr.mxu0 0.0
    %2810 = vmatpush2.msra.mxu0 0.0
    %2811 = vmatprep.subr.mxu0 0.0
    %2812 = vmatpush2.msra.mxu0 0.0
    %2813 = vmatprep.subr.mxu0 0.0
    %2814 = vmatpush2.msra.mxu0 0.0
    %2815 = vmatprep.subr.mxu0 0.0
    %2816 = vmatpush2.msra.mxu0 0.0
    %2817 = vmatprep.subr.mxu0 0.0
    %2818 = vmatpush2.msra.mxu0 0.0
    %2819 = vmatprep.mubr.f32.mxu0 0.0
    %v2820 = vand.u32 %v2499, 4294901760
    %v2821 = vsub.f32 %v2499, %v2820
    %v2822 = vand.u32 %v2821, 4294901760
    %2823 = vmatmul.mubr.f32.gmra.mxu0 %v2822
    %v2824 = vpop.f32.mrf.mxu0
    %v2825 = vadd.f32 %v2748, %v2824
    %v2826 = vpop.f32.mrf.mxu0
    %2827 = vdwg.mxu0
    %2828 = vmatprep.subr.mxu0 0.0
    %2829 = vmatpush1.msra.mxu0 0.0
    %2830 = vmatprep.subr.mxu0 0.0
    %2831 = vmatpush1.msra.mxu0 0.0
    %2832 = vmatprep.subr.mxu0 0.0
    %2833 = vmatpush1.msra.mxu0 0.0
    %2834 = vmatprep.subr.mxu0 0.0
    %2835 = vmatpush1.msra.mxu0 0.0
    %2836 = vmatprep.subr.mxu0 0.0
    %2837 = vmatpush1.msra.mxu0 0.0
    %2838 = vmatprep.subr.mxu0 0.0
    %2839 = vmatpush1.msra.mxu0 0.0
    %2840 = vmatprep.subr.mxu0 0.0
    %2841 = vmatpush1.msra.mxu0 0.0
    %2842 = vmatprep.subr.mxu0 0.0
    %2843 = vmatpush1.msra.mxu0 0.0
    %2844 = vmatprep.subr.mxu0 0.0
    %2845 = vmatpush1.msra.mxu0 0.0
    %2846 = vmatprep.subr.mxu0 0.0
    %2847 = vmatpush1.msra.mxu0 0.0
    %2848 = vmatprep.subr.mxu0 0.0
    %2849 = vmatpush1.msra.mxu0 0.0
    %2850 = vmatprep.subr.mxu0 0.0
    %2851 = vmatpush1.msra.mxu0 0.0
    %2852 = vmatprep.subr.mxu0 0.0
    %v2853 = vand.u32 %v16, 4294901760
    %v2854 = vsub.f32 %v16, %v2853
    %v2855 = vand.u32 %v2854, 4294901760
    %2856 = vmatpush1.msra.mxu0 %v2855
    %2857 = vmatprep.subr.mxu0 0.0
    %v2858 = vand.u32 %v15, 4294901760
    %v2859 = vsub.f32 %v15, %v2858
    %v2860 = vand.u32 %v2859, 4294901760
    %2861 = vmatpush1.msra.mxu0 %v2860
    %2862 = vmatprep.subr.mxu0 0.0
    %v2863 = vand.u32 %v14, 4294901760
    %v2864 = vsub.f32 %v14, %v2863
    %v2865 = vand.u32 %v2864, 4294901760
    %2866 = vmatpush1.msra.mxu0 %v2865
    %2867 = vmatprep.subr.mxu0 0.0
    %v2868 = vand.u32 %v13, 4294901760
    %v2869 = vsub.f32 %v13, %v2868
    %v2870 = vand.u32 %v2869, 4294901760
    %2871 = vmatpush1.msra.mxu0 %v2870
    %2872 = vmatprep.subr.mxu0 0.0
    %2873 = vmatpush2.msra.mxu0 0.0
    %2874 = vmatprep.subr.mxu0 0.0
    %2875 = vmatpush2.msra.mxu0 0.0
    %2876 = vmatprep.subr.mxu0 0.0
    %2877 = vmatpush2.msra.mxu0 0.0
    %2878 = vmatprep.subr.mxu0 0.0
    %2879 = vmatpush2.msra.mxu0 0.0
    %2880 = vmatprep.subr.mxu0 0.0
    %2881 = vmatpush2.msra.mxu0 0.0
    %2882 = vmatprep.subr.mxu0 0.0
    %2883 = vmatpush2.msra.mxu0 0.0
    %2884 = vmatprep.subr.mxu0 0.0
    %2885 = vmatpush2.msra.mxu0 0.0
    %2886 = vmatprep.subr.mxu0 0.0
    %2887 = vmatpush2.msra.mxu0 0.0
    %2888 = vmatprep.subr.mxu0 0.0
    %2889 = vmatpush2.msra.mxu0 0.0
    %2890 = vmatprep.subr.mxu0 0.0
    %2891 = vmatpush2.msra.mxu0 0.0
    %2892 = vmatprep.subr.mxu0 0.0
    %2893 = vmatpush2.msra.mxu0 0.0
    %2894 = vmatprep.subr.mxu0 0.0
    %2895 = vmatpush2.msra.mxu0 0.0
    %2896 = vmatprep.subr.mxu0 0.0
    %2897 = vmatpush2.msra.mxu0 0.0
    %2898 = vmatprep.subr.mxu0 0.0
    %2899 = vmatpush2.msra.mxu0 0.0
    %2900 = vmatprep.subr.mxu0 0.0
    %2901 = vmatpush2.msra.mxu0 0.0
    %2902 = vmatprep.subr.mxu0 0.0
    %2903 = vmatpush2.msra.mxu0 0.0
    %2904 = vmatprep.mubr.f32.mxu0 0.0
    %v2905 = vand.u32 %v2499, 4294901760
    %2906 = vmatmul.mubr.f32.gmra.mxu0 %v2905
    %v2907 = vpop.f32.mrf.mxu0
    %v2908 = vadd.f32 %v2825, %v2907
    %v2909 = vpop.f32.mrf.mxu0
    %2910 = vdwg.mxu0
    %2911 = vmatprep.subr.mxu0 0.0
    %2912 = vmatpush1.msra.mxu0 0.0
    %2913 = vmatprep.subr.mxu0 0.0
    %2914 = vmatpush1.msra.mxu0 0.0
    %2915 = vmatprep.subr.mxu0 0.0
    %2916 = vmatpush1.msra.mxu0 0.0
    %2917 = vmatprep.subr.mxu0 0.0
    %2918 = vmatpush1.msra.mxu0 0.0
    %2919 = vmatprep.subr.mxu0 0.0
    %2920 = vmatpush1.msra.mxu0 0.0
    %2921 = vmatprep.subr.mxu0 0.0
    %2922 = vmatpush1.msra.mxu0 0.0
    %2923 = vmatprep.subr.mxu0 0.0
    %2924 = vmatpush1.msra.mxu0 0.0
    %2925 = vmatprep.subr.mxu0 0.0
    %2926 = vmatpush1.msra.mxu0 0.0
    %2927 = vmatprep.subr.mxu0 0.0
    %2928 = vmatpush1.msra.mxu0 0.0
    %2929 = vmatprep.subr.mxu0 0.0
    %2930 = vmatpush1.msra.mxu0 0.0
    %2931 = vmatprep.subr.mxu0 0.0
    %2932 = vmatpush1.msra.mxu0 0.0
    %2933 = vmatprep.subr.mxu0 0.0
    %2934 = vmatpush1.msra.mxu0 0.0
    %2935 = vmatprep.subr.mxu0 0.0
    %v2936 = vand.u32 %v16, 4294901760
    %2937 = vmatpush1.msra.mxu0 %v2936
    %2938 = vmatprep.subr.mxu0 0.0
    %v2939 = vand.u32 %v15, 4294901760
    %2940 = vmatpush1.msra.mxu0 %v2939
    %2941 = vmatprep.subr.mxu0 0.0
    %v2942 = vand.u32 %v14, 4294901760
    %2943 = vmatpush1.msra.mxu0 %v2942
    %2944 = vmatprep.subr.mxu0 0.0
    %v2945 = vand.u32 %v13, 4294901760
    %2946 = vmatpush1.msra.mxu0 %v2945
    %2947 = vmatprep.subr.mxu0 0.0
    %2948 = vmatpush2.msra.mxu0 0.0
    %2949 = vmatprep.subr.mxu0 0.0
    %2950 = vmatpush2.msra.mxu0 0.0
    %2951 = vmatprep.subr.mxu0 0.0
    %2952 = vmatpush2.msra.mxu0 0.0
    %2953 = vmatprep.subr.mxu0 0.0
    %2954 = vmatpush2.msra.mxu0 0.0
    %2955 = vmatprep.subr.mxu0 0.0
    %2956 = vmatpush2.msra.mxu0 0.0
    %2957 = vmatprep.subr.mxu0 0.0
    %2958 = vmatpush2.msra.mxu0 0.0
    %2959 = vmatprep.subr.mxu0 0.0
    %2960 = vmatpush2.msra.mxu0 0.0
    %2961 = vmatprep.subr.mxu0 0.0
    %2962 = vmatpush2.msra.mxu0 0.0
    %2963 = vmatprep.subr.mxu0 0.0
    %2964 = vmatpush2.msra.mxu0 0.0
    %2965 = vmatprep.subr.mxu0 0.0
    %2966 = vmatpush2.msra.mxu0 0.0
    %2967 = vmatprep.subr.mxu0 0.0
    %2968 = vmatpush2.msra.mxu0 0.0
    %2969 = vmatprep.subr.mxu0 0.0
    %2970 = vmatpush2.msra.mxu0 0.0
    %2971 = vmatprep.subr.mxu0 0.0
    %2972 = vmatpush2.msra.mxu0 0.0
    %2973 = vmatprep.subr.mxu0 0.0
    %2974 = vmatpush2.msra.mxu0 0.0
    %2975 = vmatprep.subr.mxu0 0.0
    %2976 = vmatpush2.msra.mxu0 0.0
    %2977 = vmatprep.subr.mxu0 0.0
    %2978 = vmatpush2.msra.mxu0 0.0
    %2979 = vmatprep.mubr.f32.mxu0 0.0
    %v2980 = vand.u32 %v2499, 4294901760
    %2981 = vmatmul.mubr.f32.gmra.mxu0 %v2980
    %v2982 = vpop.f32.mrf.mxu0
    %v2983 = vadd.f32 %v2908, %v2982
    %v2984 = vpop.f32.mrf.mxu0
    %2985 = vdwg.mxu0
    %v2986 = vadd.f32 %v522, %v2983
    %v2987 = vtanh.pop %v2986
    %v2989 = vsel %vm525, %v2987, 0
    %2991 = vmatprep.subr.mxu0 0.0
    %2992 = vmatpush1.msra.mxu0 0.0
    %2993 = vmatprep.subr.mxu0 0.0
    %2994 = vmatpush1.msra.mxu0 0.0
    %2995 = vmatprep.subr.mxu0 0.0
    %2996 = vmatpush1.msra.mxu0 0.0
    %2997 = vmatprep.subr.mxu0 0.0
    %2998 = vmatpush1.msra.mxu0 0.0
    %2999 = vmatprep.subr.mxu0 0.0
    %3000 = vmatpush1.msra.mxu0 0.0
    %3001 = vmatprep.subr.mxu0 0.0
    %3002 = vmatpush1.msra.mxu0 0.0
    %3003 = vmatprep.subr.mxu0 0.0
    %3004 = vmatpush1.msra.mxu0 0.0
    %3005 = vmatprep.subr.mxu0 0.0
    %3006 = vmatpush1.msra.mxu0 0.0
    %3007 = vmatprep.subr.mxu0 0.0
    %3008 = vmatpush1.msra.mxu0 0.0
    %3009 = vmatprep.subr.mxu0 0.0
    %3010 = vmatpush1.msra.mxu0 0.0
    %3011 = vmatprep.subr.mxu0 0.0
    %3012 = vmatpush1.msra.mxu0 0.0
    %3013 = vmatprep.subr.mxu0 0.0
    %3014 = vmatpush1.msra.mxu0 0.0
    %3015 = vmatprep.subr.mxu0 0.0
    %v3016 = vand.u32 %v16, 4294901760
    %3017 = vmatpush1.msra.mxu0 %v3016
    %3018 = vmatprep.subr.mxu0 0.0
    %v3019 = vand.u32 %v15, 4294901760
    %3020 = vmatpush1.msra.mxu0 %v3019
    %3021 = vmatprep.subr.mxu0 0.0
    %v3022 = vand.u32 %v14, 4294901760
    %3023 = vmatpush1.msra.mxu0 %v3022
    %3024 = vmatprep.subr.mxu0 0.0
    %v3025 = vand.u32 %v13, 4294901760
    %3026 = vmatpush1.msra.mxu0 %v3025
    %3027 = vmatprep.subr.mxu0 0.0
    %3028 = vmatpush2.msra.mxu0 0.0
    %3029 = vmatprep.subr.mxu0 0.0
    %3030 = vmatpush2.msra.mxu0 0.0
    %3031 = vmatprep.subr.mxu0 0.0
    %3032 = vmatpush2.msra.mxu0 0.0
    %3033 = vmatprep.subr.mxu0 0.0
    %3034 = vmatpush2.msra.mxu0 0.0
    %3035 = vmatprep.subr.mxu0 0.0
    %3036 = vmatpush2.msra.mxu0 0.0
    %3037 = vmatprep.subr.mxu0 0.0
    %3038 = vmatpush2.msra.mxu0 0.0
    %3039 = vmatprep.subr.mxu0 0.0
    %3040 = vmatpush2.msra.mxu0 0.0
    %3041 = vmatprep.subr.mxu0 0.0
    %3042 = vmatpush2.msra.mxu0 0.0
    %3043 = vmatprep.subr.mxu0 0.0
    %3044 = vmatpush2.msra.mxu0 0.0
    %3045 = vmatprep.subr.mxu0 0.0
    %3046 = vmatpush2.msra.mxu0 0.0
    %3047 = vmatprep.subr.mxu0 0.0
    %3048 = vmatpush2.msra.mxu0 0.0
    %3049 = vmatprep.subr.mxu0 0.0
    %3050 = vmatpush2.msra.mxu0 0.0
    %3051 = vmatprep.subr.mxu0 0.0
    %3052 = vmatpush2.msra.mxu0 0.0
    %3053 = vmatprep.subr.mxu0 0.0
    %3054 = vmatpush2.msra.mxu0 0.0
    %3055 = vmatprep.subr.mxu0 0.0
    %3056 = vmatpush2.msra.mxu0 0.0
    %3057 = vmatprep.subr.mxu0 0.0
    %3058 = vmatpush2.msra.mxu0 0.0
    %3059 = vmatprep.mubr.f32.mxu0 0.0
    %v3060 = vand.u32 %v2989, 4294901760
    %v3061 = vsub.f32 %v2989, %v3060
    %v3062 = vand.u32 %v3061, 4294901760
    %v3063 = vsub.f32 %v3061, %v3062
    %v3064 = vand.u32 %v3063, 4294901760
    %3065 = vmatmul.mubr.f32.gmra.mxu0 %v3064
    %v3066 = vpop.f32.mrf.mxu0
    %v3067 = vadd.f32 0.0, %v3066
    %v3068 = vpop.f32.mrf.mxu0
    %3069 = vdwg.mxu0
    %3070 = vmatprep.subr.mxu0 0.0
    %3071 = vmatpush1.msra.mxu0 0.0
    %3072 = vmatprep.subr.mxu0 0.0
    %3073 = vmatpush1.msra.mxu0 0.0
    %3074 = vmatprep.subr.mxu0 0.0
    %3075 = vmatpush1.msra.mxu0 0.0
    %3076 = vmatprep.subr.mxu0 0.0
    %3077 = vmatpush1.msra.mxu0 0.0
    %3078 = vmatprep.subr.mxu0 0.0
    %3079 = vmatpush1.msra.mxu0 0.0
    %3080 = vmatprep.subr.mxu0 0.0
    %3081 = vmatpush1.msra.mxu0 0.0
    %3082 = vmatprep.subr.mxu0 0.0
    %3083 = vmatpush1.msra.mxu0 0.0
    %3084 = vmatprep.subr.mxu0 0.0
    %3085 = vmatpush1.msra.mxu0 0.0
    %3086 = vmatprep.subr.mxu0 0.0
    %3087 = vmatpush1.msra.mxu0 0.0
    %3088 = vmatprep.subr.mxu0 0.0
    %3089 = vmatpush1.msra.mxu0 0.0
    %3090 = vmatprep.subr.mxu0 0.0
    %3091 = vmatpush1.msra.mxu0 0.0
    %3092 = vmatprep.subr.mxu0 0.0
    %3093 = vmatpush1.msra.mxu0 0.0
    %3094 = vmatprep.subr.mxu0 0.0
    %v3095 = vand.u32 %v16, 4294901760
    %v3096 = vsub.f32 %v16, %v3095
    %v3097 = vand.u32 %v3096, 4294901760
    %v3098 = vsub.f32 %v3096, %v3097
    %v3099 = vand.u32 %v3098, 4294901760
    %3100 = vmatpush1.msra.mxu0 %v3099
    %3101 = vmatprep.subr.mxu0 0.0
    %v3102 = vand.u32 %v15, 4294901760
    %v3103 = vsub.f32 %v15, %v3102
    %v3104 = vand.u32 %v3103, 4294901760
    %v3105 = vsub.f32 %v3103, %v3104
    %v3106 = vand.u32 %v3105, 4294901760
    %3107 = vmatpush1.msra.mxu0 %v3106
    %3108 = vmatprep.subr.mxu0 0.0
    %v3109 = vand.u32 %v14, 4294901760
    %v3110 = vsub.f32 %v14, %v3109
    %v3111 = vand.u32 %v3110, 4294901760
    %v3112 = vsub.f32 %v3110, %v3111
    %v3113 = vand.u32 %v3112, 4294901760
    %3114 = vmatpush1.msra.mxu0 %v3113
    %3115 = vmatprep.subr.mxu0 0.0
    %v3116 = vand.u32 %v13, 4294901760
    %v3117 = vsub.f32 %v13, %v3116
    %v3118 = vand.u32 %v3117, 4294901760
    %v3119 = vsub.f32 %v3117, %v3118
    %v3120 = vand.u32 %v3119, 4294901760
    %3121 = vmatpush1.msra.mxu0 %v3120
    %3122 = vmatprep.subr.mxu0 0.0
    %3123 = vmatpush2.msra.mxu0 0.0
    %3124 = vmatprep.subr.mxu0 0.0
    %3125 = vmatpush2.msra.mxu0 0.0
    %3126 = vmatprep.subr.mxu0 0.0
    %3127 = vmatpush2.msra.mxu0 0.0
    %3128 = vmatprep.subr.mxu0 0.0
    %3129 = vmatpush2.msra.mxu0 0.0
    %3130 = vmatprep.subr.mxu0 0.0
    %3131 = vmatpush2.msra.mxu0 0.0
    %3132 = vmatprep.subr.mxu0 0.0
    %3133 = vmatpush2.msra.mxu0 0.0
    %3134 = vmatprep.subr.mxu0 0.0
    %3135 = vmatpush2.msra.mxu0 0.0
    %3136 = vmatprep.subr.mxu0 0.0
    %3137 = vmatpush2.msra.mxu0 0.0
    %3138 = vmatprep.subr.mxu0 0.0
    %3139 = vmatpush2.msra.mxu0 0.0
    %3140 = vmatprep.subr.mxu0 0.0
    %3141 = vmatpush2.msra.mxu0 0.0
    %3142 = vmatprep.subr.mxu0 0.0
    %3143 = vmatpush2.msra.mxu0 0.0
    %3144 = vmatprep.subr.mxu0 0.0
    %3145 = vmatpush2.msra.mxu0 0.0
    %3146 = vmatprep.subr.mxu0 0.0
    %3147 = vmatpush2.msra.mxu0 0.0
    %3148 = vmatprep.subr.mxu0 0.0
    %3149 = vmatpush2.msra.mxu0 0.0
    %3150 = vmatprep.subr.mxu0 0.0
    %3151 = vmatpush2.msra.mxu0 0.0
    %3152 = vmatprep.subr.mxu0 0.0
    %3153 = vmatpush2.msra.mxu0 0.0
    %3154 = vmatprep.mubr.f32.mxu0 0.0
    %v3155 = vand.u32 %v2989, 4294901760
    %3156 = vmatmul.mubr.f32.gmra.mxu0 %v3155
    %v3157 = vpop.f32.mrf.mxu0
    %v3158 = vadd.f32 %v3067, %v3157
    %v3159 = vpop.f32.mrf.mxu0
    %3160 = vdwg.mxu0
    %3161 = vmatprep.subr.mxu0 0.0
    %3162 = vmatpush1.msra.mxu0 0.0
    %3163 = vmatprep.subr.mxu0 0.0
    %3164 = vmatpush1.msra.mxu0 0.0
    %3165 = vmatprep.subr.mxu0 0.0
    %3166 = vmatpush1.msra.mxu0 0.0
    %3167 = vmatprep.subr.mxu0 0.0
    %3168 = vmatpush1.msra.mxu0 0.0
    %3169 = vmatprep.subr.mxu0 0.0
    %3170 = vmatpush1.msra.mxu0 0.0
    %3171 = vmatprep.subr.mxu0 0.0
    %3172 = vmatpush1.msra.mxu0 0.0
    %3173 = vmatprep.subr.mxu0 0.0
    %3174 = vmatpush1.msra.mxu0 0.0
    %3175 = vmatprep.subr.mxu0 0.0
    %3176 = vmatpush1.msra.mxu0 0.0
    %3177 = vmatprep.subr.mxu0 0.0
    %3178 = vmatpush1.msra.mxu0 0.0
    %3179 = vmatprep.subr.mxu0 0.0
    %3180 = vmatpush1.msra.mxu0 0.0
    %3181 = vmatprep.subr.mxu0 0.0
    %3182 = vmatpush1.msra.mxu0 0.0
    %3183 = vmatprep.subr.mxu0 0.0
    %3184 = vmatpush1.msra.mxu0 0.0
    %3185 = vmatprep.subr.mxu0 0.0
    %v3186 = vand.u32 %v16, 4294901760
    %v3187 = vsub.f32 %v16, %v3186
    %3188 = vmatpush1.msra.mxu0 %v3187
    %3189 = vmatprep.subr.mxu0 0.0
    %v3190 = vand.u32 %v15, 4294901760
    %v3191 = vsub.f32 %v15, %v3190
    %3192 = vmatpush1.msra.mxu0 %v3191
    %3193 = vmatprep.subr.mxu0 0.0
    %v3194 = vand.u32 %v14, 4294901760
    %v3195 = vsub.f32 %v14, %v3194
    %3196 = vmatpush1.msra.mxu0 %v3195
    %3197 = vmatprep.subr.mxu0 0.0
    %v3198 = vand.u32 %v13, 4294901760
    %v3199 = vsub.f32 %v13, %v3198
    %3200 = vmatpush1.msra.mxu0 %v3199
    %3201 = vmatprep.subr.mxu0 0.0
    %3202 = vmatpush2.msra.mxu0 0.0
    %3203 = vmatprep.subr.mxu0 0.0
    %3204 = vmatpush2.msra.mxu0 0.0
    %3205 = vmatprep.subr.mxu0 0.0
    %3206 = vmatpush2.msra.mxu0 0.0
    %3207 = vmatprep.subr.mxu0 0.0
    %3208 = vmatpush2.msra.mxu0 0.0
    %3209 = vmatprep.subr.mxu0 0.0
    %3210 = vmatpush2.msra.mxu0 0.0
    %3211 = vmatprep.subr.mxu0 0.0
    %3212 = vmatpush2.msra.mxu0 0.0
    %3213 = vmatprep.subr.mxu0 0.0
    %3214 = vmatpush2.msra.mxu0 0.0
    %3215 = vmatprep.subr.mxu0 0.0
    %3216 = vmatpush2.msra.mxu0 0.0
    %3217 = vmatprep.subr.mxu0 0.0
    %3218 = vmatpush2.msra.mxu0 0.0
    %3219 = vmatprep.subr.mxu0 0.0
    %3220 = vmatpush2.msra.mxu0 0.0
    %3221 = vmatprep.subr.mxu0 0.0
    %3222 = vmatpush2.msra.mxu0 0.0
    %3223 = vmatprep.subr.mxu0 0.0
    %3224 = vmatpush2.msra.mxu0 0.0
    %3225 = vmatprep.subr.mxu0 0.0
    %3226 = vmatpush2.msra.mxu0 0.0
    %3227 = vmatprep.subr.mxu0 0.0
    %3228 = vmatpush2.msra.mxu0 0.0
    %3229 = vmatprep.subr.mxu0 0.0
    %3230 = vmatpush2.msra.mxu0 0.0
    %3231 = vmatprep.subr.mxu0 0.0
    %3232 = vmatpush2.msra.mxu0 0.0
    %3233 = vmatprep.mubr.f32.mxu0 0.0
    %v3234 = vand.u32 %v2989, 4294901760
    %v3235 = vsub.f32 %v2989, %v3234
    %3236 = vmatmul.mubr.f32.gmra.mxu0 %v3235
    %v3237 = vpop.f32.mrf.mxu0
    %v3238 = vadd.f32 %v3158, %v3237
    %v3239 = vpop.f32.mrf.mxu0
    %3240 = vdwg.mxu0
    %3241 = vmatprep.subr.mxu0 0.0
    %3242 = vmatpush1.msra.mxu0 0.0
    %3243 = vmatprep.subr.mxu0 0.0
    %3244 = vmatpush1.msra.mxu0 0.0
    %3245 = vmatprep.subr.mxu0 0.0
    %3246 = vmatpush1.msra.mxu0 0.0
    %3247 = vmatprep.subr.mxu0 0.0
    %3248 = vmatpush1.msra.mxu0 0.0
    %3249 = vmatprep.subr.mxu0 0.0
    %3250 = vmatpush1.msra.mxu0 0.0
    %3251 = vmatprep.subr.mxu0 0.0
    %3252 = vmatpush1.msra.mxu0 0.0
    %3253 = vmatprep.subr.mxu0 0.0
    %3254 = vmatpush1.msra.mxu0 0.0
    %3255 = vmatprep.subr.mxu0 0.0
    %3256 = vmatpush1.msra.mxu0 0.0
    %3257 = vmatprep.subr.mxu0 0.0
    %3258 = vmatpush1.msra.mxu0 0.0
    %3259 = vmatprep.subr.mxu0 0.0
    %3260 = vmatpush1.msra.mxu0 0.0
    %3261 = vmatprep.subr.mxu0 0.0
    %3262 = vmatpush1.msra.mxu0 0.0
    %3263 = vmatprep.subr.mxu0 0.0
    %3264 = vmatpush1.msra.mxu0 0.0
    %3265 = vmatprep.subr.mxu0 0.0
    %v3266 = vand.u32 %v16, 4294901760
    %3267 = vmatpush1.msra.mxu0 %v3266
    %3268 = vmatprep.subr.mxu0 0.0
    %v3269 = vand.u32 %v15, 4294901760
    %3270 = vmatpush1.msra.mxu0 %v3269
    %3271 = vmatprep.subr.mxu0 0.0
    %v3272 = vand.u32 %v14, 4294901760
    %3273 = vmatpush1.msra.mxu0 %v3272
    %3274 = vmatprep.subr.mxu0 0.0
    %v3275 = vand.u32 %v13, 4294901760
    %3276 = vmatpush1.msra.mxu0 %v3275
    %3277 = vmatprep.subr.mxu0 0.0
    %3278 = vmatpush2.msra.mxu0 0.0
    %3279 = vmatprep.subr.mxu0 0.0
    %3280 = vmatpush2.msra.mxu0 0.0
    %3281 = vmatprep.subr.mxu0 0.0
    %3282 = vmatpush2.msra.mxu0 0.0
    %3283 = vmatprep.subr.mxu0 0.0
    %3284 = vmatpush2.msra.mxu0 0.0
    %3285 = vmatprep.subr.mxu0 0.0
    %3286 = vmatpush2.msra.mxu0 0.0
    %3287 = vmatprep.subr.mxu0 0.0
    %3288 = vmatpush2.msra.mxu0 0.0
    %3289 = vmatprep.subr.mxu0 0.0
    %3290 = vmatpush2.msra.mxu0 0.0
    %3291 = vmatprep.subr.mxu0 0.0
    %3292 = vmatpush2.msra.mxu0 0.0
    %3293 = vmatprep.subr.mxu0 0.0
    %3294 = vmatpush2.msra.mxu0 0.0
    %3295 = vmatprep.subr.mxu0 0.0
    %3296 = vmatpush2.msra.mxu0 0.0
    %3297 = vmatprep.subr.mxu0 0.0
    %3298 = vmatpush2.msra.mxu0 0.0
    %3299 = vmatprep.subr.mxu0 0.0
    %3300 = vmatpush2.msra.mxu0 0.0
    %3301 = vmatprep.subr.mxu0 0.0
    %3302 = vmatpush2.msra.mxu0 0.0
    %3303 = vmatprep.subr.mxu0 0.0
    %3304 = vmatpush2.msra.mxu0 0.0
    %3305 = vmatprep.subr.mxu0 0.0
    %3306 = vmatpush2.msra.mxu0 0.0
    %3307 = vmatprep.subr.mxu0 0.0
    %3308 = vmatpush2.msra.mxu0 0.0
    %3309 = vmatprep.mubr.f32.mxu0 0.0
    %v3310 = vand.u32 %v2989, 4294901760
    %v3311 = vsub.f32 %v2989, %v3310
    %v3312 = vand.u32 %v3311, 4294901760
    %3313 = vmatmul.mubr.f32.gmra.mxu0 %v3312
    %v3314 = vpop.f32.mrf.mxu0
    %v3315 = vadd.f32 %v3238, %v3314
    %v3316 = vpop.f32.mrf.mxu0
    %3317 = vdwg.mxu0
    %3318 = vmatprep.subr.mxu0 0.0
    %3319 = vmatpush1.msra.mxu0 0.0
    %3320 = vmatprep.subr.mxu0 0.0
    %3321 = vmatpush1.msra.mxu0 0.0
    %3322 = vmatprep.subr.mxu0 0.0
    %3323 = vmatpush1.msra.mxu0 0.0
    %3324 = vmatprep.subr.mxu0 0.0
    %3325 = vmatpush1.msra.mxu0 0.0
    %3326 = vmatprep.subr.mxu0 0.0
    %3327 = vmatpush1.msra.mxu0 0.0
    %3328 = vmatprep.subr.mxu0 0.0
    %3329 = vmatpush1.msra.mxu0 0.0
    %3330 = vmatprep.subr.mxu0 0.0
    %3331 = vmatpush1.msra.mxu0 0.0
    %3332 = vmatprep.subr.mxu0 0.0
    %3333 = vmatpush1.msra.mxu0 0.0
    %3334 = vmatprep.subr.mxu0 0.0
    %3335 = vmatpush1.msra.mxu0 0.0
    %3336 = vmatprep.subr.mxu0 0.0
    %3337 = vmatpush1.msra.mxu0 0.0
    %3338 = vmatprep.subr.mxu0 0.0
    %3339 = vmatpush1.msra.mxu0 0.0
    %3340 = vmatprep.subr.mxu0 0.0
    %3341 = vmatpush1.msra.mxu0 0.0
    %3342 = vmatprep.subr.mxu0 0.0
    %v3343 = vand.u32 %v16, 4294901760
    %v3344 = vsub.f32 %v16, %v3343
    %v3345 = vand.u32 %v3344, 4294901760
    %3346 = vmatpush1.msra.mxu0 %v3345
    %3347 = vmatprep.subr.mxu0 0.0
    %v3348 = vand.u32 %v15, 4294901760
    %v3349 = vsub.f32 %v15, %v3348
    %v3350 = vand.u32 %v3349, 4294901760
    %3351 = vmatpush1.msra.mxu0 %v3350
    %3352 = vmatprep.subr.mxu0 0.0
    %v3353 = vand.u32 %v14, 4294901760
    %v3354 = vsub.f32 %v14, %v3353
    %v3355 = vand.u32 %v3354, 4294901760
    %3356 = vmatpush1.msra.mxu0 %v3355
    %3357 = vmatprep.subr.mxu0 0.0
    %v3358 = vand.u32 %v13, 4294901760
    %v3359 = vsub.f32 %v13, %v3358
    %v3360 = vand.u32 %v3359, 4294901760
    %3361 = vmatpush1.msra.mxu0 %v3360
    %3362 = vmatprep.subr.mxu0 0.0
    %3363 = vmatpush2.msra.mxu0 0.0
    %3364 = vmatprep.subr.mxu0 0.0
    %3365 = vmatpush2.msra.mxu0 0.0
    %3366 = vmatprep.subr.mxu0 0.0
    %3367 = vmatpush2.msra.mxu0 0.0
    %3368 = vmatprep.subr.mxu0 0.0
    %3369 = vmatpush2.msra.mxu0 0.0
    %3370 = vmatprep.subr.mxu0 0.0
    %3371 = vmatpush2.msra.mxu0 0.0
    %3372 = vmatprep.subr.mxu0 0.0
    %3373 = vmatpush2.msra.mxu0 0.0
    %3374 = vmatprep.subr.mxu0 0.0
    %3375 = vmatpush2.msra.mxu0 0.0
    %3376 = vmatprep.subr.mxu0 0.0
    %3377 = vmatpush2.msra.mxu0 0.0
    %3378 = vmatprep.subr.mxu0 0.0
    %3379 = vmatpush2.msra.mxu0 0.0
    %3380 = vmatprep.subr.mxu0 0.0
    %3381 = vmatpush2.msra.mxu0 0.0
    %3382 = vmatprep.subr.mxu0 0.0
    %3383 = vmatpush2.msra.mxu0 0.0
    %3384 = vmatprep.subr.mxu0 0.0
    %3385 = vmatpush2.msra.mxu0 0.0
    %3386 = vmatprep.subr.mxu0 0.0
    %3387 = vmatpush2.msra.mxu0 0.0
    %3388 = vmatprep.subr.mxu0 0.0
    %3389 = vmatpush2.msra.mxu0 0.0
    %3390 = vmatprep.subr.mxu0 0.0
    %3391 = vmatpush2.msra.mxu0 0.0
    %3392 = vmatprep.subr.mxu0 0.0
    %3393 = vmatpush2.msra.mxu0 0.0
    %3394 = vmatprep.mubr.f32.mxu0 0.0
    %v3395 = vand.u32 %v2989, 4294901760
    %3396 = vmatmul.mubr.f32.gmra.mxu0 %v3395
    %v3397 = vpop.f32.mrf.mxu0
    %v3398 = vadd.f32 %v3315, %v3397
    %v3399 = vpop.f32.mrf.mxu0
    %3400 = vdwg.mxu0
    %3401 = vmatprep.subr.mxu0 0.0
    %3402 = vmatpush1.msra.mxu0 0.0
    %3403 = vmatprep.subr.mxu0 0.0
    %3404 = vmatpush1.msra.mxu0 0.0
    %3405 = vmatprep.subr.mxu0 0.0
    %3406 = vmatpush1.msra.mxu0 0.0
    %3407 = vmatprep.subr.mxu0 0.0
    %3408 = vmatpush1.msra.mxu0 0.0
    %3409 = vmatprep.subr.mxu0 0.0
    %3410 = vmatpush1.msra.mxu0 0.0
    %3411 = vmatprep.subr.mxu0 0.0
    %3412 = vmatpush1.msra.mxu0 0.0
    %3413 = vmatprep.subr.mxu0 0.0
    %3414 = vmatpush1.msra.mxu0 0.0
    %3415 = vmatprep.subr.mxu0 0.0
    %3416 = vmatpush1.msra.mxu0 0.0
    %3417 = vmatprep.subr.mxu0 0.0
    %3418 = vmatpush1.msra.mxu0 0.0
    %3419 = vmatprep.subr.mxu0 0.0
    %3420 = vmatpush1.msra.mxu0 0.0
    %3421 = vmatprep.subr.mxu0 0.0
    %3422 = vmatpush1.msra.mxu0 0.0
    %3423 = vmatprep.subr.mxu0 0.0
    %3424 = vmatpush1.msra.mxu0 0.0
    %3425 = vmatprep.subr.mxu0 0.0
    %v3426 = vand.u32 %v16, 4294901760
    %3427 = vmatpush1.msra.mxu0 %v3426
    %3428 = vmatprep.subr.mxu0 0.0
    %v3429 = vand.u32 %v15, 4294901760
    %3430 = vmatpush1.msra.mxu0 %v3429
    %3431 = vmatprep.subr.mxu0 0.0
    %v3432 = vand.u32 %v14, 4294901760
    %3433 = vmatpush1.msra.mxu0 %v3432
    %3434 = vmatprep.subr.mxu0 0.0
    %v3435 = vand.u32 %v13, 4294901760
    %3436 = vmatpush1.msra.mxu0 %v3435
    %3437 = vmatprep.subr.mxu0 0.0
    %3438 = vmatpush2.msra.mxu0 0.0
    %3439 = vmatprep.subr.mxu0 0.0
    %3440 = vmatpush2.msra.mxu0 0.0
    %3441 = vmatprep.subr.mxu0 0.0
    %3442 = vmatpush2.msra.mxu0 0.0
    %3443 = vmatprep.subr.mxu0 0.0
    %3444 = vmatpush2.msra.mxu0 0.0
    %3445 = vmatprep.subr.mxu0 0.0
    %3446 = vmatpush2.msra.mxu0 0.0
    %3447 = vmatprep.subr.mxu0 0.0
    %3448 = vmatpush2.msra.mxu0 0.0
    %3449 = vmatprep.subr.mxu0 0.0
    %3450 = vmatpush2.msra.mxu0 0.0
    %3451 = vmatprep.subr.mxu0 0.0
    %3452 = vmatpush2.msra.mxu0 0.0
    %3453 = vmatprep.subr.mxu0 0.0
    %3454 = vmatpush2.msra.mxu0 0.0
    %3455 = vmatprep.subr.mxu0 0.0
    %3456 = vmatpush2.msra.mxu0 0.0
    %3457 = vmatprep.subr.mxu0 0.0
    %3458 = vmatpush2.msra.mxu0 0.0
    %3459 = vmatprep.subr.mxu0 0.0
    %3460 = vmatpush2.msra.mxu0 0.0
    %3461 = vmatprep.subr.mxu0 0.0
    %3462 = vmatpush2.msra.mxu0 0.0
    %3463 = vmatprep.subr.mxu0 0.0
    %3464 = vmatpush2.msra.mxu0 0.0
    %3465 = vmatprep.subr.mxu0 0.0
    %3466 = vmatpush2.msra.mxu0 0.0
    %3467 = vmatprep.subr.mxu0 0.0
    %3468 = vmatpush2.msra.mxu0 0.0
    %3469 = vmatprep.mubr.f32.mxu0 0.0
    %v3470 = vand.u32 %v2989, 4294901760
    %3471 = vmatmul.mubr.f32.gmra.mxu0 %v3470
    %v3472 = vpop.f32.mrf.mxu0
    %v3473 = vadd.f32 %v3398, %v3472
    %v3474 = vpop.f32.mrf.mxu0
    %3475 = vdwg.mxu0
    %v3477 = vrot.slane %v3473, 6
    %v3479 = vadd.f32 %v522, %v3477
    %v3480 = vtanh.pop %v3479
    %v3482 = vrot.slane %v3480, 2
    %v3483 = vsel %vm525, %v3482, 0
    %3485 = vmatprep.subr.mxu0 0.0
    %3486 = vmatpush1.msra.mxu0 0.0
    %3487 = vmatprep.subr.mxu0 0.0
    %3488 = vmatpush1.msra.mxu0 0.0
    %3489 = vmatprep.subr.mxu0 0.0
    %3490 = vmatpush1.msra.mxu0 0.0
    %3491 = vmatprep.subr.mxu0 0.0
    %3492 = vmatpush1.msra.mxu0 0.0
    %3493 = vmatprep.subr.mxu0 0.0
    %3494 = vmatpush1.msra.mxu0 0.0
    %3495 = vmatprep.subr.mxu0 0.0
    %3496 = vmatpush1.msra.mxu0 0.0
    %3497 = vmatprep.subr.mxu0 0.0
    %3498 = vmatpush1.msra.mxu0 0.0
    %3499 = vmatprep.subr.mxu0 0.0
    %3500 = vmatpush1.msra.mxu0 0.0
    %3501 = vmatprep.subr.mxu0 0.0
    %3502 = vmatpush1.msra.mxu0 0.0
    %3503 = vmatprep.subr.mxu0 0.0
    %3504 = vmatpush1.msra.mxu0 0.0
    %3505 = vmatprep.subr.mxu0 0.0
    %3506 = vmatpush1.msra.mxu0 0.0
    %3507 = vmatprep.subr.mxu0 0.0
    %3508 = vmatpush1.msra.mxu0 0.0
    %3509 = vmatprep.subr.mxu0 0.0
    %v3510 = vand.u32 %v16, 4294901760
    %3511 = vmatpush1.msra.mxu0 %v3510
    %3512 = vmatprep.subr.mxu0 0.0
    %v3513 = vand.u32 %v15, 4294901760
    %3514 = vmatpush1.msra.mxu0 %v3513
    %3515 = vmatprep.subr.mxu0 0.0
    %v3516 = vand.u32 %v14, 4294901760
    %3517 = vmatpush1.msra.mxu0 %v3516
    %3518 = vmatprep.subr.mxu0 0.0
    %v3519 = vand.u32 %v13, 4294901760
    %3520 = vmatpush1.msra.mxu0 %v3519
    %3521 = vmatprep.subr.mxu0 0.0
    %3522 = vmatpush2.msra.mxu0 0.0
    %3523 = vmatprep.subr.mxu0 0.0
    %3524 = vmatpush2.msra.mxu0 0.0
    %3525 = vmatprep.subr.mxu0 0.0
    %3526 = vmatpush2.msra.mxu0 0.0
    %3527 = vmatprep.subr.mxu0 0.0
    %3528 = vmatpush2.msra.mxu0 0.0
    %3529 = vmatprep.subr.mxu0 0.0
    %3530 = vmatpush2.msra.mxu0 0.0
    %3531 = vmatprep.subr.mxu0 0.0
    %3532 = vmatpush2.msra.mxu0 0.0
    %3533 = vmatprep.subr.mxu0 0.0
    %3534 = vmatpush2.msra.mxu0 0.0
    %3535 = vmatprep.subr.mxu0 0.0
    %3536 = vmatpush2.msra.mxu0 0.0
    %3537 = vmatprep.subr.mxu0 0.0
    %3538 = vmatpush2.msra.mxu0 0.0
    %3539 = vmatprep.subr.mxu0 0.0
    %3540 = vmatpush2.msra.mxu0 0.0
    %3541 = vmatprep.subr.mxu0 0.0
    %3542 = vmatpush2.msra.mxu0 0.0
    %3543 = vmatprep.subr.mxu0 0.0
    %3544 = vmatpush2.msra.mxu0 0.0
    %3545 = vmatprep.subr.mxu0 0.0
    %3546 = vmatpush2.msra.mxu0 0.0
    %3547 = vmatprep.subr.mxu0 0.0
    %3548 = vmatpush2.msra.mxu0 0.0
    %3549 = vmatprep.subr.mxu0 0.0
    %3550 = vmatpush2.msra.mxu0 0.0
    %3551 = vmatprep.subr.mxu0 0.0
    %3552 = vmatpush2.msra.mxu0 0.0
    %3553 = vmatprep.mubr.f32.mxu0 0.0
    %v3554 = vand.u32 %v3483, 4294901760
    %v3555 = vsub.f32 %v3483, %v3554
    %v3556 = vand.u32 %v3555, 4294901760
    %v3557 = vsub.f32 %v3555, %v3556
    %v3558 = vand.u32 %v3557, 4294901760
    %3559 = vmatmul.mubr.f32.gmra.mxu0 %v3558
    %v3560 = vpop.f32.mrf.mxu0
    %v3561 = vadd.f32 0.0, %v3560
    %v3562 = vpop.f32.mrf.mxu0
    %3563 = vdwg.mxu0
    %3564 = vmatprep.subr.mxu0 0.0
    %3565 = vmatpush1.msra.mxu0 0.0
    %3566 = vmatprep.subr.mxu0 0.0
    %3567 = vmatpush1.msra.mxu0 0.0
    %3568 = vmatprep.subr.mxu0 0.0
    %3569 = vmatpush1.msra.mxu0 0.0
    %3570 = vmatprep.subr.mxu0 0.0
    %3571 = vmatpush1.msra.mxu0 0.0
    %3572 = vmatprep.subr.mxu0 0.0
    %3573 = vmatpush1.msra.mxu0 0.0
    %3574 = vmatprep.subr.mxu0 0.0
    %3575 = vmatpush1.msra.mxu0 0.0
    %3576 = vmatprep.subr.mxu0 0.0
    %3577 = vmatpush1.msra.mxu0 0.0
    %3578 = vmatprep.subr.mxu0 0.0
    %3579 = vmatpush1.msra.mxu0 0.0
    %3580 = vmatprep.subr.mxu0 0.0
    %3581 = vmatpush1.msra.mxu0 0.0
    %3582 = vmatprep.subr.mxu0 0.0
    %3583 = vmatpush1.msra.mxu0 0.0
    %3584 = vmatprep.subr.mxu0 0.0
    %3585 = vmatpush1.msra.mxu0 0.0
    %3586 = vmatprep.subr.mxu0 0.0
    %3587 = vmatpush1.msra.mxu0 0.0
    %3588 = vmatprep.subr.mxu0 0.0
    %v3589 = vand.u32 %v16, 4294901760
    %v3590 = vsub.f32 %v16, %v3589
    %v3591 = vand.u32 %v3590, 4294901760
    %v3592 = vsub.f32 %v3590, %v3591
    %v3593 = vand.u32 %v3592, 4294901760
    %3594 = vmatpush1.msra.mxu0 %v3593
    %3595 = vmatprep.subr.mxu0 0.0
    %v3596 = vand.u32 %v15, 4294901760
    %v3597 = vsub.f32 %v15, %v3596
    %v3598 = vand.u32 %v3597, 4294901760
    %v3599 = vsub.f32 %v3597, %v3598
    %v3600 = vand.u32 %v3599, 4294901760
    %3601 = vmatpush1.msra.mxu0 %v3600
    %3602 = vmatprep.subr.mxu0 0.0
    %v3603 = vand.u32 %v14, 4294901760
    %v3604 = vsub.f32 %v14, %v3603
    %v3605 = vand.u32 %v3604, 4294901760
    %v3606 = vsub.f32 %v3604, %v3605
    %v3607 = vand.u32 %v3606, 4294901760
    %3608 = vmatpush1.msra.mxu0 %v3607
    %3609 = vmatprep.subr.mxu0 0.0
    %v3610 = vand.u32 %v13, 4294901760
    %v3611 = vsub.f32 %v13, %v3610
    %v3612 = vand.u32 %v3611, 4294901760
    %v3613 = vsub.f32 %v3611, %v3612
    %v3614 = vand.u32 %v3613, 4294901760
    %3615 = vmatpush1.msra.mxu0 %v3614
    %3616 = vmatprep.subr.mxu0 0.0
    %3617 = vmatpush2.msra.mxu0 0.0
    %3618 = vmatprep.subr.mxu0 0.0
    %3619 = vmatpush2.msra.mxu0 0.0
    %3620 = vmatprep.subr.mxu0 0.0
    %3621 = vmatpush2.msra.mxu0 0.0
    %3622 = vmatprep.subr.mxu0 0.0
    %3623 = vmatpush2.msra.mxu0 0.0
    %3624 = vmatprep.subr.mxu0 0.0
    %3625 = vmatpush2.msra.mxu0 0.0
    %3626 = vmatprep.subr.mxu0 0.0
    %3627 = vmatpush2.msra.mxu0 0.0
    %3628 = vmatprep.subr.mxu0 0.0
    %3629 = vmatpush2.msra.mxu0 0.0
    %3630 = vmatprep.subr.mxu0 0.0
    %3631 = vmatpush2.msra.mxu0 0.0
    %3632 = vmatprep.subr.mxu0 0.0
    %3633 = vmatpush2.msra.mxu0 0.0
    %3634 = vmatprep.subr.mxu0 0.0
    %3635 = vmatpush2.msra.mxu0 0.0
    %3636 = vmatprep.subr.mxu0 0.0
    %3637 = vmatpush2.msra.mxu0 0.0
    %3638 = vmatprep.subr.mxu0 0.0
    %3639 = vmatpush2.msra.mxu0 0.0
    %3640 = vmatprep.subr.mxu0 0.0
    %3641 = vmatpush2.msra.mxu0 0.0
    %3642 = vmatprep.subr.mxu0 0.0
    %3643 = vmatpush2.msra.mxu0 0.0
    %3644 = vmatprep.subr.mxu0 0.0
    %3645 = vmatpush2.msra.mxu0 0.0
    %3646 = vmatprep.subr.mxu0 0.0
    %3647 = vmatpush2.msra.mxu0 0.0
    %3648 = vmatprep.mubr.f32.mxu0 0.0
    %v3649 = vand.u32 %v3483, 4294901760
    %3650 = vmatmul.mubr.f32.gmra.mxu0 %v3649
    %v3651 = vpop.f32.mrf.mxu0
    %v3652 = vadd.f32 %v3561, %v3651
    %v3653 = vpop.f32.mrf.mxu0
    %3654 = vdwg.mxu0
    %3655 = vmatprep.subr.mxu0 0.0
    %3656 = vmatpush1.msra.mxu0 0.0
    %3657 = vmatprep.subr.mxu0 0.0
    %3658 = vmatpush1.msra.mxu0 0.0
    %3659 = vmatprep.subr.mxu0 0.0
    %3660 = vmatpush1.msra.mxu0 0.0
    %3661 = vmatprep.subr.mxu0 0.0
    %3662 = vmatpush1.msra.mxu0 0.0
    %3663 = vmatprep.subr.mxu0 0.0
    %3664 = vmatpush1.msra.mxu0 0.0
    %3665 = vmatprep.subr.mxu0 0.0
    %3666 = vmatpush1.msra.mxu0 0.0
    %3667 = vmatprep.subr.mxu0 0.0
    %3668 = vmatpush1.msra.mxu0 0.0
    %3669 = vmatprep.subr.mxu0 0.0
    %3670 = vmatpush1.msra.mxu0 0.0
    %3671 = vmatprep.subr.mxu0 0.0
    %3672 = vmatpush1.msra.mxu0 0.0
    %3673 = vmatprep.subr.mxu0 0.0
    %3674 = vmatpush1.msra.mxu0 0.0
    %3675 = vmatprep.subr.mxu0 0.0
    %3676 = vmatpush1.msra.mxu0 0.0
    %3677 = vmatprep.subr.mxu0 0.0
    %3678 = vmatpush1.msra.mxu0 0.0
    %3679 = vmatprep.subr.mxu0 0.0
    %v3680 = vand.u32 %v16, 4294901760
    %v3681 = vsub.f32 %v16, %v3680
    %3682 = vmatpush1.msra.mxu0 %v3681
    %3683 = vmatprep.subr.mxu0 0.0
    %v3684 = vand.u32 %v15, 4294901760
    %v3685 = vsub.f32 %v15, %v3684
    %3686 = vmatpush1.msra.mxu0 %v3685
    %3687 = vmatprep.subr.mxu0 0.0
    %v3688 = vand.u32 %v14, 4294901760
    %v3689 = vsub.f32 %v14, %v3688
    %3690 = vmatpush1.msra.mxu0 %v3689
    %3691 = vmatprep.subr.mxu0 0.0
    %v3692 = vand.u32 %v13, 4294901760
    %v3693 = vsub.f32 %v13, %v3692
    %3694 = vmatpush1.msra.mxu0 %v3693
    %3695 = vmatprep.subr.mxu0 0.0
    %3696 = vmatpush2.msra.mxu0 0.0
    %3697 = vmatprep.subr.mxu0 0.0
    %3698 = vmatpush2.msra.mxu0 0.0
    %3699 = vmatprep.subr.mxu0 0.0
    %3700 = vmatpush2.msra.mxu0 0.0
    %3701 = vmatprep.subr.mxu0 0.0
    %3702 = vmatpush2.msra.mxu0 0.0
    %3703 = vmatprep.subr.mxu0 0.0
    %3704 = vmatpush2.msra.mxu0 0.0
    %3705 = vmatprep.subr.mxu0 0.0
    %3706 = vmatpush2.msra.mxu0 0.0
    %3707 = vmatprep.subr.mxu0 0.0
    %3708 = vmatpush2.msra.mxu0 0.0
    %3709 = vmatprep.subr.mxu0 0.0
    %3710 = vmatpush2.msra.mxu0 0.0
    %3711 = vmatprep.subr.mxu0 0.0
    %3712 = vmatpush2.msra.mxu0 0.0
    %3713 = vmatprep.subr.mxu0 0.0
    %3714 = vmatpush2.msra.mxu0 0.0
    %3715 = vmatprep.subr.mxu0 0.0
    %3716 = vmatpush2.msra.mxu0 0.0
    %3717 = vmatprep.subr.mxu0 0.0
    %3718 = vmatpush2.msra.mxu0 0.0
    %3719 = vmatprep.subr.mxu0 0.0
    %3720 = vmatpush2.msra.mxu0 0.0
    %3721 = vmatprep.subr.mxu0 0.0
    %3722 = vmatpush2.msra.mxu0 0.0
    %3723 = vmatprep.subr.mxu0 0.0
    %3724 = vmatpush2.msra.mxu0 0.0
    %3725 = vmatprep.subr.mxu0 0.0
    %3726 = vmatpush2.msra.mxu0 0.0
    %3727 = vmatprep.mubr.f32.mxu0 0.0
    %v3728 = vand.u32 %v3483, 4294901760
    %v3729 = vsub.f32 %v3483, %v3728
    %3730 = vmatmul.mubr.f32.gmra.mxu0 %v3729
    %v3731 = vpop.f32.mrf.mxu0
    %v3732 = vadd.f32 %v3652, %v3731
    %v3733 = vpop.f32.mrf.mxu0
    %3734 = vdwg.mxu0
    %3735 = vmatprep.subr.mxu0 0.0
    %3736 = vmatpush1.msra.mxu0 0.0
    %3737 = vmatprep.subr.mxu0 0.0
    %3738 = vmatpush1.msra.mxu0 0.0
    %3739 = vmatprep.subr.mxu0 0.0
    %3740 = vmatpush1.msra.mxu0 0.0
    %3741 = vmatprep.subr.mxu0 0.0
    %3742 = vmatpush1.msra.mxu0 0.0
    %3743 = vmatprep.subr.mxu0 0.0
    %3744 = vmatpush1.msra.mxu0 0.0
    %3745 = vmatprep.subr.mxu0 0.0
    %3746 = vmatpush1.msra.mxu0 0.0
    %3747 = vmatprep.subr.mxu0 0.0
    %3748 = vmatpush1.msra.mxu0 0.0
    %3749 = vmatprep.subr.mxu0 0.0
    %3750 = vmatpush1.msra.mxu0 0.0
    %3751 = vmatprep.subr.mxu0 0.0
    %3752 = vmatpush1.msra.mxu0 0.0
    %3753 = vmatprep.subr.mxu0 0.0
    %3754 = vmatpush1.msra.mxu0 0.0
    %3755 = vmatprep.subr.mxu0 0.0
    %3756 = vmatpush1.msra.mxu0 0.0
    %3757 = vmatprep.subr.mxu0 0.0
    %3758 = vmatpush1.msra.mxu0 0.0
    %3759 = vmatprep.subr.mxu0 0.0
    %v3760 = vand.u32 %v16, 4294901760
    %3761 = vmatpush1.msra.mxu0 %v3760
    %3762 = vmatprep.subr.mxu0 0.0
    %v3763 = vand.u32 %v15, 4294901760
    %3764 = vmatpush1.msra.mxu0 %v3763
    %3765 = vmatprep.subr.mxu0 0.0
    %v3766 = vand.u32 %v14, 4294901760
    %3767 = vmatpush1.msra.mxu0 %v3766
    %3768 = vmatprep.subr.mxu0 0.0
    %v3769 = vand.u32 %v13, 4294901760
    %3770 = vmatpush1.msra.mxu0 %v3769
    %3771 = vmatprep.subr.mxu0 0.0
    %3772 = vmatpush2.msra.mxu0 0.0
    %3773 = vmatprep.subr.mxu0 0.0
    %3774 = vmatpush2.msra.mxu0 0.0
    %3775 = vmatprep.subr.mxu0 0.0
    %3776 = vmatpush2.msra.mxu0 0.0
    %3777 = vmatprep.subr.mxu0 0.0
    %3778 = vmatpush2.msra.mxu0 0.0
    %3779 = vmatprep.subr.mxu0 0.0
    %3780 = vmatpush2.msra.mxu0 0.0
    %3781 = vmatprep.subr.mxu0 0.0
    %3782 = vmatpush2.msra.mxu0 0.0
    %3783 = vmatprep.subr.mxu0 0.0
    %3784 = vmatpush2.msra.mxu0 0.0
    %3785 = vmatprep.subr.mxu0 0.0
    %3786 = vmatpush2.msra.mxu0 0.0
    %3787 = vmatprep.subr.mxu0 0.0
    %3788 = vmatpush2.msra.mxu0 0.0
    %3789 = vmatprep.subr.mxu0 0.0
    %3790 = vmatpush2.msra.mxu0 0.0
    %3791 = vmatprep.subr.mxu0 0.0
    %3792 = vmatpush2.msra.mxu0 0.0
    %3793 = vmatprep.subr.mxu0 0.0
    %3794 = vmatpush2.msra.mxu0 0.0
    %3795 = vmatprep.subr.mxu0 0.0
    %3796 = vmatpush2.msra.mxu0 0.0
    %3797 = vmatprep.subr.mxu0 0.0
    %3798 = vmatpush2.msra.mxu0 0.0
    %3799 = vmatprep.subr.mxu0 0.0
    %3800 = vmatpush2.msra.mxu0 0.0
    %3801 = vmatprep.subr.mxu0 0.0
    %3802 = vmatpush2.msra.mxu0 0.0
    %3803 = vmatprep.mubr.f32.mxu0 0.0
    %v3804 = vand.u32 %v3483, 4294901760
    %v3805 = vsub.f32 %v3483, %v3804
    %v3806 = vand.u32 %v3805, 4294901760
    %3807 = vmatmul.mubr.f32.gmra.mxu0 %v3806
    %v3808 = vpop.f32.mrf.mxu0
    %v3809 = vadd.f32 %v3732, %v3808
    %v3810 = vpop.f32.mrf.mxu0
    %3811 = vdwg.mxu0
    %3812 = vmatprep.subr.mxu0 0.0
    %3813 = vmatpush1.msra.mxu0 0.0
    %3814 = vmatprep.subr.mxu0 0.0
    %3815 = vmatpush1.msra.mxu0 0.0
    %3816 = vmatprep.subr.mxu0 0.0
    %3817 = vmatpush1.msra.mxu0 0.0
    %3818 = vmatprep.subr.mxu0 0.0
    %3819 = vmatpush1.msra.mxu0 0.0
    %3820 = vmatprep.subr.mxu0 0.0
    %3821 = vmatpush1.msra.mxu0 0.0
    %3822 = vmatprep.subr.mxu0 0.0
    %3823 = vmatpush1.msra.mxu0 0.0
    %3824 = vmatprep.subr.mxu0 0.0
    %3825 = vmatpush1.msra.mxu0 0.0
    %3826 = vmatprep.subr.mxu0 0.0
    %3827 = vmatpush1.msra.mxu0 0.0
    %3828 = vmatprep.subr.mxu0 0.0
    %3829 = vmatpush1.msra.mxu0 0.0
    %3830 = vmatprep.subr.mxu0 0.0
    %3831 = vmatpush1.msra.mxu0 0.0
    %3832 = vmatprep.subr.mxu0 0.0
    %3833 = vmatpush1.msra.mxu0 0.0
    %3834 = vmatprep.subr.mxu0 0.0
    %3835 = vmatpush1.msra.mxu0 0.0
    %3836 = vmatprep.subr.mxu0 0.0
    %v3837 = vand.u32 %v16, 4294901760
    %v3838 = vsub.f32 %v16, %v3837
    %v3839 = vand.u32 %v3838, 4294901760
    %3840 = vmatpush1.msra.mxu0 %v3839
    %3841 = vmatprep.subr.mxu0 0.0
    %v3842 = vand.u32 %v15, 4294901760
    %v3843 = vsub.f32 %v15, %v3842
    %v3844 = vand.u32 %v3843, 4294901760
    %3845 = vmatpush1.msra.mxu0 %v3844
    %3846 = vmatprep.subr.mxu0 0.0
    %v3847 = vand.u32 %v14, 4294901760
    %v3848 = vsub.f32 %v14, %v3847
    %v3849 = vand.u32 %v3848, 4294901760
    %3850 = vmatpush1.msra.mxu0 %v3849
    %3851 = vmatprep.subr.mxu0 0.0
    %v3852 = vand.u32 %v13, 4294901760
    %v3853 = vsub.f32 %v13, %v3852
    %v3854 = vand.u32 %v3853, 4294901760
    %3855 = vmatpush1.msra.mxu0 %v3854
    %3856 = vmatprep.subr.mxu0 0.0
    %3857 = vmatpush2.msra.mxu0 0.0
    %3858 = vmatprep.subr.mxu0 0.0
    %3859 = vmatpush2.msra.mxu0 0.0
    %3860 = vmatprep.subr.mxu0 0.0
    %3861 = vmatpush2.msra.mxu0 0.0
    %3862 = vmatprep.subr.mxu0 0.0
    %3863 = vmatpush2.msra.mxu0 0.0
    %3864 = vmatprep.subr.mxu0 0.0
    %3865 = vmatpush2.msra.mxu0 0.0
    %3866 = vmatprep.subr.mxu0 0.0
    %3867 = vmatpush2.msra.mxu0 0.0
    %3868 = vmatprep.subr.mxu0 0.0
    %3869 = vmatpush2.msra.mxu0 0.0
    %3870 = vmatprep.subr.mxu0 0.0
    %3871 = vmatpush2.msra.mxu0 0.0
    %3872 = vmatprep.subr.mxu0 0.0
    %3873 = vmatpush2.msra.mxu0 0.0
    %3874 = vmatprep.subr.mxu0 0.0
    %3875 = vmatpush2.msra.mxu0 0.0
    %3876 = vmatprep.subr.mxu0 0.0
    %3877 = vmatpush2.msra.mxu0 0.0
    %3878 = vmatprep.subr.mxu0 0.0
    %3879 = vmatpush2.msra.mxu0 0.0
    %3880 = vmatprep.subr.mxu0 0.0
    %3881 = vmatpush2.msra.mxu0 0.0
    %3882 = vmatprep.subr.mxu0 0.0
    %3883 = vmatpush2.msra.mxu0 0.0
    %3884 = vmatprep.subr.mxu0 0.0
    %3885 = vmatpush2.msra.mxu0 0.0
    %3886 = vmatprep.subr.mxu0 0.0
    %3887 = vmatpush2.msra.mxu0 0.0
    %3888 = vmatprep.mubr.f32.mxu0 0.0
    %v3889 = vand.u32 %v3483, 4294901760
    %3890 = vmatmul.mubr.f32.gmra.mxu0 %v3889
    %v3891 = vpop.f32.mrf.mxu0
    %v3892 = vadd.f32 %v3809, %v3891
    %v3893 = vpop.f32.mrf.mxu0
    %3894 = vdwg.mxu0
    %3895 = vmatprep.subr.mxu0 0.0
    %3896 = vmatpush1.msra.mxu0 0.0
    %3897 = vmatprep.subr.mxu0 0.0
    %3898 = vmatpush1.msra.mxu0 0.0
    %3899 = vmatprep.subr.mxu0 0.0
    %3900 = vmatpush1.msra.mxu0 0.0
    %3901 = vmatprep.subr.mxu0 0.0
    %3902 = vmatpush1.msra.mxu0 0.0
    %3903 = vmatprep.subr.mxu0 0.0
    %3904 = vmatpush1.msra.mxu0 0.0
    %3905 = vmatprep.subr.mxu0 0.0
    %3906 = vmatpush1.msra.mxu0 0.0
    %3907 = vmatprep.subr.mxu0 0.0
    %3908 = vmatpush1.msra.mxu0 0.0
    %3909 = vmatprep.subr.mxu0 0.0
    %3910 = vmatpush1.msra.mxu0 0.0
    %3911 = vmatprep.subr.mxu0 0.0
    %3912 = vmatpush1.msra.mxu0 0.0
    %3913 = vmatprep.subr.mxu0 0.0
    %3914 = vmatpush1.msra.mxu0 0.0
    %3915 = vmatprep.subr.mxu0 0.0
    %3916 = vmatpush1.msra.mxu0 0.0
    %3917 = vmatprep.subr.mxu0 0.0
    %3918 = vmatpush1.msra.mxu0 0.0
    %3919 = vmatprep.subr.mxu0 0.0
    %v3920 = vand.u32 %v16, 4294901760
    %3921 = vmatpush1.msra.mxu0 %v3920
    %3922 = vmatprep.subr.mxu0 0.0
    %v3923 = vand.u32 %v15, 4294901760
    %3924 = vmatpush1.msra.mxu0 %v3923
    %3925 = vmatprep.subr.mxu0 0.0
    %v3926 = vand.u32 %v14, 4294901760
    %3927 = vmatpush1.msra.mxu0 %v3926
    %3928 = vmatprep.subr.mxu0 0.0
    %v3929 = vand.u32 %v13, 4294901760
    %3930 = vmatpush1.msra.mxu0 %v3929
    %3931 = vmatprep.subr.mxu0 0.0
    %3932 = vmatpush2.msra.mxu0 0.0
    %3933 = vmatprep.subr.mxu0 0.0
    %3934 = vmatpush2.msra.mxu0 0.0
    %3935 = vmatprep.subr.mxu0 0.0
    %3936 = vmatpush2.msra.mxu0 0.0
    %3937 = vmatprep.subr.mxu0 0.0
    %3938 = vmatpush2.msra.mxu0 0.0
    %3939 = vmatprep.subr.mxu0 0.0
    %3940 = vmatpush2.msra.mxu0 0.0
    %3941 = vmatprep.subr.mxu0 0.0
    %3942 = vmatpush2.msra.mxu0 0.0
    %3943 = vmatprep.subr.mxu0 0.0
    %3944 = vmatpush2.msra.mxu0 0.0
    %3945 = vmatprep.subr.mxu0 0.0
    %3946 = vmatpush2.msra.mxu0 0.0
    %3947 = vmatprep.subr.mxu0 0.0
    %3948 = vmatpush2.msra.mxu0 0.0
    %3949 = vmatprep.subr.mxu0 0.0
    %3950 = vmatpush2.msra.mxu0 0.0
    %3951 = vmatprep.subr.mxu0 0.0
    %3952 = vmatpush2.msra.mxu0 0.0
    %3953 = vmatprep.subr.mxu0 0.0
    %3954 = vmatpush2.msra.mxu0 0.0
    %3955 = vmatprep.subr.mxu0 0.0
    %3956 = vmatpush2.msra.mxu0 0.0
    %3957 = vmatprep.subr.mxu0 0.0
    %3958 = vmatpush2.msra.mxu0 0.0
    %3959 = vmatprep.subr.mxu0 0.0
    %3960 = vmatpush2.msra.mxu0 0.0
    %3961 = vmatprep.subr.mxu0 0.0
    %3962 = vmatpush2.msra.mxu0 0.0
    %3963 = vmatprep.mubr.f32.mxu0 0.0
    %v3964 = vand.u32 %v3483, 4294901760
    %3965 = vmatmul.mubr.f32.gmra.mxu0 %v3964
    %v3966 = vpop.f32.mrf.mxu0
    %v3967 = vadd.f32 %v3892, %v3966
    %v3968 = vpop.f32.mrf.mxu0
    %3969 = vdwg.mxu0
    %v3971 = vrot.slane %v3967, 4
    %v3973 = vadd.f32 %v522, %v3971
    %v3974 = vtanh.pop %v3973
    %v3976 = vrot.slane %v3974, 4
    %v3977 = vsel %vm525, %v3976, 0
    %3979 = vmatprep.subr.mxu0 0.0
    %3980 = vmatpush1.msra.mxu0 0.0
    %3981 = vmatprep.subr.mxu0 0.0
    %3982 = vmatpush1.msra.mxu0 0.0
    %3983 = vmatprep.subr.mxu0 0.0
    %3984 = vmatpush1.msra.mxu0 0.0
    %3985 = vmatprep.subr.mxu0 0.0
    %3986 = vmatpush1.msra.mxu0 0.0
    %3987 = vmatprep.subr.mxu0 0.0
    %3988 = vmatpush1.msra.mxu0 0.0
    %3989 = vmatprep.subr.mxu0 0.0
    %3990 = vmatpush1.msra.mxu0 0.0
    %3991 = vmatprep.subr.mxu0 0.0
    %3992 = vmatpush1.msra.mxu0 0.0
    %3993 = vmatprep.subr.mxu0 0.0
    %3994 = vmatpush1.msra.mxu0 0.0
    %3995 = vmatprep.subr.mxu0 0.0
    %3996 = vmatpush1.msra.mxu0 0.0
    %3997 = vmatprep.subr.mxu0 0.0
    %3998 = vmatpush1.msra.mxu0 0.0
    %3999 = vmatprep.subr.mxu0 0.0
    %4000 = vmatpush1.msra.mxu0 0.0
    %4001 = vmatprep.subr.mxu0 0.0
    %4002 = vmatpush1.msra.mxu0 0.0
    %4003 = vmatprep.subr.mxu0 0.0
    %v4004 = vand.u32 %v16, 4294901760
    %4005 = vmatpush1.msra.mxu0 %v4004
    %4006 = vmatprep.subr.mxu0 0.0
    %v4007 = vand.u32 %v15, 4294901760
    %4008 = vmatpush1.msra.mxu0 %v4007
    %4009 = vmatprep.subr.mxu0 0.0
    %v4010 = vand.u32 %v14, 4294901760
    %4011 = vmatpush1.msra.mxu0 %v4010
    %4012 = vmatprep.subr.mxu0 0.0
    %v4013 = vand.u32 %v13, 4294901760
    %4014 = vmatpush1.msra.mxu0 %v4013
    %4015 = vmatprep.subr.mxu0 0.0
    %4016 = vmatpush2.msra.mxu0 0.0
    %4017 = vmatprep.subr.mxu0 0.0
    %4018 = vmatpush2.msra.mxu0 0.0
    %4019 = vmatprep.subr.mxu0 0.0
    %4020 = vmatpush2.msra.mxu0 0.0
    %4021 = vmatprep.subr.mxu0 0.0
    %4022 = vmatpush2.msra.mxu0 0.0
    %4023 = vmatprep.subr.mxu0 0.0
    %4024 = vmatpush2.msra.mxu0 0.0
    %4025 = vmatprep.subr.mxu0 0.0
    %4026 = vmatpush2.msra.mxu0 0.0
    %4027 = vmatprep.subr.mxu0 0.0
    %4028 = vmatpush2.msra.mxu0 0.0
    %4029 = vmatprep.subr.mxu0 0.0
    %4030 = vmatpush2.msra.mxu0 0.0
    %4031 = vmatprep.subr.mxu0 0.0
    %4032 = vmatpush2.msra.mxu0 0.0
    %4033 = vmatprep.subr.mxu0 0.0
    %4034 = vmatpush2.msra.mxu0 0.0
    %4035 = vmatprep.subr.mxu0 0.0
    %4036 = vmatpush2.msra.mxu0 0.0
    %4037 = vmatprep.subr.mxu0 0.0
    %4038 = vmatpush2.msra.mxu0 0.0
    %4039 = vmatprep.subr.mxu0 0.0
    %4040 = vmatpush2.msra.mxu0 0.0
    %4041 = vmatprep.subr.mxu0 0.0
    %4042 = vmatpush2.msra.mxu0 0.0
    %4043 = vmatprep.subr.mxu0 0.0
    %4044 = vmatpush2.msra.mxu0 0.0
    %4045 = vmatprep.subr.mxu0 0.0
    %4046 = vmatpush2.msra.mxu0 0.0
    %4047 = vmatprep.mubr.f32.mxu0 0.0
    %v4048 = vand.u32 %v3977, 4294901760
    %v4049 = vsub.f32 %v3977, %v4048
    %v4050 = vand.u32 %v4049, 4294901760
    %v4051 = vsub.f32 %v4049, %v4050
    %v4052 = vand.u32 %v4051, 4294901760
    %4053 = vmatmul.mubr.f32.gmra.mxu0 %v4052
    %v4054 = vpop.f32.mrf.mxu0
    %v4055 = vadd.f32 0.0, %v4054
    %v4056 = vpop.f32.mrf.mxu0
    %4057 = vdwg.mxu0
    %4058 = vmatprep.subr.mxu0 0.0
    %4059 = vmatpush1.msra.mxu0 0.0
    %4060 = vmatprep.subr.mxu0 0.0
    %4061 = vmatpush1.msra.mxu0 0.0
    %4062 = vmatprep.subr.mxu0 0.0
    %4063 = vmatpush1.msra.mxu0 0.0
    %4064 = vmatprep.subr.mxu0 0.0
    %4065 = vmatpush1.msra.mxu0 0.0
    %4066 = vmatprep.subr.mxu0 0.0
    %4067 = vmatpush1.msra.mxu0 0.0
    %4068 = vmatprep.subr.mxu0 0.0
    %4069 = vmatpush1.msra.mxu0 0.0
    %4070 = vmatprep.subr.mxu0 0.0
    %4071 = vmatpush1.msra.mxu0 0.0
    %4072 = vmatprep.subr.mxu0 0.0
    %4073 = vmatpush1.msra.mxu0 0.0
    %4074 = vmatprep.subr.mxu0 0.0
    %4075 = vmatpush1.msra.mxu0 0.0
    %4076 = vmatprep.subr.mxu0 0.0
    %4077 = vmatpush1.msra.mxu0 0.0
    %4078 = vmatprep.subr.mxu0 0.0
    %4079 = vmatpush1.msra.mxu0 0.0
    %4080 = vmatprep.subr.mxu0 0.0
    %4081 = vmatpush1.msra.mxu0 0.0
    %4082 = vmatprep.subr.mxu0 0.0
    %v4083 = vand.u32 %v16, 4294901760
    %v4084 = vsub.f32 %v16, %v4083
    %v4085 = vand.u32 %v4084, 4294901760
    %v4086 = vsub.f32 %v4084, %v4085
    %v4087 = vand.u32 %v4086, 4294901760
    %4088 = vmatpush1.msra.mxu0 %v4087
    %4089 = vmatprep.subr.mxu0 0.0
    %v4090 = vand.u32 %v15, 4294901760
    %v4091 = vsub.f32 %v15, %v4090
    %v4092 = vand.u32 %v4091, 4294901760
    %v4093 = vsub.f32 %v4091, %v4092
    %v4094 = vand.u32 %v4093, 4294901760
    %4095 = vmatpush1.msra.mxu0 %v4094
    %4096 = vmatprep.subr.mxu0 0.0
    %v4097 = vand.u32 %v14, 4294901760
    %v4098 = vsub.f32 %v14, %v4097
    %v4099 = vand.u32 %v4098, 4294901760
    %v4100 = vsub.f32 %v4098, %v4099
    %v4101 = vand.u32 %v4100, 4294901760
    %4102 = vmatpush1.msra.mxu0 %v4101
    %4103 = vmatprep.subr.mxu0 0.0
    %v4104 = vand.u32 %v13, 4294901760
    %v4105 = vsub.f32 %v13, %v4104
    %v4106 = vand.u32 %v4105, 4294901760
    %v4107 = vsub.f32 %v4105, %v4106
    %v4108 = vand.u32 %v4107, 4294901760
    %4109 = vmatpush1.msra.mxu0 %v4108
    %4110 = vmatprep.subr.mxu0 0.0
    %4111 = vmatpush2.msra.mxu0 0.0
    %4112 = vmatprep.subr.mxu0 0.0
    %4113 = vmatpush2.msra.mxu0 0.0
    %4114 = vmatprep.subr.mxu0 0.0
    %4115 = vmatpush2.msra.mxu0 0.0
    %4116 = vmatprep.subr.mxu0 0.0
    %4117 = vmatpush2.msra.mxu0 0.0
    %4118 = vmatprep.subr.mxu0 0.0
    %4119 = vmatpush2.msra.mxu0 0.0
    %4120 = vmatprep.subr.mxu0 0.0
    %4121 = vmatpush2.msra.mxu0 0.0
    %4122 = vmatprep.subr.mxu0 0.0
    %4123 = vmatpush2.msra.mxu0 0.0
    %4124 = vmatprep.subr.mxu0 0.0
    %4125 = vmatpush2.msra.mxu0 0.0
    %4126 = vmatprep.subr.mxu0 0.0
    %4127 = vmatpush2.msra.mxu0 0.0
    %4128 = vmatprep.subr.mxu0 0.0
    %4129 = vmatpush2.msra.mxu0 0.0
    %4130 = vmatprep.subr.mxu0 0.0
    %4131 = vmatpush2.msra.mxu0 0.0
    %4132 = vmatprep.subr.mxu0 0.0
    %4133 = vmatpush2.msra.mxu0 0.0
    %4134 = vmatprep.subr.mxu0 0.0
    %4135 = vmatpush2.msra.mxu0 0.0
    %4136 = vmatprep.subr.mxu0 0.0
    %4137 = vmatpush2.msra.mxu0 0.0
    %4138 = vmatprep.subr.mxu0 0.0
    %4139 = vmatpush2.msra.mxu0 0.0
    %4140 = vmatprep.subr.mxu0 0.0
    %4141 = vmatpush2.msra.mxu0 0.0
    %4142 = vmatprep.mubr.f32.mxu0 0.0
    %v4143 = vand.u32 %v3977, 4294901760
    %4144 = vmatmul.mubr.f32.gmra.mxu0 %v4143
    %v4145 = vpop.f32.mrf.mxu0
    %v4146 = vadd.f32 %v4055, %v4145
    %v4147 = vpop.f32.mrf.mxu0
    %4148 = vdwg.mxu0
    %4149 = vmatprep.subr.mxu0 0.0
    %4150 = vmatpush1.msra.mxu0 0.0
    %4151 = vmatprep.subr.mxu0 0.0
    %4152 = vmatpush1.msra.mxu0 0.0
    %4153 = vmatprep.subr.mxu0 0.0
    %4154 = vmatpush1.msra.mxu0 0.0
    %4155 = vmatprep.subr.mxu0 0.0
    %4156 = vmatpush1.msra.mxu0 0.0
    %4157 = vmatprep.subr.mxu0 0.0
    %4158 = vmatpush1.msra.mxu0 0.0
    %4159 = vmatprep.subr.mxu0 0.0
    %4160 = vmatpush1.msra.mxu0 0.0
    %4161 = vmatprep.subr.mxu0 0.0
    %4162 = vmatpush1.msra.mxu0 0.0
    %4163 = vmatprep.subr.mxu0 0.0
    %4164 = vmatpush1.msra.mxu0 0.0
    %4165 = vmatprep.subr.mxu0 0.0
    %4166 = vmatpush1.msra.mxu0 0.0
    %4167 = vmatprep.subr.mxu0 0.0
    %4168 = vmatpush1.msra.mxu0 0.0
    %4169 = vmatprep.subr.mxu0 0.0
    %4170 = vmatpush1.msra.mxu0 0.0
    %4171 = vmatprep.subr.mxu0 0.0
    %4172 = vmatpush1.msra.mxu0 0.0
    %4173 = vmatprep.subr.mxu0 0.0
    %v4174 = vand.u32 %v16, 4294901760
    %v4175 = vsub.f32 %v16, %v4174
    %4176 = vmatpush1.msra.mxu0 %v4175
    %4177 = vmatprep.subr.mxu0 0.0
    %v4178 = vand.u32 %v15, 4294901760
    %v4179 = vsub.f32 %v15, %v4178
    %4180 = vmatpush1.msra.mxu0 %v4179
    %4181 = vmatprep.subr.mxu0 0.0
    %v4182 = vand.u32 %v14, 4294901760
    %v4183 = vsub.f32 %v14, %v4182
    %4184 = vmatpush1.msra.mxu0 %v4183
    %4185 = vmatprep.subr.mxu0 0.0
    %v4186 = vand.u32 %v13, 4294901760
    %v4187 = vsub.f32 %v13, %v4186
    %4188 = vmatpush1.msra.mxu0 %v4187
    %4189 = vmatprep.subr.mxu0 0.0
    %4190 = vmatpush2.msra.mxu0 0.0
    %4191 = vmatprep.subr.mxu0 0.0
    %4192 = vmatpush2.msra.mxu0 0.0
    %4193 = vmatprep.subr.mxu0 0.0
    %4194 = vmatpush2.msra.mxu0 0.0
    %4195 = vmatprep.subr.mxu0 0.0
    %4196 = vmatpush2.msra.mxu0 0.0
    %4197 = vmatprep.subr.mxu0 0.0
    %4198 = vmatpush2.msra.mxu0 0.0
    %4199 = vmatprep.subr.mxu0 0.0
    %4200 = vmatpush2.msra.mxu0 0.0
    %4201 = vmatprep.subr.mxu0 0.0
    %4202 = vmatpush2.msra.mxu0 0.0
    %4203 = vmatprep.subr.mxu0 0.0
    %4204 = vmatpush2.msra.mxu0 0.0
    %4205 = vmatprep.subr.mxu0 0.0
    %4206 = vmatpush2.msra.mxu0 0.0
    %4207 = vmatprep.subr.mxu0 0.0
    %4208 = vmatpush2.msra.mxu0 0.0
    %4209 = vmatprep.subr.mxu0 0.0
    %4210 = vmatpush2.msra.mxu0 0.0
    %4211 = vmatprep.subr.mxu0 0.0
    %4212 = vmatpush2.msra.mxu0 0.0
    %4213 = vmatprep.subr.mxu0 0.0
    %4214 = vmatpush2.msra.mxu0 0.0
    %4215 = vmatprep.subr.mxu0 0.0
    %4216 = vmatpush2.msra.mxu0 0.0
    %4217 = vmatprep.subr.mxu0 0.0
    %4218 = vmatpush2.msra.mxu0 0.0
    %4219 = vmatprep.subr.mxu0 0.0
    %4220 = vmatpush2.msra.mxu0 0.0
    %4221 = vmatprep.mubr.f32.mxu0 0.0
    %v4222 = vand.u32 %v3977, 4294901760
    %v4223 = vsub.f32 %v3977, %v4222
    %4224 = vmatmul.mubr.f32.gmra.mxu0 %v4223
    %v4225 = vpop.f32.mrf.mxu0
    %v4226 = vadd.f32 %v4146, %v4225
    %v4227 = vpop.f32.mrf.mxu0
    %4228 = vdwg.mxu0
    %4229 = vmatprep.subr.mxu0 0.0
    %4230 = vmatpush1.msra.mxu0 0.0
    %4231 = vmatprep.subr.mxu0 0.0
    %4232 = vmatpush1.msra.mxu0 0.0
    %4233 = vmatprep.subr.mxu0 0.0
    %4234 = vmatpush1.msra.mxu0 0.0
    %4235 = vmatprep.subr.mxu0 0.0
    %4236 = vmatpush1.msra.mxu0 0.0
    %4237 = vmatprep.subr.mxu0 0.0
    %4238 = vmatpush1.msra.mxu0 0.0
    %4239 = vmatprep.subr.mxu0 0.0
    %4240 = vmatpush1.msra.mxu0 0.0
    %4241 = vmatprep.subr.mxu0 0.0
    %4242 = vmatpush1.msra.mxu0 0.0
    %4243 = vmatprep.subr.mxu0 0.0
    %4244 = vmatpush1.msra.mxu0 0.0
    %4245 = vmatprep.subr.mxu0 0.0
    %4246 = vmatpush1.msra.mxu0 0.0
    %4247 = vmatprep.subr.mxu0 0.0
    %4248 = vmatpush1.msra.mxu0 0.0
    %4249 = vmatprep.subr.mxu0 0.0
    %4250 = vmatpush1.msra.mxu0 0.0
    %4251 = vmatprep.subr.mxu0 0.0
    %4252 = vmatpush1.msra.mxu0 0.0
    %4253 = vmatprep.subr.mxu0 0.0
    %v4254 = vand.u32 %v16, 4294901760
    %4255 = vmatpush1.msra.mxu0 %v4254
    %4256 = vmatprep.subr.mxu0 0.0
    %v4257 = vand.u32 %v15, 4294901760
    %4258 = vmatpush1.msra.mxu0 %v4257
    %4259 = vmatprep.subr.mxu0 0.0
    %v4260 = vand.u32 %v14, 4294901760
    %4261 = vmatpush1.msra.mxu0 %v4260
    %4262 = vmatprep.subr.mxu0 0.0
    %v4263 = vand.u32 %v13, 4294901760
    %4264 = vmatpush1.msra.mxu0 %v4263
    %4265 = vmatprep.subr.mxu0 0.0
    %4266 = vmatpush2.msra.mxu0 0.0
    %4267 = vmatprep.subr.mxu0 0.0
    %4268 = vmatpush2.msra.mxu0 0.0
    %4269 = vmatprep.subr.mxu0 0.0
    %4270 = vmatpush2.msra.mxu0 0.0
    %4271 = vmatprep.subr.mxu0 0.0
    %4272 = vmatpush2.msra.mxu0 0.0
    %4273 = vmatprep.subr.mxu0 0.0
    %4274 = vmatpush2.msra.mxu0 0.0
    %4275 = vmatprep.subr.mxu0 0.0
    %4276 = vmatpush2.msra.mxu0 0.0
    %4277 = vmatprep.subr.mxu0 0.0
    %4278 = vmatpush2.msra.mxu0 0.0
    %4279 = vmatprep.subr.mxu0 0.0
    %4280 = vmatpush2.msra.mxu0 0.0
    %4281 = vmatprep.subr.mxu0 0.0
    %4282 = vmatpush2.msra.mxu0 0.0
    %4283 = vmatprep.subr.mxu0 0.0
    %4284 = vmatpush2.msra.mxu0 0.0
    %4285 = vmatprep.subr.mxu0 0.0
    %4286 = vmatpush2.msra.mxu0 0.0
    %4287 = vmatprep.subr.mxu0 0.0
    %4288 = vmatpush2.msra.mxu0 0.0
    %4289 = vmatprep.subr.mxu0 0.0
    %4290 = vmatpush2.msra.mxu0 0.0
    %4291 = vmatprep.subr.mxu0 0.0
    %4292 = vmatpush2.msra.mxu0 0.0
    %4293 = vmatprep.subr.mxu0 0.0
    %4294 = vmatpush2.msra.mxu0 0.0
    %4295 = vmatprep.subr.mxu0 0.0
    %4296 = vmatpush2.msra.mxu0 0.0
    %4297 = vmatprep.mubr.f32.mxu0 0.0
    %v4298 = vand.u32 %v3977, 4294901760
    %v4299 = vsub.f32 %v3977, %v4298
    %v4300 = vand.u32 %v4299, 4294901760
    %4301 = vmatmul.mubr.f32.gmra.mxu0 %v4300
    %v4302 = vpop.f32.mrf.mxu0
    %v4303 = vadd.f32 %v4226, %v4302
    %v4304 = vpop.f32.mrf.mxu0
    %4305 = vdwg.mxu0
    %4306 = vmatprep.subr.mxu0 0.0
    %4307 = vmatpush1.msra.mxu0 0.0
    %4308 = vmatprep.subr.mxu0 0.0
    %4309 = vmatpush1.msra.mxu0 0.0
    %4310 = vmatprep.subr.mxu0 0.0
    %4311 = vmatpush1.msra.mxu0 0.0
    %4312 = vmatprep.subr.mxu0 0.0
    %4313 = vmatpush1.msra.mxu0 0.0
    %4314 = vmatprep.subr.mxu0 0.0
    %4315 = vmatpush1.msra.mxu0 0.0
    %4316 = vmatprep.subr.mxu0 0.0
    %4317 = vmatpush1.msra.mxu0 0.0
    %4318 = vmatprep.subr.mxu0 0.0
    %4319 = vmatpush1.msra.mxu0 0.0
    %4320 = vmatprep.subr.mxu0 0.0
    %4321 = vmatpush1.msra.mxu0 0.0
    %4322 = vmatprep.subr.mxu0 0.0
    %4323 = vmatpush1.msra.mxu0 0.0
    %4324 = vmatprep.subr.mxu0 0.0
    %4325 = vmatpush1.msra.mxu0 0.0
    %4326 = vmatprep.subr.mxu0 0.0
    %4327 = vmatpush1.msra.mxu0 0.0
    %4328 = vmatprep.subr.mxu0 0.0
    %4329 = vmatpush1.msra.mxu0 0.0
    %4330 = vmatprep.subr.mxu0 0.0
    %v4331 = vand.u32 %v16, 4294901760
    %v4332 = vsub.f32 %v16, %v4331
    %v4333 = vand.u32 %v4332, 4294901760
    %4334 = vmatpush1.msra.mxu0 %v4333
    %4335 = vmatprep.subr.mxu0 0.0
    %v4336 = vand.u32 %v15, 4294901760
    %v4337 = vsub.f32 %v15, %v4336
    %v4338 = vand.u32 %v4337, 4294901760
    %4339 = vmatpush1.msra.mxu0 %v4338
    %4340 = vmatprep.subr.mxu0 0.0
    %v4341 = vand.u32 %v14, 4294901760
    %v4342 = vsub.f32 %v14, %v4341
    %v4343 = vand.u32 %v4342, 4294901760
    %4344 = vmatpush1.msra.mxu0 %v4343
    %4345 = vmatprep.subr.mxu0 0.0
    %v4346 = vand.u32 %v13, 4294901760
    %v4347 = vsub.f32 %v13, %v4346
    %v4348 = vand.u32 %v4347, 4294901760
    %4349 = vmatpush1.msra.mxu0 %v4348
    %4350 = vmatprep.subr.mxu0 0.0
    %4351 = vmatpush2.msra.mxu0 0.0
    %4352 = vmatprep.subr.mxu0 0.0
    %4353 = vmatpush2.msra.mxu0 0.0
    %4354 = vmatprep.subr.mxu0 0.0
    %4355 = vmatpush2.msra.mxu0 0.0
    %4356 = vmatprep.subr.mxu0 0.0
    %4357 = vmatpush2.msra.mxu0 0.0
    %4358 = vmatprep.subr.mxu0 0.0
    %4359 = vmatpush2.msra.mxu0 0.0
    %4360 = vmatprep.subr.mxu0 0.0
    %4361 = vmatpush2.msra.mxu0 0.0
    %4362 = vmatprep.subr.mxu0 0.0
    %4363 = vmatpush2.msra.mxu0 0.0
    %4364 = vmatprep.subr.mxu0 0.0
    %4365 = vmatpush2.msra.mxu0 0.0
    %4366 = vmatprep.subr.mxu0 0.0
    %4367 = vmatpush2.msra.mxu0 0.0
    %4368 = vmatprep.subr.mxu0 0.0
    %4369 = vmatpush2.msra.mxu0 0.0
    %4370 = vmatprep.subr.mxu0 0.0
    %4371 = vmatpush2.msra.mxu0 0.0
    %4372 = vmatprep.subr.mxu0 0.0
    %4373 = vmatpush2.msra.mxu0 0.0
    %4374 = vmatprep.subr.mxu0 0.0
    %4375 = vmatpush2.msra.mxu0 0.0
    %4376 = vmatprep.subr.mxu0 0.0
    %4377 = vmatpush2.msra.mxu0 0.0
    %4378 = vmatprep.subr.mxu0 0.0
    %4379 = vmatpush2.msra.mxu0 0.0
    %4380 = vmatprep.subr.mxu0 0.0
    %4381 = vmatpush2.msra.mxu0 0.0
    %4382 = vmatprep.mubr.f32.mxu0 0.0
    %v4383 = vand.u32 %v3977, 4294901760
    %4384 = vmatmul.mubr.f32.gmra.mxu0 %v4383
    %v4385 = vpop.f32.mrf.mxu0
    %v4386 = vadd.f32 %v4303, %v4385
    %v4387 = vpop.f32.mrf.mxu0
    %4388 = vdwg.mxu0
    %4389 = vmatprep.subr.mxu0 0.0
    %4390 = vmatpush1.msra.mxu0 0.0
    %4391 = vmatprep.subr.mxu0 0.0
    %4392 = vmatpush1.msra.mxu0 0.0
    %4393 = vmatprep.subr.mxu0 0.0
    %4394 = vmatpush1.msra.mxu0 0.0
    %4395 = vmatprep.subr.mxu0 0.0
    %4396 = vmatpush1.msra.mxu0 0.0
    %4397 = vmatprep.subr.mxu0 0.0
    %4398 = vmatpush1.msra.mxu0 0.0
    %4399 = vmatprep.subr.mxu0 0.0
    %4400 = vmatpush1.msra.mxu0 0.0
    %4401 = vmatprep.subr.mxu0 0.0
    %4402 = vmatpush1.msra.mxu0 0.0
    %4403 = vmatprep.subr.mxu0 0.0
    %4404 = vmatpush1.msra.mxu0 0.0
    %4405 = vmatprep.subr.mxu0 0.0
    %4406 = vmatpush1.msra.mxu0 0.0
    %4407 = vmatprep.subr.mxu0 0.0
    %4408 = vmatpush1.msra.mxu0 0.0
    %4409 = vmatprep.subr.mxu0 0.0
    %4410 = vmatpush1.msra.mxu0 0.0
    %4411 = vmatprep.subr.mxu0 0.0
    %4412 = vmatpush1.msra.mxu0 0.0
    %4413 = vmatprep.subr.mxu0 0.0
    %v4414 = vand.u32 %v16, 4294901760
    %4415 = vmatpush1.msra.mxu0 %v4414
    %4416 = vmatprep.subr.mxu0 0.0
    %v4417 = vand.u32 %v15, 4294901760
    %4418 = vmatpush1.msra.mxu0 %v4417
    %4419 = vmatprep.subr.mxu0 0.0
    %v4420 = vand.u32 %v14, 4294901760
    %4421 = vmatpush1.msra.mxu0 %v4420
    %4422 = vmatprep.subr.mxu0 0.0
    %v4423 = vand.u32 %v13, 4294901760
    %4424 = vmatpush1.msra.mxu0 %v4423
    %4425 = vmatprep.subr.mxu0 0.0
    %4426 = vmatpush2.msra.mxu0 0.0
    %4427 = vmatprep.subr.mxu0 0.0
    %4428 = vmatpush2.msra.mxu0 0.0
    %4429 = vmatprep.subr.mxu0 0.0
    %4430 = vmatpush2.msra.mxu0 0.0
    %4431 = vmatprep.subr.mxu0 0.0
    %4432 = vmatpush2.msra.mxu0 0.0
    %4433 = vmatprep.subr.mxu0 0.0
    %4434 = vmatpush2.msra.mxu0 0.0
    %4435 = vmatprep.subr.mxu0 0.0
    %4436 = vmatpush2.msra.mxu0 0.0
    %4437 = vmatprep.subr.mxu0 0.0
    %4438 = vmatpush2.msra.mxu0 0.0
    %4439 = vmatprep.subr.mxu0 0.0
    %4440 = vmatpush2.msra.mxu0 0.0
    %4441 = vmatprep.subr.mxu0 0.0
    %4442 = vmatpush2.msra.mxu0 0.0
    %4443 = vmatprep.subr.mxu0 0.0
    %4444 = vmatpush2.msra.mxu0 0.0
    %4445 = vmatprep.subr.mxu0 0.0
    %4446 = vmatpush2.msra.mxu0 0.0
    %4447 = vmatprep.subr.mxu0 0.0
    %4448 = vmatpush2.msra.mxu0 0.0
    %4449 = vmatprep.subr.mxu0 0.0
    %4450 = vmatpush2.msra.mxu0 0.0
    %4451 = vmatprep.subr.mxu0 0.0
    %4452 = vmatpush2.msra.mxu0 0.0
    %4453 = vmatprep.subr.mxu0 0.0
    %4454 = vmatpush2.msra.mxu0 0.0
    %4455 = vmatprep.subr.mxu0 0.0
    %4456 = vmatpush2.msra.mxu0 0.0
    %4457 = vmatprep.mubr.f32.mxu0 0.0
    %v4458 = vand.u32 %v3977, 4294901760
    %4459 = vmatmul.mubr.f32.gmra.mxu0 %v4458
    %v4460 = vpop.f32.mrf.mxu0
    %v4461 = vadd.f32 %v4386, %v4460
    %v4462 = vpop.f32.mrf.mxu0
    %4463 = vdwg.mxu0
    %v4465 = vrot.slane %v4461, 2
    %v4467 = vadd.f32 %v522, %v4465
    %v4468 = vtanh.pop %v4467
    %4469 = vrot.lane.b32.xlu0 %v1510, 32
    %v4470 = vpop.permute.xlu0 %4469
    %4472 = vrot.lane.b32.xlu0 %v2004, 64
    %v4473 = vpop.permute.xlu0 %4472
    %4475 = vrot.lane.b32.xlu0 %v2498, 96
    %v4476 = vpop.permute.xlu0 %4475
    %4478 = vrot.lane.b32.xlu0 %v3482, 32
    %v4479 = vpop.permute.xlu0 %4478
    %4481 = vrot.lane.b32.xlu0 %v3976, 64
    %v4482 = vpop.permute.xlu0 %4481
    %v4485 = vrot.slane %v4468, 6
    %4486 = vrot.lane.b32.xlu0 %v4485, 96
    %v4487 = vpop.permute.xlu0 %4486
    %v4489 = vsel %vm525, %v1015, %v4470
    %vm4490 = vcmask 523264
    %v4491 = vsel %vm4490, %v4489, %v4473
    %vm4492 = vcmask 785408
    %v4493 = vsel %vm4492, %v4491, %v4476
    %v4494 = vsel %vm525, %v2987, %v4479
    %v4495 = vsel %vm4490, %v4494, %v4482
    %v4496 = vsel %vm4492, %v4495, %v4487
    %v4499 = vcombine.low %v4493, %v4496
    %v4501 = vunpack.c.l.s4 1983009808
    %v4502 = vunpack.c.0.s8 %v4501
    %v4503 = vlaneseq
    %v4504 = vshrl.u32 %v4503, 7
    %v4505 = vsub.s32 %v4502, %v4504
    %v4506 = vrot.slane %v4499, %v4505
    %4508 = vst [vmem:[#allocation2] sm:$0xf] %v4506
    // Predicated region
    $region10: #{tpu_custom_call.1} parent=1 // pred_check
      _
    $region11: #{tpu_custom_call.1} parent=1 // pred_check_branch
      %4510 = sbr.rel (0) target = $region13
    $region12: #{tpu_custom_call.1} parent=1 // pred_region
      %s4512 = ssub.s32 64, 64
      %4513 = vsyncadd [#allocation3], %s4512
      %s4515 = sshll.u32 [#allocation2], 4
      %s4516 = int_to_ptr.vmem [resolvable:$true] %s4515
      %4518 = dma.vmem_to_hbm [thread:$0]  %s4516, 64, %s2, [#allocation3]
    $region13: #{tpu_custom_call.1} parent=1 // pred_fallthru
      _
    // Predicated region
    $region14: #{tpu_custom_call.1} parent=1 // pred_check
      _
    $region15: #{tpu_custom_call.1} parent=1 // pred_check_branch
      %4520 = sbr.rel (0) target = $region17
    $region16: #{tpu_custom_call.1} parent=1 // pred_region
      %4521 = dma.done [#allocation3], 64
    $region17: #{tpu_custom_call.1} parent=1 // pred_fallthru
      _
    %4522 = vsyncpa [#allocation3], 1

</llo_original>
